<compile_context>
chip_gen: v6e
topology: v6e:2x2x1
jax: 0.10.0
libtpu: 0.0.40
codegen_flags: <defaults>
</compile_context>

<pallas_src>
import functools

import jax
import jax.numpy as jnp
from jax import lax
from jax.experimental import pallas as pl
from jax.experimental.pallas import tpu as pltpu


def _round_up(n, m):
    return ((n + m - 1) // m) * m


def _pad_to(a, shape):
    pads = [(0, s - d) for d, s in zip(a.shape, shape)]
    return jnp.pad(a, pads)


def _lstm_fc_kernel(x_ref, h0_ref, c0_ref,
                    wih_t_ref, whh_t_ref, bias_ref,
                    wfc_t_ref, bfc_ref,
                    out_ref, hn_ref, cn_ref,
                    gx_ref, hseq_ref):
    """Single-layer LSTM + fused Linear head (padded shapes, gate order i,f,o,g).

    x_ref    : (T*Bp, V)    f32  time-major flattened input (unpadded vocab)
    h0_ref   : (Bp, Hp)     f32  initial hidden (feature padding = 0)
    c0_ref   : (Bp, Hp)     f32  initial cell   (feature padding = 0)
    wih_t_ref: (V, 4*Hp)    bf16 pre-transposed weight_ih (gate blocks i,f,o,g)
    whh_t_ref: (Hp, 4*Hp)   bf16 pre-transposed weight_hh (gate blocks i,f,o,g)
    bias_ref : (1, 4*Hp)    f32  b_ih + b_hh (gate blocks i,f,o,g)
    wfc_t_ref: (Hp, Vp)     bf16 pre-transposed fc weight
    bfc_ref  : (1, Vp)      f32  fc bias
    out_ref  : (T*Bp, Vp)   f32  per-timestep logits (lane-dense Vp)
    hn_ref   : (Bp, Hp)     f32  final hidden
    cn_ref   : (Bp, Hp)     f32  final cell
    gx_ref   : (T*Bp, 4*Hp) f32  scratch: hoisted input projection + bias
    hseq_ref : (T*Bp, Hp)   bf16 scratch: every h_t (FC matmul operand)
    """
    Bp = h0_ref.shape[0]
    Hp = h0_ref.shape[-1]
    T = x_ref.shape[0] // Bp

    # --- Hoisted input projection: one big MXU matmul off the serial path. ---
    x_bf = x_ref[...].astype(jnp.bfloat16)                         # (T*Bp, V)
    gx_ref[...] = (jnp.dot(x_bf, wih_t_ref[...],
                           preferred_element_type=jnp.float32)
                   + bias_ref[...])                                 # (T*Bp, 4Hp)

    # --- Serial recurrence: only the (Bp,Hp)@(Hp,4Hp) dot per step. ---
    def step(t, carry):
        h, c = carry
        row = pl.multiple_of(t * Bp, Bp)
        g_x = gx_ref[pl.ds(row, Bp), :]                             # (Bp, 4Hp)
        gates = g_x + jnp.dot(h.astype(jnp.bfloat16), whh_t_ref[...],
                              preferred_element_type=jnp.float32)
        # Gate layout (after reorder in _pack_params): i, f, o, g.
        sig = jax.nn.sigmoid(gates[:, :3 * Hp])                     # one EUP slab
        i_g = sig[:, 0 * Hp:1 * Hp]
        f_g = sig[:, 1 * Hp:2 * Hp]
        o_g = sig[:, 2 * Hp:3 * Hp]
        g_g = jnp.tanh(gates[:, 3 * Hp:4 * Hp])
        c_new = f_g * c + i_g * g_g
        h_new = o_g * jnp.tanh(c_new)
        hseq_ref[pl.ds(row, Bp), :] = h_new.astype(jnp.bfloat16)
        return (h_new, c_new)

    h_fin, c_fin = lax.fori_loop(0, T, step, (h0_ref[...], c0_ref[...]),
                                 unroll=min(T, 8))
    hn_ref[...] = h_fin
    cn_ref[...] = c_fin

    # --- Fused FC head: one lane-dense MXU matmul over the whole sequence. ---
    logits = (jnp.dot(hseq_ref[...], wfc_t_ref[...],
                      preferred_element_type=jnp.float32)
              + bfc_ref[...])                                       # (T*Bp, Vp)
    out_ref[...] = logits


def _pack_params(params, V, H, Vp, Hp):
    """Reorder gates to (i,f,o,g), zero-pad per gate block, pre-transpose,
    and cast matmul weights to bf16.  Constant-folds under jit when params
    are closed over (keep it that way)."""
    perm = jnp.array([0, 1, 3, 2])  # PyTorch (i,f,g,o) -> kernel (i,f,o,g)

    w_ih = params["w_ih"].reshape(4, H, V)[perm]
    w_ih_p = _pad_to(w_ih, (4, Hp, V)).reshape(4 * Hp, V)
    w_hh = params["w_hh"].reshape(4, H, H)[perm]
    w_hh_p = _pad_to(w_hh, (4, Hp, Hp)).reshape(4 * Hp, Hp)
    bias = (params["b_ih"] + params["b_hh"]).reshape(4, H)[perm]
    bias_p = _pad_to(bias, (4, Hp)).reshape(1, 4 * Hp)
    w_fc_p = _pad_to(params["w_fc"], (Vp, Hp))
    b_fc_p = _pad_to(params["b_fc"], (Vp,)).reshape(1, Vp)
    return {
        "w_ih_t": w_ih_p.T.astype(jnp.bfloat16),   # (V,  4Hp)
        "w_hh_t": w_hh_p.T.astype(jnp.bfloat16),   # (Hp, 4Hp)
        "bias": bias_p.astype(jnp.float32),        # (1,  4Hp)
        "w_fc_t": w_fc_p.T.astype(jnp.bfloat16),   # (Hp, Vp)
        "b_fc": b_fc_p.astype(jnp.float32),        # (1,  Vp)
    }


def char_lstm_forward(x, hidden, params):
    """Pallas-backed CharLSTM.forward(input, hidden).

    x      : (B, T, V) float32, batch_first (matches nn.LSTM batch_first=True)
    hidden : (h0, c0), each (num_layers=1, B, H)
    returns: (out, (h_n, c_n)) with out shaped (B*T, V)
    """
    h0, c0 = hidden
    assert h0.shape[0] == 1, "only num_layers=1 implemented"
    B, T, V = x.shape
    H = h0.shape[-1]

    Vp = _round_up(V, 128)   # lane-dense logits / MXU-aligned N dim
    Hp = _round_up(H, 128)   # each gate slice = whole lane tiles
    Bp = _round_up(B, 8)     # full f32 sublanes

    packed = _pack_params(params, V, H, Vp, Hp)

    # Time-major, batch-padded, flattened to (T*Bp, V).  No vocab padding: the
    # hoisted input projection handles the narrow K=V dim in one matmul.
    x_tm = jnp.transpose(x, (1, 0, 2))                 # (T, B, V)
    x_p = _pad_to(x_tm, (T, Bp, V)).reshape(T * Bp, V)
    h0_p = _pad_to(h0[0], (Bp, Hp))
    c0_p = _pad_to(c0[0], (Bp, Hp))

    vmem = pl.BlockSpec(memory_space=pltpu.MemorySpace.VMEM)
    out_flat, hn_p, cn_p = pl.pallas_call(
        _lstm_fc_kernel,
        out_shape=(
            jax.ShapeDtypeStruct((T * Bp, Vp), jnp.float32),
            jax.ShapeDtypeStruct((Bp, Hp), jnp.float32),
            jax.ShapeDtypeStruct((Bp, Hp), jnp.float32),
        ),
        in_specs=[vmem] * 8,
        out_specs=(vmem, vmem, vmem),
        scratch_shapes=[
            pltpu.VMEM((T * Bp, 4 * Hp), jnp.float32),   # hoisted gates_x
            pltpu.VMEM((T * Bp, Hp), jnp.bfloat16),      # h_t sequence
        ],
        compiler_params=pltpu.CompilerParams(
            vmem_limit_bytes=48 * 1024 * 1024),   # fits v7x's 64 MiB VMEM too
    )(
        x_p, h0_p, c0_p,
        packed["w_ih_t"], packed["w_hh_t"], packed["bias"],
        packed["w_fc_t"], packed["b_fc"],
    )

    # PyTorch's out.reshape(B*T, V) is over batch-first layout.
    out = jnp.transpose(out_flat.reshape(T, Bp, Vp)[:, :B, :V],
                        (1, 0, 2)).reshape(B * T, V)
    h_n = hn_p[:B, :H][None]
    c_n = cn_p[:B, :H][None]
    return out, (h_n, c_n)


def char_lstm_reference(x, hidden, params):
    """Pure-JAX reference matching nn.LSTM + nn.Linear semantics."""
    h0, c0 = hidden
    B, T, V = x.shape
    H = h0.shape[-1]
    w_ih_t = params["w_ih"].T
    w_hh_t = params["w_hh"].T
    bias = (params["b_ih"] + params["b_hh"])[None, :]

    def step(carry, x_t):
        h, c = carry
        gates = x_t @ w_ih_t + h @ w_hh_t + bias
        i = jax.nn.sigmoid(gates[:, 0 * H:1 * H])
        f = jax.nn.sigmoid(gates[:, 1 * H:2 * H])
        g = jnp.tanh(gates[:, 2 * H:3 * H])
        o = jax.nn.sigmoid(gates[:, 3 * H:4 * H])
        c = f * c + i * g
        h = o * jnp.tanh(c)
        return (h, c), h

    (h_n, c_n), hs = lax.scan(step, (h0[0], c0[0]), jnp.transpose(x, (1, 0, 2)))
    hs_bf = jnp.transpose(hs, (1, 0, 2)).reshape(B * T, H)
    out = hs_bf @ params["w_fc"].T + params["b_fc"][None, :]
    return out, (h_n[None], c_n[None])


def init_params(key, vocab_size, hidden_size):
    """Deterministic init mirroring PyTorch default shapes (uniform +-1/sqrt(H))."""
    k = jax.random.split(key, 6)
    s = 1.0 / jnp.sqrt(hidden_size)
    u = lambda kk, shape: jax.random.uniform(kk, shape, jnp.float32, -s, s)
    return {
        "w_ih": u(k[0], (4 * hidden_size, vocab_size)),
        "w_hh": u(k[1], (4 * hidden_size, hidden_size)),
        "b_ih": u(k[2], (4 * hidden_size,)),
        "b_hh": u(k[3], (4 * hidden_size,)),
        "w_fc": u(k[4], (vocab_size, hidden_size)),
        "b_fc": u(k[5], (vocab_size,)),
    }


if __name__ == "__main__":
    VOCAB, HIDDEN, NUM_LAYERS = 16, 32, 1
    B, T = 2, 8

    key = jax.random.PRNGKey(0)
    k_param, k_x = jax.random.split(key)

    params = init_params(k_param, VOCAB, HIDDEN)
    x = jax.random.normal(k_x, (B, T, VOCAB), dtype=jnp.float32)

    # init_hidden(batch_size)
    h0 = jnp.zeros((NUM_LAYERS, B, HIDDEN), jnp.float32)
    c0 = jnp.zeros((NUM_LAYERS, B, HIDDEN), jnp.float32)

    # params closed over -> _pack_params constant-folds at compile time.
    fwd = jax.jit(functools.partial(char_lstm_forward, params=params))
    out, (h_n, c_n) = fwd(x, (h0, c0))
    jax.block_until_ready((out, h_n, c_n))

    assert out.shape == (B * T, VOCAB)
    assert h_n.shape == (NUM_LAYERS, B, HIDDEN)
    assert c_n.shape == (NUM_LAYERS, B, HIDDEN)

    # Numerical check against the pure-JAX reference (tolerance absorbs the
    # bf16 MXU operands; gate math / state stay f32).
    out_ref, (h_ref, c_ref) = char_lstm_reference(x, (h0, c0), params)
    assert float(jnp.max(jnp.abs(out - out_ref))) < 5e-2
    assert float(jnp.max(jnp.abs(h_n - h_ref))) < 5e-2
    assert float(jnp.max(jnp.abs(c_n - c_ref))) < 5e-2

    print("KERNEL_OK")
</pallas_src>

<mosaic_0001>
module attributes {stable_mosaic.version = 11 : i64} {
  func.func @_lstm_fc_kernel(%arg0: memref<64x16xf32, #tpu.memory_space<vmem>>, %arg1: memref<8x128xf32, #tpu.memory_space<vmem>>, %arg2: memref<8x128xf32, #tpu.memory_space<vmem>>, %arg3: memref<16x512xbf16, #tpu.memory_space<vmem>>, %arg4: memref<128x512xbf16, #tpu.memory_space<vmem>>, %arg5: memref<1x512xf32, #tpu.memory_space<vmem>>, %arg6: memref<128x128xbf16, #tpu.memory_space<vmem>>, %arg7: memref<1x128xf32, #tpu.memory_space<vmem>>, %arg8: memref<64x128xf32, #tpu.memory_space<vmem>>, %arg9: memref<8x128xf32, #tpu.memory_space<vmem>>, %arg10: memref<8x128xf32, #tpu.memory_space<vmem>>, %arg11: memref<64x512xf32, #tpu.memory_space<vmem>>, %arg12: memref<64x128xbf16, #tpu.memory_space<vmem>>) attributes {dimension_semantics = [], scalar_prefetch = 0 : i64, scratch_operands = 2 : i64, tpu.core_type = #tpu.core_type<tc>} {
    %c0 = arith.constant 0 : index
    %c0_0 = arith.constant 0 : index
    %0 = vector.load %arg0[%c0, %c0_0] : memref<64x16xf32, #tpu.memory_space<vmem>>, vector<64x16xf32>
    %1 = arith.truncf %0 : vector<64x16xf32> to vector<64x16xbf16>
    %c0_1 = arith.constant 0 : index
    %c0_2 = arith.constant 0 : index
    %2 = vector.load %arg3[%c0_1, %c0_2] : memref<16x512xbf16, #tpu.memory_space<vmem>>, vector<16x512xbf16>
    %cst = arith.constant dense<0.000000e+00> : vector<64x512xf32>
    %3 = tpu.matmul %1, %2, %cst {dimension_numbers = #tpu.dot_dimension_numbers<[1], [0], [0], [1], [0, 0, 1, 1], [], []>} : vector<64x16xbf16>, vector<16x512xbf16>, vector<64x512xf32> -> vector<64x512xf32>
    %c0_3 = arith.constant 0 : index
    %c0_4 = arith.constant 0 : index
    %4 = vector.load %arg5[%c0_3, %c0_4] : memref<1x512xf32, #tpu.memory_space<vmem>>, vector<1x512xf32>
    %5 = vector.broadcast %4 : vector<1x512xf32> to vector<64x512xf32>
    %6 = arith.addf %3, %5 : vector<64x512xf32>
    %c0_5 = arith.constant 0 : index
    %c0_6 = arith.constant 0 : index
    %7 = vector.load %arg11[%c0_5, %c0_6] : memref<64x512xf32, #tpu.memory_space<vmem>>, vector<64x512xf32>
    tpu.vector_store %arg11[%c0_5, %c0_6], %6 {strides = array<i32>} : memref<64x512xf32, #tpu.memory_space<vmem>>, vector<64x512xf32>,
    %c0_7 = arith.constant 0 : index
    %c0_8 = arith.constant 0 : index
    %8 = vector.load %arg1[%c0_7, %c0_8] : memref<8x128xf32, #tpu.memory_space<vmem>>, vector<8x128xf32>
    %c0_9 = arith.constant 0 : index
    %c0_10 = arith.constant 0 : index
    %9 = vector.load %arg2[%c0_9, %c0_10] : memref<8x128xf32, #tpu.memory_space<vmem>>, vector<8x128xf32>
    %c0_i32 = arith.constant 0 : i32
    %c8_i32 = arith.constant 8 : i32
    %10 = arith.muli %c0_i32, %c8_i32 : i32
    %11 = tpu.assume_multiple %10, 8 : i32
    %12 = arith.index_cast %11 : i32 to index
    %c0_11 = arith.constant 0 : index
    %13 = vector.load %arg11[%12, %c0_11] : memref<64x512xf32, #tpu.memory_space<vmem>>, vector<8x512xf32>
    %14 = arith.truncf %8 : vector<8x128xf32> to vector<8x128xbf16>
    %c0_12 = arith.constant 0 : index
    %c0_13 = arith.constant 0 : index
    %15 = vector.load %arg4[%c0_12, %c0_13] : memref<128x512xbf16, #tpu.memory_space<vmem>>, vector<128x512xbf16>
    %cst_14 = arith.constant dense<0.000000e+00> : vector<8x512xf32>
    %16 = tpu.matmul %14, %15, %cst_14 {dimension_numbers = #tpu.dot_dimension_numbers<[1], [0], [0], [1], [0, 0, 1, 1], [], []>} : vector<8x128xbf16>, vector<128x512xbf16>, vector<8x512xf32> -> vector<8x512xf32>
    %17 = arith.addf %13, %16 : vector<8x512xf32>
    %18 = vector.extract_strided_slice %17 {offsets = [0, 0], sizes = [8, 384], strides = [1, 1]} : vector<8x512xf32> to vector<8x384xf32>
    %19 = arith.negf %18 : vector<8x384xf32>
    %20 = math.exp %19 : vector<8x384xf32>
    %cst_15 = arith.constant 1.000000e+00 : f32
    %21 = vector.broadcast %cst_15 : f32 to vector<8x384xf32>
    %22 = arith.addf %21, %20 : vector<8x384xf32>
    %23 = arith.divf %21, %22 : vector<8x384xf32>
    %24 = vector.extract_strided_slice %23 {offsets = [0, 0], sizes = [8, 128], strides = [1, 1]} : vector<8x384xf32> to vector<8x128xf32>
    %25 = vector.extract_strided_slice %23 {offsets = [0, 128], sizes = [8, 128], strides = [1, 1]} : vector<8x384xf32> to vector<8x128xf32>
    %26 = vector.extract_strided_slice %23 {offsets = [0, 256], sizes = [8, 128], strides = [1, 1]} : vector<8x384xf32> to vector<8x128xf32>
    %27 = vector.extract_strided_slice %17 {offsets = [0, 384], sizes = [8, 128], strides = [1, 1]} : vector<8x512xf32> to vector<8x128xf32>
    %28 = math.tanh %27 : vector<8x128xf32>
    %29 = arith.mulf %25, %9 : vector<8x128xf32>
    %30 = arith.mulf %24, %28 : vector<8x128xf32>
    %31 = arith.addf %29, %30 : vector<8x128xf32>
    %32 = math.tanh %31 : vector<8x128xf32>
    %33 = arith.mulf %26, %32 : vector<8x128xf32>
    %34 = arith.truncf %33 : vector<8x128xf32> to vector<8x128xbf16>
    %35 = arith.index_cast %11 : i32 to index
    %c0_16 = arith.constant 0 : index
    %36 = vector.load %arg12[%35, %c0_16] : memref<64x128xbf16, #tpu.memory_space<vmem>>, vector<8x128xbf16>
    tpu.vector_store %arg12[%35, %c0_16], %34 {strides = array<i32>} : memref<64x128xbf16, #tpu.memory_space<vmem>>, vector<8x128xbf16>,
    %c1_i32 = arith.constant 1 : i32
    %c8_i32_17 = arith.constant 8 : i32
    %37 = arith.muli %c1_i32, %c8_i32_17 : i32
    %38 = tpu.assume_multiple %37, 8 : i32
    %39 = arith.index_cast %38 : i32 to index
    %c0_18 = arith.constant 0 : index
    %40 = vector.load %arg11[%39, %c0_18] : memref<64x512xf32, #tpu.memory_space<vmem>>, vector<8x512xf32>
    %41 = arith.truncf %33 : vector<8x128xf32> to vector<8x128xbf16>
    %c0_19 = arith.constant 0 : index
    %c0_20 = arith.constant 0 : index
    %42 = vector.load %arg4[%c0_19, %c0_20] : memref<128x512xbf16, #tpu.memory_space<vmem>>, vector<128x512xbf16>
    %cst_21 = arith.constant dense<0.000000e+00> : vector<8x512xf32>
    %43 = tpu.matmul %41, %42, %cst_21 {dimension_numbers = #tpu.dot_dimension_numbers<[1], [0], [0], [1], [0, 0, 1, 1], [], []>} : vector<8x128xbf16>, vector<128x512xbf16>, vector<8x512xf32> -> vector<8x512xf32>
    %44 = arith.addf %40, %43 : vector<8x512xf32>
    %45 = vector.extract_strided_slice %44 {offsets = [0, 0], sizes = [8, 384], strides = [1, 1]} : vector<8x512xf32> to vector<8x384xf32>
    %46 = arith.negf %45 : vector<8x384xf32>
    %47 = math.exp %46 : vector<8x384xf32>
    %cst_22 = arith.constant 1.000000e+00 : f32
    %48 = vector.broadcast %cst_22 : f32 to vector<8x384xf32>
    %49 = arith.addf %48, %47 : vector<8x384xf32>
    %50 = arith.divf %48, %49 : vector<8x384xf32>
    %51 = vector.extract_strided_slice %50 {offsets = [0, 0], sizes = [8, 128], strides = [1, 1]} : vector<8x384xf32> to vector<8x128xf32>
    %52 = vector.extract_strided_slice %50 {offsets = [0, 128], sizes = [8, 128], strides = [1, 1]} : vector<8x384xf32> to vector<8x128xf32>
    %53 = vector.extract_strided_slice %50 {offsets = [0, 256], sizes = [8, 128], strides = [1, 1]} : vector<8x384xf32> to vector<8x128xf32>
    %54 = vector.extract_strided_slice %44 {offsets = [0, 384], sizes = [8, 128], strides = [1, 1]} : vector<8x512xf32> to vector<8x128xf32>
    %55 = math.tanh %54 : vector<8x128xf32>
    %56 = arith.mulf %52, %31 : vector<8x128xf32>
    %57 = arith.mulf %51, %55 : vector<8x128xf32>
    %58 = arith.addf %56, %57 : vector<8x128xf32>
    %59 = math.tanh %58 : vector<8x128xf32>
    %60 = arith.mulf %53, %59 : vector<8x128xf32>
    %61 = arith.truncf %60 : vector<8x128xf32> to vector<8x128xbf16>
    %62 = arith.index_cast %38 : i32 to index
    %c0_23 = arith.constant 0 : index
    %63 = vector.load %arg12[%62, %c0_23] : memref<64x128xbf16, #tpu.memory_space<vmem>>, vector<8x128xbf16>
    tpu.vector_store %arg12[%62, %c0_23], %61 {strides = array<i32>} : memref<64x128xbf16, #tpu.memory_space<vmem>>, vector<8x128xbf16>,
    %c2_i32 = arith.constant 2 : i32
    %c8_i32_24 = arith.constant 8 : i32
    %64 = arith.muli %c2_i32, %c8_i32_24 : i32
    %65 = tpu.assume_multiple %64, 8 : i32
    %66 = arith.index_cast %65 : i32 to index
    %c0_25 = arith.constant 0 : index
    %67 = vector.load %arg11[%66, %c0_25] : memref<64x512xf32, #tpu.memory_space<vmem>>, vector<8x512xf32>
    %68 = arith.truncf %60 : vector<8x128xf32> to vector<8x128xbf16>
    %c0_26 = arith.constant 0 : index
    %c0_27 = arith.constant 0 : index
    %69 = vector.load %arg4[%c0_26, %c0_27] : memref<128x512xbf16, #tpu.memory_space<vmem>>, vector<128x512xbf16>
    %cst_28 = arith.constant dense<0.000000e+00> : vector<8x512xf32>
    %70 = tpu.matmul %68, %69, %cst_28 {dimension_numbers = #tpu.dot_dimension_numbers<[1], [0], [0], [1], [0, 0, 1, 1], [], []>} : vector<8x128xbf16>, vector<128x512xbf16>, vector<8x512xf32> -> vector<8x512xf32>
    %71 = arith.addf %67, %70 : vector<8x512xf32>
    %72 = vector.extract_strided_slice %71 {offsets = [0, 0], sizes = [8, 384], strides = [1, 1]} : vector<8x512xf32> to vector<8x384xf32>
    %73 = arith.negf %72 : vector<8x384xf32>
    %74 = math.exp %73 : vector<8x384xf32>
    %cst_29 = arith.constant 1.000000e+00 : f32
    %75 = vector.broadcast %cst_29 : f32 to vector<8x384xf32>
    %76 = arith.addf %75, %74 : vector<8x384xf32>
    %77 = arith.divf %75, %76 : vector<8x384xf32>
    %78 = vector.extract_strided_slice %77 {offsets = [0, 0], sizes = [8, 128], strides = [1, 1]} : vector<8x384xf32> to vector<8x128xf32>
    %79 = vector.extract_strided_slice %77 {offsets = [0, 128], sizes = [8, 128], strides = [1, 1]} : vector<8x384xf32> to vector<8x128xf32>
    %80 = vector.extract_strided_slice %77 {offsets = [0, 256], sizes = [8, 128], strides = [1, 1]} : vector<8x384xf32> to vector<8x128xf32>
    %81 = vector.extract_strided_slice %71 {offsets = [0, 384], sizes = [8, 128], strides = [1, 1]} : vector<8x512xf32> to vector<8x128xf32>
    %82 = math.tanh %81 : vector<8x128xf32>
    %83 = arith.mulf %79, %58 : vector<8x128xf32>
    %84 = arith.mulf %78, %82 : vector<8x128xf32>
    %85 = arith.addf %83, %84 : vector<8x128xf32>
    %86 = math.tanh %85 : vector<8x128xf32>
    %87 = arith.mulf %80, %86 : vector<8x128xf32>
    %88 = arith.truncf %87 : vector<8x128xf32> to vector<8x128xbf16>
    %89 = arith.index_cast %65 : i32 to index
    %c0_30 = arith.constant 0 : index
    %90 = vector.load %arg12[%89, %c0_30] : memref<64x128xbf16, #tpu.memory_space<vmem>>, vector<8x128xbf16>
    tpu.vector_store %arg12[%89, %c0_30], %88 {strides = array<i32>} : memref<64x128xbf16, #tpu.memory_space<vmem>>, vector<8x128xbf16>,
    %c3_i32 = arith.constant 3 : i32
    %c8_i32_31 = arith.constant 8 : i32
    %91 = arith.muli %c3_i32, %c8_i32_31 : i32
    %92 = tpu.assume_multiple %91, 8 : i32
    %93 = arith.index_cast %92 : i32 to index
    %c0_32 = arith.constant 0 : index
    %94 = vector.load %arg11[%93, %c0_32] : memref<64x512xf32, #tpu.memory_space<vmem>>, vector<8x512xf32>
    %95 = arith.truncf %87 : vector<8x128xf32> to vector<8x128xbf16>
    %c0_33 = arith.constant 0 : index
    %c0_34 = arith.constant 0 : index
    %96 = vector.load %arg4[%c0_33, %c0_34] : memref<128x512xbf16, #tpu.memory_space<vmem>>, vector<128x512xbf16>
    %cst_35 = arith.constant dense<0.000000e+00> : vector<8x512xf32>
    %97 = tpu.matmul %95, %96, %cst_35 {dimension_numbers = #tpu.dot_dimension_numbers<[1], [0], [0], [1], [0, 0, 1, 1], [], []>} : vector<8x128xbf16>, vector<128x512xbf16>, vector<8x512xf32> -> vector<8x512xf32>
    %98 = arith.addf %94, %97 : vector<8x512xf32>
    %99 = vector.extract_strided_slice %98 {offsets = [0, 0], sizes = [8, 384], strides = [1, 1]} : vector<8x512xf32> to vector<8x384xf32>
    %100 = arith.negf %99 : vector<8x384xf32>
    %101 = math.exp %100 : vector<8x384xf32>
    %cst_36 = arith.constant 1.000000e+00 : f32
    %102 = vector.broadcast %cst_36 : f32 to vector<8x384xf32>
    %103 = arith.addf %102, %101 : vector<8x384xf32>
    %104 = arith.divf %102, %103 : vector<8x384xf32>
    %105 = vector.extract_strided_slice %104 {offsets = [0, 0], sizes = [8, 128], strides = [1, 1]} : vector<8x384xf32> to vector<8x128xf32>
    %106 = vector.extract_strided_slice %104 {offsets = [0, 128], sizes = [8, 128], strides = [1, 1]} : vector<8x384xf32> to vector<8x128xf32>
    %107 = vector.extract_strided_slice %104 {offsets = [0, 256], sizes = [8, 128], strides = [1, 1]} : vector<8x384xf32> to vector<8x128xf32>
    %108 = vector.extract_strided_slice %98 {offsets = [0, 384], sizes = [8, 128], strides = [1, 1]} : vector<8x512xf32> to vector<8x128xf32>
    %109 = math.tanh %108 : vector<8x128xf32>
    %110 = arith.mulf %106, %85 : vector<8x128xf32>
    %111 = arith.mulf %105, %109 : vector<8x128xf32>
    %112 = arith.addf %110, %111 : vector<8x128xf32>
    %113 = math.tanh %112 : vector<8x128xf32>
    %114 = arith.mulf %107, %113 : vector<8x128xf32>
    %115 = arith.truncf %114 : vector<8x128xf32> to vector<8x128xbf16>
    %116 = arith.index_cast %92 : i32 to index
    %c0_37 = arith.constant 0 : index
    %117 = vector.load %arg12[%116, %c0_37] : memref<64x128xbf16, #tpu.memory_space<vmem>>, vector<8x128xbf16>
    tpu.vector_store %arg12[%116, %c0_37], %115 {strides = array<i32>} : memref<64x128xbf16, #tpu.memory_space<vmem>>, vector<8x128xbf16>,
    %c4_i32 = arith.constant 4 : i32
    %c8_i32_38 = arith.constant 8 : i32
    %118 = arith.muli %c4_i32, %c8_i32_38 : i32
    %119 = tpu.assume_multiple %118, 8 : i32
    %120 = arith.index_cast %119 : i32 to index
    %c0_39 = arith.constant 0 : index
    %121 = vector.load %arg11[%120, %c0_39] : memref<64x512xf32, #tpu.memory_space<vmem>>, vector<8x512xf32>
    %122 = arith.truncf %114 : vector<8x128xf32> to vector<8x128xbf16>
    %c0_40 = arith.constant 0 : index
    %c0_41 = arith.constant 0 : index
    %123 = vector.load %arg4[%c0_40, %c0_41] : memref<128x512xbf16, #tpu.memory_space<vmem>>, vector<128x512xbf16>
    %cst_42 = arith.constant dense<0.000000e+00> : vector<8x512xf32>
    %124 = tpu.matmul %122, %123, %cst_42 {dimension_numbers = #tpu.dot_dimension_numbers<[1], [0], [0], [1], [0, 0, 1, 1], [], []>} : vector<8x128xbf16>, vector<128x512xbf16>, vector<8x512xf32> -> vector<8x512xf32>
    %125 = arith.addf %121, %124 : vector<8x512xf32>
    %126 = vector.extract_strided_slice %125 {offsets = [0, 0], sizes = [8, 384], strides = [1, 1]} : vector<8x512xf32> to vector<8x384xf32>
    %127 = arith.negf %126 : vector<8x384xf32>
    %128 = math.exp %127 : vector<8x384xf32>
    %cst_43 = arith.constant 1.000000e+00 : f32
    %129 = vector.broadcast %cst_43 : f32 to vector<8x384xf32>
    %130 = arith.addf %129, %128 : vector<8x384xf32>
    %131 = arith.divf %129, %130 : vector<8x384xf32>
    %132 = vector.extract_strided_slice %131 {offsets = [0, 0], sizes = [8, 128], strides = [1, 1]} : vector<8x384xf32> to vector<8x128xf32>
    %133 = vector.extract_strided_slice %131 {offsets = [0, 128], sizes = [8, 128], strides = [1, 1]} : vector<8x384xf32> to vector<8x128xf32>
    %134 = vector.extract_strided_slice %131 {offsets = [0, 256], sizes = [8, 128], strides = [1, 1]} : vector<8x384xf32> to vector<8x128xf32>
    %135 = vector.extract_strided_slice %125 {offsets = [0, 384], sizes = [8, 128], strides = [1, 1]} : vector<8x512xf32> to vector<8x128xf32>
    %136 = math.tanh %135 : vector<8x128xf32>
    %137 = arith.mulf %133, %112 : vector<8x128xf32>
    %138 = arith.mulf %132, %136 : vector<8x128xf32>
    %139 = arith.addf %137, %138 : vector<8x128xf32>
    %140 = math.tanh %139 : vector<8x128xf32>
    %141 = arith.mulf %134, %140 : vector<8x128xf32>
    %142 = arith.truncf %141 : vector<8x128xf32> to vector<8x128xbf16>
    %143 = arith.index_cast %119 : i32 to index
    %c0_44 = arith.constant 0 : index
    %144 = vector.load %arg12[%143, %c0_44] : memref<64x128xbf16, #tpu.memory_space<vmem>>, vector<8x128xbf16>
    tpu.vector_store %arg12[%143, %c0_44], %142 {strides = array<i32>} : memref<64x128xbf16, #tpu.memory_space<vmem>>, vector<8x128xbf16>,
    %c5_i32 = arith.constant 5 : i32
    %c8_i32_45 = arith.constant 8 : i32
    %145 = arith.muli %c5_i32, %c8_i32_45 : i32
    %146 = tpu.assume_multiple %145, 8 : i32
    %147 = arith.index_cast %146 : i32 to index
    %c0_46 = arith.constant 0 : index
    %148 = vector.load %arg11[%147, %c0_46] : memref<64x512xf32, #tpu.memory_space<vmem>>, vector<8x512xf32>
    %149 = arith.truncf %141 : vector<8x128xf32> to vector<8x128xbf16>
    %c0_47 = arith.constant 0 : index
    %c0_48 = arith.constant 0 : index
    %150 = vector.load %arg4[%c0_47, %c0_48] : memref<128x512xbf16, #tpu.memory_space<vmem>>, vector<128x512xbf16>
    %cst_49 = arith.constant dense<0.000000e+00> : vector<8x512xf32>
    %151 = tpu.matmul %149, %150, %cst_49 {dimension_numbers = #tpu.dot_dimension_numbers<[1], [0], [0], [1], [0, 0, 1, 1], [], []>} : vector<8x128xbf16>, vector<128x512xbf16>, vector<8x512xf32> -> vector<8x512xf32>
    %152 = arith.addf %148, %151 : vector<8x512xf32>
    %153 = vector.extract_strided_slice %152 {offsets = [0, 0], sizes = [8, 384], strides = [1, 1]} : vector<8x512xf32> to vector<8x384xf32>
    %154 = arith.negf %153 : vector<8x384xf32>
    %155 = math.exp %154 : vector<8x384xf32>
    %cst_50 = arith.constant 1.000000e+00 : f32
    %156 = vector.broadcast %cst_50 : f32 to vector<8x384xf32>
    %157 = arith.addf %156, %155 : vector<8x384xf32>
    %158 = arith.divf %156, %157 : vector<8x384xf32>
    %159 = vector.extract_strided_slice %158 {offsets = [0, 0], sizes = [8, 128], strides = [1, 1]} : vector<8x384xf32> to vector<8x128xf32>
    %160 = vector.extract_strided_slice %158 {offsets = [0, 128], sizes = [8, 128], strides = [1, 1]} : vector<8x384xf32> to vector<8x128xf32>
    %161 = vector.extract_strided_slice %158 {offsets = [0, 256], sizes = [8, 128], strides = [1, 1]} : vector<8x384xf32> to vector<8x128xf32>
    %162 = vector.extract_strided_slice %152 {offsets = [0, 384], sizes = [8, 128], strides = [1, 1]} : vector<8x512xf32> to vector<8x128xf32>
    %163 = math.tanh %162 : vector<8x128xf32>
    %164 = arith.mulf %160, %139 : vector<8x128xf32>
    %165 = arith.mulf %159, %163 : vector<8x128xf32>
    %166 = arith.addf %164, %165 : vector<8x128xf32>
    %167 = math.tanh %166 : vector<8x128xf32>
    %168 = arith.mulf %161, %167 : vector<8x128xf32>
    %169 = arith.truncf %168 : vector<8x128xf32> to vector<8x128xbf16>
    %170 = arith.index_cast %146 : i32 to index
    %c0_51 = arith.constant 0 : index
    %171 = vector.load %arg12[%170, %c0_51] : memref<64x128xbf16, #tpu.memory_space<vmem>>, vector<8x128xbf16>
    tpu.vector_store %arg12[%170, %c0_51], %169 {strides = array<i32>} : memref<64x128xbf16, #tpu.memory_space<vmem>>, vector<8x128xbf16>,
    %c6_i32 = arith.constant 6 : i32
    %c8_i32_52 = arith.constant 8 : i32
    %172 = arith.muli %c6_i32, %c8_i32_52 : i32
    %173 = tpu.assume_multiple %172, 8 : i32
    %174 = arith.index_cast %173 : i32 to index
    %c0_53 = arith.constant 0 : index
    %175 = vector.load %arg11[%174, %c0_53] : memref<64x512xf32, #tpu.memory_space<vmem>>, vector<8x512xf32>
    %176 = arith.truncf %168 : vector<8x128xf32> to vector<8x128xbf16>
    %c0_54 = arith.constant 0 : index
    %c0_55 = arith.constant 0 : index
    %177 = vector.load %arg4[%c0_54, %c0_55] : memref<128x512xbf16, #tpu.memory_space<vmem>>, vector<128x512xbf16>
    %cst_56 = arith.constant dense<0.000000e+00> : vector<8x512xf32>
    %178 = tpu.matmul %176, %177, %cst_56 {dimension_numbers = #tpu.dot_dimension_numbers<[1], [0], [0], [1], [0, 0, 1, 1], [], []>} : vector<8x128xbf16>, vector<128x512xbf16>, vector<8x512xf32> -> vector<8x512xf32>
    %179 = arith.addf %175, %178 : vector<8x512xf32>
    %180 = vector.extract_strided_slice %179 {offsets = [0, 0], sizes = [8, 384], strides = [1, 1]} : vector<8x512xf32> to vector<8x384xf32>
    %181 = arith.negf %180 : vector<8x384xf32>
    %182 = math.exp %181 : vector<8x384xf32>
    %cst_57 = arith.constant 1.000000e+00 : f32
    %183 = vector.broadcast %cst_57 : f32 to vector<8x384xf32>
    %184 = arith.addf %183, %182 : vector<8x384xf32>
    %185 = arith.divf %183, %184 : vector<8x384xf32>
    %186 = vector.extract_strided_slice %185 {offsets = [0, 0], sizes = [8, 128], strides = [1, 1]} : vector<8x384xf32> to vector<8x128xf32>
    %187 = vector.extract_strided_slice %185 {offsets = [0, 128], sizes = [8, 128], strides = [1, 1]} : vector<8x384xf32> to vector<8x128xf32>
    %188 = vector.extract_strided_slice %185 {offsets = [0, 256], sizes = [8, 128], strides = [1, 1]} : vector<8x384xf32> to vector<8x128xf32>
    %189 = vector.extract_strided_slice %179 {offsets = [0, 384], sizes = [8, 128], strides = [1, 1]} : vector<8x512xf32> to vector<8x128xf32>
    %190 = math.tanh %189 : vector<8x128xf32>
    %191 = arith.mulf %187, %166 : vector<8x128xf32>
    %192 = arith.mulf %186, %190 : vector<8x128xf32>
    %193 = arith.addf %191, %192 : vector<8x128xf32>
    %194 = math.tanh %193 : vector<8x128xf32>
    %195 = arith.mulf %188, %194 : vector<8x128xf32>
    %196 = arith.truncf %195 : vector<8x128xf32> to vector<8x128xbf16>
    %197 = arith.index_cast %173 : i32 to index
    %c0_58 = arith.constant 0 : index
    %198 = vector.load %arg12[%197, %c0_58] : memref<64x128xbf16, #tpu.memory_space<vmem>>, vector<8x128xbf16>
    tpu.vector_store %arg12[%197, %c0_58], %196 {strides = array<i32>} : memref<64x128xbf16, #tpu.memory_space<vmem>>, vector<8x128xbf16>,
    %c7_i32 = arith.constant 7 : i32
    %c8_i32_59 = arith.constant 8 : i32
    %199 = arith.muli %c7_i32, %c8_i32_59 : i32
    %200 = tpu.assume_multiple %199, 8 : i32
    %201 = arith.index_cast %200 : i32 to index
    %c0_60 = arith.constant 0 : index
    %202 = vector.load %arg11[%201, %c0_60] : memref<64x512xf32, #tpu.memory_space<vmem>>, vector<8x512xf32>
    %203 = arith.truncf %195 : vector<8x128xf32> to vector<8x128xbf16>
    %c0_61 = arith.constant 0 : index
    %c0_62 = arith.constant 0 : index
    %204 = vector.load %arg4[%c0_61, %c0_62] : memref<128x512xbf16, #tpu.memory_space<vmem>>, vector<128x512xbf16>
    %cst_63 = arith.constant dense<0.000000e+00> : vector<8x512xf32>
    %205 = tpu.matmul %203, %204, %cst_63 {dimension_numbers = #tpu.dot_dimension_numbers<[1], [0], [0], [1], [0, 0, 1, 1], [], []>} : vector<8x128xbf16>, vector<128x512xbf16>, vector<8x512xf32> -> vector<8x512xf32>
    %206 = arith.addf %202, %205 : vector<8x512xf32>
    %207 = vector.extract_strided_slice %206 {offsets = [0, 0], sizes = [8, 384], strides = [1, 1]} : vector<8x512xf32> to vector<8x384xf32>
    %208 = arith.negf %207 : vector<8x384xf32>
    %209 = math.exp %208 : vector<8x384xf32>
    %cst_64 = arith.constant 1.000000e+00 : f32
    %210 = vector.broadcast %cst_64 : f32 to vector<8x384xf32>
    %211 = arith.addf %210, %209 : vector<8x384xf32>
    %212 = arith.divf %210, %211 : vector<8x384xf32>
    %213 = vector.extract_strided_slice %212 {offsets = [0, 0], sizes = [8, 128], strides = [1, 1]} : vector<8x384xf32> to vector<8x128xf32>
    %214 = vector.extract_strided_slice %212 {offsets = [0, 128], sizes = [8, 128], strides = [1, 1]} : vector<8x384xf32> to vector<8x128xf32>
    %215 = vector.extract_strided_slice %212 {offsets = [0, 256], sizes = [8, 128], strides = [1, 1]} : vector<8x384xf32> to vector<8x128xf32>
    %216 = vector.extract_strided_slice %206 {offsets = [0, 384], sizes = [8, 128], strides = [1, 1]} : vector<8x512xf32> to vector<8x128xf32>
    %217 = math.tanh %216 : vector<8x128xf32>
    %218 = arith.mulf %214, %193 : vector<8x128xf32>
    %219 = arith.mulf %213, %217 : vector<8x128xf32>
    %220 = arith.addf %218, %219 : vector<8x128xf32>
    %221 = math.tanh %220 : vector<8x128xf32>
    %222 = arith.mulf %215, %221 : vector<8x128xf32>
    %223 = arith.truncf %222 : vector<8x128xf32> to vector<8x128xbf16>
    %224 = arith.index_cast %200 : i32 to index
    %c0_65 = arith.constant 0 : index
    %225 = vector.load %arg12[%224, %c0_65] : memref<64x128xbf16, #tpu.memory_space<vmem>>, vector<8x128xbf16>
    tpu.vector_store %arg12[%224, %c0_65], %223 {strides = array<i32>} : memref<64x128xbf16, #tpu.memory_space<vmem>>, vector<8x128xbf16>,
    %c8_i32_66 = arith.constant 8 : i32
    %c0_67 = arith.constant 0 : index
    %c0_68 = arith.constant 0 : index
    %226 = vector.load %arg9[%c0_67, %c0_68] : memref<8x128xf32, #tpu.memory_space<vmem>>, vector<8x128xf32>
    tpu.vector_store %arg9[%c0_67, %c0_68], %222 {strides = array<i32>} : memref<8x128xf32, #tpu.memory_space<vmem>>, vector<8x128xf32>,
    %c0_69 = arith.constant 0 : index
    %c0_70 = arith.constant 0 : index
    %227 = vector.load %arg10[%c0_69, %c0_70] : memref<8x128xf32, #tpu.memory_space<vmem>>, vector<8x128xf32>
    tpu.vector_store %arg10[%c0_69, %c0_70], %220 {strides = array<i32>} : memref<8x128xf32, #tpu.memory_space<vmem>>, vector<8x128xf32>,
    %c0_71 = arith.constant 0 : index
    %c0_72 = arith.constant 0 : index
    %228 = vector.load %arg12[%c0_71, %c0_72] : memref<64x128xbf16, #tpu.memory_space<vmem>>, vector<64x128xbf16>
    %c0_73 = arith.constant 0 : index
    %c0_74 = arith.constant 0 : index
    %229 = vector.load %arg6[%c0_73, %c0_74] : memref<128x128xbf16, #tpu.memory_space<vmem>>, vector<128x128xbf16>
    %cst_75 = arith.constant dense<0.000000e+00> : vector<64x128xf32>
    %230 = tpu.matmul %228, %229, %cst_75 {dimension_numbers = #tpu.dot_dimension_numbers<[1], [0], [0], [1], [0, 0, 1, 1], [], []>} : vector<64x128xbf16>, vector<128x128xbf16>, vector<64x128xf32> -> vector<64x128xf32>
    %c0_76 = arith.constant 0 : index
    %c0_77 = arith.constant 0 : index
    %231 = vector.load %arg7[%c0_76, %c0_77] : memref<1x128xf32, #tpu.memory_space<vmem>>, vector<1x128xf32>
    %232 = vector.broadcast %231 : vector<1x128xf32> to vector<64x128xf32>
    %233 = arith.addf %230, %232 : vector<64x128xf32>
    %c0_78 = arith.constant 0 : index
    %c0_79 = arith.constant 0 : index
    %234 = vector.load %arg8[%c0_78, %c0_79] : memref<64x128xf32, #tpu.memory_space<vmem>>, vector<64x128xf32>
    tpu.vector_store %arg8[%c0_78, %c0_79], %233 {strides = array<i32>} : memref<64x128xf32, #tpu.memory_space<vmem>>, vector<64x128xf32>,
    return
  }
}

</mosaic_0001>

<llo_original>
// kernel: char_lstm_forward.1
$region0: #{char_lstm_forward.1}
  #allocation0 [shape = 'u32[]', space=smem, size = 0x4, offset = 0x4, fixed_abs, tag = 'smem constant byte address 0x4 - core index']
  #allocation1 [shape = 'u32[144,128]{1,0:T(1,128)}', space=vmem, size = 0x12000, scoped, tag = 'internal scratch']
  #allocation2 [shape = 'f32[64,512]{1,0:T(8,128)}', space=vmem, size = 0x20000, scoped, tag = 'scratch operand']
  #allocation3 [shape = 'bf16[64,128]{1,0:T(8,128)(2,1)}', space=vmem, size = 0x4000, scoped, tag = 'scratch operand']
  %s0 = inlined_call_operand.vmem [shape: f32[64,16], index: 0, kind: input, shape index: {}]
  %s1 = inlined_call_operand.vmem [shape: f32[8,128], index: 1, kind: input, shape index: {}]
  %s2 = inlined_call_operand.vmem [shape: f32[8,128], index: 2, kind: input, shape index: {}]
  %s3 = inlined_call_operand.vmem [shape: bf16[16,512], index: 3, kind: input, shape index: {}]
  %s4 = inlined_call_operand.hbm [shape: bf16[128,512], index: 4, kind: input, shape index: {}]
  %s5 = inlined_call_operand.vmem [shape: f32[1,512], index: 5, kind: input, shape index: {}]
  %s6 = inlined_call_operand.vmem [shape: bf16[128,128], index: 6, kind: input, shape index: {}]
  %s7 = inlined_call_operand.vmem [shape: f32[1,128], index: 7, kind: input, shape index: {}]
  %s8 = inlined_call_operand.vmem [shape: f32[64,128], index: 8, kind: output, shape index: {0}]
  %s9 = inlined_call_operand.vmem [shape: f32[8,128], index: 9, kind: output, shape index: {1}]
  %s10 = inlined_call_operand.vmem [shape: f32[8,128], index: 10, kind: output, shape index: {2}]
  %11 = xla_tuple %s8, %s9, %s10
  %s12 = sld [smem:[#allocation0]]
  $region62: #{char_lstm_forward.1} parent=0
    _
  %s14 = ssub.s32 1, %s12
  %s15 = scalar_select 0, %s14, %s12
  $region1: #{char_lstm_forward.1} parent=0
    #allocation4 [shape = 'u8[131072]{0}', space=vmem, size = 0x20000, scoped, tag = 'input window, operand 4, single buffered']
    #allocation5 [shape = 's32[1]{0}', space=sflag, size = 0x4, scoped, tag = 'scoped memory for char_lstm_forward.1']
    %16 = vsyncpa [#allocation5], 0
    // Predicated region
    $region2: #{char_lstm_forward.1} parent=1 // pred_check
      _
    $region3: #{char_lstm_forward.1} parent=1 // pred_check_branch
      %18 = sbr.rel (0) target = $region5
    $region4: #{char_lstm_forward.1} parent=1 // pred_region
      _
    $region5: #{char_lstm_forward.1} parent=1 // pred_fallthru
      _
    // Predicated region
    $region6: #{char_lstm_forward.1} parent=1 // pred_check
      _
    $region7: #{char_lstm_forward.1} parent=1 // pred_check_branch
      %20 = sbr.rel (0) target = $region9
    $region8: #{char_lstm_forward.1} parent=1 // pred_region
      _
    $region9: #{char_lstm_forward.1} parent=1 // pred_fallthru
      _
    // Predicated region
    $region10: #{char_lstm_forward.1} parent=1 // pred_check
      _
    $region11: #{char_lstm_forward.1} parent=1 // pred_check_branch
      %22 = sbr.rel (0) target = $region13
    $region12: #{char_lstm_forward.1} parent=1 // pred_region
      _
    $region13: #{char_lstm_forward.1} parent=1 // pred_fallthru
      _
    // Predicated region
    $region14: #{char_lstm_forward.1} parent=1 // pred_check
      _
    $region15: #{char_lstm_forward.1} parent=1 // pred_check_branch
      %24 = sbr.rel (0) target = $region17
    $region16: #{char_lstm_forward.1} parent=1 // pred_region
      _
    $region17: #{char_lstm_forward.1} parent=1 // pred_fallthru
      _
    // Predicated region
    $region18: #{char_lstm_forward.1} parent=1 // pred_check
      _
    $region19: #{char_lstm_forward.1} parent=1 // pred_check_branch
      %26 = sbr.rel (0) target = $region21
    $region20: #{char_lstm_forward.1} parent=1 // pred_region
      %s28 = ssub.s32 4096, 4096
      %29 = vsyncadd [#allocation5], %s28
      %s30 = sshll.u32 [#allocation4], 4
      %s31 = int_to_ptr.vmem [resolvable:$true] %s30
      %36 = dma.hbm_to_vmem [thread:$0]  %s4, 4096, %s31, [#allocation5], 256, 256, 16
    $region21: #{char_lstm_forward.1} parent=1 // pred_fallthru
      _
    // Predicated region
    $region22: #{char_lstm_forward.1} parent=1 // pred_check
      _
    $region23: #{char_lstm_forward.1} parent=1 // pred_check_branch
      %38 = sbr.rel (0) target = $region25
    $region24: #{char_lstm_forward.1} parent=1 // pred_region
      _
    $region25: #{char_lstm_forward.1} parent=1 // pred_fallthru
      _
    // Predicated region
    $region26: #{char_lstm_forward.1} parent=1 // pred_check
      _
    $region27: #{char_lstm_forward.1} parent=1 // pred_check_branch
      %40 = sbr.rel (0) target = $region29
    $region28: #{char_lstm_forward.1} parent=1 // pred_region
      _
    $region29: #{char_lstm_forward.1} parent=1 // pred_fallthru
      _
    // Predicated region
    $region30: #{char_lstm_forward.1} parent=1 // pred_check
      _
    $region31: #{char_lstm_forward.1} parent=1 // pred_check_branch
      %42 = sbr.rel (0) target = $region33
    $region32: #{char_lstm_forward.1} parent=1 // pred_region
      _
    $region33: #{char_lstm_forward.1} parent=1 // pred_fallthru
      _
    // Predicated region
    $region34: #{char_lstm_forward.1} parent=1 // pred_check
      _
    $region35: #{char_lstm_forward.1} parent=1 // pred_check_branch
      %44 = sbr.rel (0) target = $region37
    $region36: #{char_lstm_forward.1} parent=1 // pred_region
      %45 = dma.done [#allocation5], 4096
    $region37: #{char_lstm_forward.1} parent=1 // pred_fallthru
      _
    %v47 = vld [vmem:[%s0] sm:$0xff]
    %v48 = vld [vmem:[%s0 + $0x8] sm:$0xff]
    %v49 = vld [vmem:[%s0 + $0x10] sm:$0xff]
    %v50 = vld [vmem:[%s0 + $0x18] sm:$0xff]
    %v51 = vld [vmem:[%s0 + $0x20] sm:$0xff]
    %v52 = vld [vmem:[%s0 + $0x28] sm:$0xff]
    %v53 = vld [vmem:[%s0 + $0x30] sm:$0xff]
    %v54 = vld [vmem:[%s0 + $0x38] sm:$0xff]
    %v55 = vpack.c.bf16 %v48, %v47
    %v56 = vpack.c.bf16 %v50, %v49
    %v57 = vpack.c.bf16 %v52, %v51
    %v58 = vpack.c.bf16 %v54, %v53
    %v59 = vld [vmem:[%s3] sm:$0xff]
    %v60 = vld [vmem:[%s3 + $0x8] sm:$0xff]
    %v61 = vld [vmem:[%s3 + $0x10] sm:$0xff]
    %v62 = vld [vmem:[%s3 + $0x18] sm:$0xff]
    %v63 = vld [vmem:[%s5] sm:$0xf]
    %v65 = vlaneseq
    %v66 = vshrl.u32 %v65, 7
    %v67 = vsub.s32 0, %v66
    %v68 = vrot.slane %v63, %v67
    %v69 = vlaneseq
    %v70 = vshrl.u32 %v69, 7
    %v71 = vsub.s32 1, %v70
    %v72 = vrot.slane %v63, %v71
    %v73 = vlaneseq
    %v74 = vshrl.u32 %v73, 7
    %v75 = vsub.s32 2, %v74
    %v76 = vrot.slane %v63, %v75
    %v77 = vlaneseq
    %v78 = vshrl.u32 %v77, 7
    %v79 = vsub.s32 3, %v78
    %v80 = vrot.slane %v63, %v79
    %v89 = vunpack.c.l.b16 %v59
    %v90 = vunpack.c.h.b16 %v59
    %v91 = vunpack.c.l.b16 %v60
    %v92 = vunpack.c.h.b16 %v60
    %v93 = vunpack.c.l.b16 %v61
    %v94 = vunpack.c.h.b16 %v61
    %v95 = vunpack.c.l.b16 %v62
    %v96 = vunpack.c.h.b16 %v62
    %v97 = vpack.c.b16 %v93, %v89
    %v98 = vpack.c.b16 %v94, %v90
    %v99 = vpack.c.b16 %v95, %v91
    %v100 = vpack.c.b16 %v96, %v92
    %vm105 = vcmask 130048
    %v107 = vsel %vm105, %v55, 0
    %v110 = vsel %vm105, %v56, 0
    %v113 = vsel %vm105, %v57, 0
    %v116 = vsel %vm105, %v58, 0
    %118 = vmatprep.subr.bf16.mxu0 0
    %119 = vmatpush1.bf16.msra.mxu0 0
    %120 = vmatprep.subr.bf16.mxu0 0
    %121 = vmatpush1.bf16.msra.mxu0 0
    %122 = vmatprep.subr.bf16.mxu0 0
    %123 = vmatpush1.bf16.msra.mxu0 0
    %124 = vmatprep.subr.bf16.mxu0 0
    %125 = vmatpush1.bf16.msra.mxu0 0
    %126 = vmatprep.subr.bf16.mxu0 0
    %127 = vmatpush1.bf16.msra.mxu0 0
    %128 = vmatprep.subr.bf16.mxu0 0
    %129 = vmatpush1.bf16.msra.mxu0 0
    %130 = vmatprep.subr.bf16.mxu0 0
    %131 = vmatpush1.bf16.msra.mxu0 0
    %132 = vmatprep.subr.bf16.mxu0 %v98
    %133 = vmatpush1.bf16.msra.mxu0 %v97
    %134 = vmatprep.subr.bf16.mxu0 0
    %135 = vmatpush2.bf16.msra.mxu0 0
    %136 = vmatprep.subr.bf16.mxu0 0
    %137 = vmatpush2.bf16.msra.mxu0 0
    %138 = vmatprep.subr.bf16.mxu0 0
    %139 = vmatpush2.bf16.msra.mxu0 0
    %140 = vmatprep.subr.bf16.mxu0 0
    %141 = vmatpush2.bf16.msra.mxu0 0
    %142 = vmatprep.subr.bf16.mxu0 0
    %143 = vmatpush2.bf16.msra.mxu0 0
    %144 = vmatprep.subr.bf16.mxu0 0
    %145 = vmatpush2.bf16.msra.mxu0 0
    %146 = vmatprep.subr.bf16.mxu0 0
    %147 = vmatpush2.bf16.msra.mxu0 0
    %148 = vmatprep.subr.bf16.mxu0 0
    %149 = vmatpush2.bf16.msra.mxu0 0
    %150 = vmatprep.mubr.bf16.mxu0 0
    %151 = vmatmul.mubr.bf16.gmra.mxu0 %v107
    %v152 = vpop.f32.mrf.mxu0
    %v153 = vadd.f32 %v68, %v152
    %v154 = vpop.f32.mrf.mxu0
    %v155 = vadd.f32 %v72, %v154
    %v156 = vpop.f32.mrf.mxu0
    %v157 = vadd.f32 %v68, %v156
    %v158 = vpop.f32.mrf.mxu0
    %v159 = vadd.f32 %v72, %v158
    %160 = vmatprep.mubr.bf16.mxu0 0
    %161 = vmatmul.mubr.bf16.gmra.mxu0 %v110
    %v162 = vpop.f32.mrf.mxu0
    %v163 = vadd.f32 %v68, %v162
    %v164 = vpop.f32.mrf.mxu0
    %v165 = vadd.f32 %v72, %v164
    %v166 = vpop.f32.mrf.mxu0
    %v167 = vadd.f32 %v68, %v166
    %v168 = vpop.f32.mrf.mxu0
    %v169 = vadd.f32 %v72, %v168
    %170 = vmatprep.mubr.bf16.mxu0 0
    %171 = vmatmul.mubr.bf16.gmra.mxu0 %v113
    %v172 = vpop.f32.mrf.mxu0
    %v173 = vadd.f32 %v68, %v172
    %v174 = vpop.f32.mrf.mxu0
    %v175 = vadd.f32 %v72, %v174
    %v176 = vpop.f32.mrf.mxu0
    %v177 = vadd.f32 %v68, %v176
    %v178 = vpop.f32.mrf.mxu0
    %v179 = vadd.f32 %v72, %v178
    %180 = vmatprep.mubr.bf16.mxu0 0
    %181 = vmatmul.mubr.bf16.gmra.mxu0 %v116
    %v182 = vpop.f32.mrf.mxu0
    %v183 = vadd.f32 %v68, %v182
    %v184 = vpop.f32.mrf.mxu0
    %v185 = vadd.f32 %v72, %v184
    %v186 = vpop.f32.mrf.mxu0
    %v187 = vadd.f32 %v68, %v186
    %v188 = vpop.f32.mrf.mxu0
    %v189 = vadd.f32 %v72, %v188
    %190 = vdwg.mxu0
    %191 = vmatprep.subr.bf16.mxu0 0
    %192 = vmatpush1.bf16.msra.mxu0 0
    %193 = vmatprep.subr.bf16.mxu0 0
    %194 = vmatpush1.bf16.msra.mxu0 0
    %195 = vmatprep.subr.bf16.mxu0 0
    %196 = vmatpush1.bf16.msra.mxu0 0
    %197 = vmatprep.subr.bf16.mxu0 0
    %198 = vmatpush1.bf16.msra.mxu0 0
    %199 = vmatprep.subr.bf16.mxu0 0
    %200 = vmatpush1.bf16.msra.mxu0 0
    %201 = vmatprep.subr.bf16.mxu0 0
    %202 = vmatpush1.bf16.msra.mxu0 0
    %203 = vmatprep.subr.bf16.mxu0 0
    %204 = vmatpush1.bf16.msra.mxu0 0
    %205 = vmatprep.subr.bf16.mxu0 %v100
    %206 = vmatpush1.bf16.msra.mxu0 %v99
    %207 = vmatprep.subr.bf16.mxu0 0
    %208 = vmatpush2.bf16.msra.mxu0 0
    %209 = vmatprep.subr.bf16.mxu0 0
    %210 = vmatpush2.bf16.msra.mxu0 0
    %211 = vmatprep.subr.bf16.mxu0 0
    %212 = vmatpush2.bf16.msra.mxu0 0
    %213 = vmatprep.subr.bf16.mxu0 0
    %214 = vmatpush2.bf16.msra.mxu0 0
    %215 = vmatprep.subr.bf16.mxu0 0
    %216 = vmatpush2.bf16.msra.mxu0 0
    %217 = vmatprep.subr.bf16.mxu0 0
    %218 = vmatpush2.bf16.msra.mxu0 0
    %219 = vmatprep.subr.bf16.mxu0 0
    %220 = vmatpush2.bf16.msra.mxu0 0
    %221 = vmatprep.subr.bf16.mxu0 0
    %222 = vmatpush2.bf16.msra.mxu0 0
    %223 = vmatprep.mubr.bf16.mxu0 0
    %224 = vmatmul.mubr.bf16.gmra.mxu0 %v107
    %v225 = vpop.f32.mrf.mxu0
    %v226 = vadd.f32 %v76, %v225
    %v227 = vpop.f32.mrf.mxu0
    %v228 = vadd.f32 %v80, %v227
    %v229 = vpop.f32.mrf.mxu0
    %v230 = vadd.f32 %v76, %v229
    %v231 = vpop.f32.mrf.mxu0
    %v232 = vadd.f32 %v80, %v231
    %233 = vmatprep.mubr.bf16.mxu0 0
    %234 = vmatmul.mubr.bf16.gmra.mxu0 %v110
    %v235 = vpop.f32.mrf.mxu0
    %v236 = vadd.f32 %v76, %v235
    %v237 = vpop.f32.mrf.mxu0
    %v238 = vadd.f32 %v80, %v237
    %v239 = vpop.f32.mrf.mxu0
    %v240 = vadd.f32 %v76, %v239
    %v241 = vpop.f32.mrf.mxu0
    %v242 = vadd.f32 %v80, %v241
    %243 = vmatprep.mubr.bf16.mxu0 0
    %244 = vmatmul.mubr.bf16.gmra.mxu0 %v113
    %v245 = vpop.f32.mrf.mxu0
    %v246 = vadd.f32 %v76, %v245
    %v247 = vpop.f32.mrf.mxu0
    %v248 = vadd.f32 %v80, %v247
    %v249 = vpop.f32.mrf.mxu0
    %v250 = vadd.f32 %v76, %v249
    %v251 = vpop.f32.mrf.mxu0
    %v252 = vadd.f32 %v80, %v251
    %253 = vmatprep.mubr.bf16.mxu0 0
    %254 = vmatmul.mubr.bf16.gmra.mxu0 %v116
    %v255 = vpop.f32.mrf.mxu0
    %v256 = vadd.f32 %v76, %v255
    %v257 = vpop.f32.mrf.mxu0
    %v258 = vadd.f32 %v80, %v257
    %v259 = vpop.f32.mrf.mxu0
    %v260 = vadd.f32 %v76, %v259
    %v261 = vpop.f32.mrf.mxu0
    %v262 = vadd.f32 %v80, %v261
    %263 = vdwg.mxu0
    %264 = vst [vmem:[#allocation2] sm:$0xff] %v153
    %265 = vst [vmem:[#allocation2 + $0x8] sm:$0xff] %v155
    %266 = vst [vmem:[#allocation2 + $0x10] sm:$0xff] %v226
    %267 = vst [vmem:[#allocation2 + $0x18] sm:$0xff] %v228
    %268 = vst [vmem:[#allocation2 + $0x20] sm:$0xff] %v157
    %269 = vst [vmem:[#allocation2 + $0x28] sm:$0xff] %v159
    %270 = vst [vmem:[#allocation2 + $0x30] sm:$0xff] %v230
    %271 = vst [vmem:[#allocation2 + $0x38] sm:$0xff] %v232
    %272 = vst [vmem:[#allocation2 + $0x40] sm:$0xff] %v163
    %273 = vst [vmem:[#allocation2 + $0x48] sm:$0xff] %v165
    %274 = vst [vmem:[#allocation2 + $0x50] sm:$0xff] %v236
    %275 = vst [vmem:[#allocation2 + $0x58] sm:$0xff] %v238
    %276 = vst [vmem:[#allocation2 + $0x60] sm:$0xff] %v167
    %277 = vst [vmem:[#allocation2 + $0x68] sm:$0xff] %v169
    %278 = vst [vmem:[#allocation2 + $0x70] sm:$0xff] %v240
    %279 = vst [vmem:[#allocation2 + $0x78] sm:$0xff] %v242
    %280 = vst [vmem:[#allocation2 + $0x80] sm:$0xff] %v173
    %281 = vst [vmem:[#allocation2 + $0x88] sm:$0xff] %v175
    %282 = vst [vmem:[#allocation2 + $0x90] sm:$0xff] %v246
    %283 = vst [vmem:[#allocation2 + $0x98] sm:$0xff] %v248
    %284 = vst [vmem:[#allocation2 + $0xa0] sm:$0xff] %v177
    %285 = vst [vmem:[#allocation2 + $0xa8] sm:$0xff] %v179
    %286 = vst [vmem:[#allocation2 + $0xb0] sm:$0xff] %v250
    %287 = vst [vmem:[#allocation2 + $0xb8] sm:$0xff] %v252
    %288 = vst [vmem:[#allocation2 + $0xc0] sm:$0xff] %v183
    %289 = vst [vmem:[#allocation2 + $0xc8] sm:$0xff] %v185
    %290 = vst [vmem:[#allocation2 + $0xd0] sm:$0xff] %v256
    %291 = vst [vmem:[#allocation2 + $0xd8] sm:$0xff] %v258
    %292 = vst [vmem:[#allocation2 + $0xe0] sm:$0xff] %v187
    %293 = vst [vmem:[#allocation2 + $0xe8] sm:$0xff] %v189
    %294 = vst [vmem:[#allocation2 + $0xf0] sm:$0xff] %v260
    %295 = vst [vmem:[#allocation2 + $0xf8] sm:$0xff] %v262
    %v296 = vld [vmem:[%s1] sm:$0xff]
    %v297 = vld [vmem:[%s2] sm:$0xff]
    %s298 = smul.u32 0, 4
    %s299 = smul.addr %s298, 8
    %s300 = scalar_lea.vmem [#allocation2], %s299
    %v301 = vld [vmem:[%s300] sm:$0xff]
    %v302 = vld [vmem:[%s300 + $0x8] sm:$0xff]
    %v303 = vld [vmem:[%s300 + $0x10] sm:$0xff]
    %v304 = vld [vmem:[%s300 + $0x18] sm:$0xff]
    %v305 = vpack.c.bf16 %v296, %v296
    %v306 = vld [vmem:[#allocation4] sm:$0xff]
    %v307 = vld [vmem:[#allocation4 + $0x8] sm:$0xff]
    %v308 = vld [vmem:[#allocation4 + $0x10] sm:$0xff]
    %v309 = vld [vmem:[#allocation4 + $0x18] sm:$0xff]
    %v310 = vld [vmem:[#allocation4 + $0x20] sm:$0xff]
    %v311 = vld [vmem:[#allocation4 + $0x28] sm:$0xff]
    %v312 = vld [vmem:[#allocation4 + $0x30] sm:$0xff]
    %v313 = vld [vmem:[#allocation4 + $0x38] sm:$0xff]
    %v314 = vld [vmem:[#allocation4 + $0x40] sm:$0xff]
    %v315 = vld [vmem:[#allocation4 + $0x48] sm:$0xff]
    %v316 = vld [vmem:[#allocation4 + $0x50] sm:$0xff]
    %v317 = vld [vmem:[#allocation4 + $0x58] sm:$0xff]
    %v318 = vld [vmem:[#allocation4 + $0x60] sm:$0xff]
    %v319 = vld [vmem:[#allocation4 + $0x68] sm:$0xff]
    %v320 = vld [vmem:[#allocation4 + $0x70] sm:$0xff]
    %v321 = vld [vmem:[#allocation4 + $0x78] sm:$0xff]
    %v322 = vld [vmem:[#allocation4 + $0x80] sm:$0xff]
    %v323 = vld [vmem:[#allocation4 + $0x88] sm:$0xff]
    %v324 = vld [vmem:[#allocation4 + $0x90] sm:$0xff]
    %v325 = vld [vmem:[#allocation4 + $0x98] sm:$0xff]
    %v326 = vld [vmem:[#allocation4 + $0xa0] sm:$0xff]
    %v327 = vld [vmem:[#allocation4 + $0xa8] sm:$0xff]
    %v328 = vld [vmem:[#allocation4 + $0xb0] sm:$0xff]
    %v329 = vld [vmem:[#allocation4 + $0xb8] sm:$0xff]
    %v330 = vld [vmem:[#allocation4 + $0xc0] sm:$0xff]
    %v331 = vld [vmem:[#allocation4 + $0xc8] sm:$0xff]
    %v332 = vld [vmem:[#allocation4 + $0xd0] sm:$0xff]
    %v333 = vld [vmem:[#allocation4 + $0xd8] sm:$0xff]
    %v334 = vld [vmem:[#allocation4 + $0xe0] sm:$0xff]
    %v335 = vld [vmem:[#allocation4 + $0xe8] sm:$0xff]
    %v336 = vld [vmem:[#allocation4 + $0xf0] sm:$0xff]
    %v337 = vld [vmem:[#allocation4 + $0xf8] sm:$0xff]
    %v370 = vunpack.c.l.b16 %v306
    %v371 = vunpack.c.h.b16 %v306
    %v372 = vunpack.c.l.b16 %v307
    %v373 = vunpack.c.h.b16 %v307
    %v374 = vunpack.c.l.b16 %v308
    %v375 = vunpack.c.h.b16 %v308
    %v376 = vunpack.c.l.b16 %v309
    %v377 = vunpack.c.h.b16 %v309
    %v378 = vunpack.c.l.b16 %v310
    %v379 = vunpack.c.h.b16 %v310
    %v380 = vunpack.c.l.b16 %v311
    %v381 = vunpack.c.h.b16 %v311
    %v382 = vunpack.c.l.b16 %v312
    %v383 = vunpack.c.h.b16 %v312
    %v384 = vunpack.c.l.b16 %v313
    %v385 = vunpack.c.h.b16 %v313
    %v386 = vunpack.c.l.b16 %v314
    %v387 = vunpack.c.h.b16 %v314
    %v388 = vunpack.c.l.b16 %v315
    %v389 = vunpack.c.h.b16 %v315
    %v390 = vunpack.c.l.b16 %v316
    %v391 = vunpack.c.h.b16 %v316
    %v392 = vunpack.c.l.b16 %v317
    %v393 = vunpack.c.h.b16 %v317
    %v394 = vunpack.c.l.b16 %v318
    %v395 = vunpack.c.h.b16 %v318
    %v396 = vunpack.c.l.b16 %v319
    %v397 = vunpack.c.h.b16 %v319
    %v398 = vunpack.c.l.b16 %v320
    %v399 = vunpack.c.h.b16 %v320
    %v400 = vunpack.c.l.b16 %v321
    %v401 = vunpack.c.h.b16 %v321
    %v402 = vunpack.c.l.b16 %v322
    %v403 = vunpack.c.h.b16 %v322
    %v404 = vunpack.c.l.b16 %v323
    %v405 = vunpack.c.h.b16 %v323
    %v406 = vunpack.c.l.b16 %v324
    %v407 = vunpack.c.h.b16 %v324
    %v408 = vunpack.c.l.b16 %v325
    %v409 = vunpack.c.h.b16 %v325
    %v410 = vunpack.c.l.b16 %v326
    %v411 = vunpack.c.h.b16 %v326
    %v412 = vunpack.c.l.b16 %v327
    %v413 = vunpack.c.h.b16 %v327
    %v414 = vunpack.c.l.b16 %v328
    %v415 = vunpack.c.h.b16 %v328
    %v416 = vunpack.c.l.b16 %v329
    %v417 = vunpack.c.h.b16 %v329
    %v418 = vunpack.c.l.b16 %v330
    %v419 = vunpack.c.h.b16 %v330
    %v420 = vunpack.c.l.b16 %v331
    %v421 = vunpack.c.h.b16 %v331
    %v422 = vunpack.c.l.b16 %v332
    %v423 = vunpack.c.h.b16 %v332
    %v424 = vunpack.c.l.b16 %v333
    %v425 = vunpack.c.h.b16 %v333
    %v426 = vunpack.c.l.b16 %v334
    %v427 = vunpack.c.h.b16 %v334
    %v428 = vunpack.c.l.b16 %v335
    %v429 = vunpack.c.h.b16 %v335
    %v430 = vunpack.c.l.b16 %v336
    %v431 = vunpack.c.h.b16 %v336
    %v432 = vunpack.c.l.b16 %v337
    %v433 = vunpack.c.h.b16 %v337
    %v434 = vpack.c.b16 %v374, %v370
    %v435 = vpack.c.b16 %v375, %v371
    %v436 = vpack.c.b16 %v376, %v372
    %v437 = vpack.c.b16 %v377, %v373
    %v438 = vpack.c.b16 %v382, %v378
    %v439 = vpack.c.b16 %v383, %v379
    %v440 = vpack.c.b16 %v384, %v380
    %v441 = vpack.c.b16 %v385, %v381
    %v442 = vpack.c.b16 %v390, %v386
    %v443 = vpack.c.b16 %v391, %v387
    %v444 = vpack.c.b16 %v392, %v388
    %v445 = vpack.c.b16 %v393, %v389
    %v446 = vpack.c.b16 %v398, %v394
    %v447 = vpack.c.b16 %v399, %v395
    %v448 = vpack.c.b16 %v400, %v396
    %v449 = vpack.c.b16 %v401, %v397
    %v450 = vpack.c.b16 %v406, %v402
    %v451 = vpack.c.b16 %v407, %v403
    %v452 = vpack.c.b16 %v408, %v404
    %v453 = vpack.c.b16 %v409, %v405
    %v454 = vpack.c.b16 %v414, %v410
    %v455 = vpack.c.b16 %v415, %v411
    %v456 = vpack.c.b16 %v416, %v412
    %v457 = vpack.c.b16 %v417, %v413
    %v458 = vpack.c.b16 %v422, %v418
    %v459 = vpack.c.b16 %v423, %v419
    %v460 = vpack.c.b16 %v424, %v420
    %v461 = vpack.c.b16 %v425, %v421
    %v462 = vpack.c.b16 %v430, %v426
    %v463 = vpack.c.b16 %v431, %v427
    %v464 = vpack.c.b16 %v432, %v428
    %v465 = vpack.c.b16 %v433, %v429
    %498 = vmatprep.subr.bf16.mxu0 %v463
    %499 = vmatpush1.bf16.msra.mxu0 %v462
    %500 = vmatprep.subr.bf16.mxu0 %v459
    %501 = vmatpush1.bf16.msra.mxu0 %v458
    %502 = vmatprep.subr.bf16.mxu0 %v455
    %503 = vmatpush1.bf16.msra.mxu0 %v454
    %504 = vmatprep.subr.bf16.mxu0 %v451
    %505 = vmatpush1.bf16.msra.mxu0 %v450
    %506 = vmatprep.subr.bf16.mxu0 %v447
    %507 = vmatpush1.bf16.msra.mxu0 %v446
    %508 = vmatprep.subr.bf16.mxu0 %v443
    %509 = vmatpush1.bf16.msra.mxu0 %v442
    %510 = vmatprep.subr.bf16.mxu0 %v439
    %511 = vmatpush1.bf16.msra.mxu0 %v438
    %512 = vmatprep.subr.bf16.mxu0 %v435
    %513 = vmatpush1.bf16.msra.mxu0 %v434
    %514 = vmatprep.subr.bf16.mxu0 0
    %515 = vmatpush2.bf16.msra.mxu0 0
    %516 = vmatprep.subr.bf16.mxu0 0
    %517 = vmatpush2.bf16.msra.mxu0 0
    %518 = vmatprep.subr.bf16.mxu0 0
    %519 = vmatpush2.bf16.msra.mxu0 0
    %520 = vmatprep.subr.bf16.mxu0 0
    %521 = vmatpush2.bf16.msra.mxu0 0
    %522 = vmatprep.subr.bf16.mxu0 0
    %523 = vmatpush2.bf16.msra.mxu0 0
    %524 = vmatprep.subr.bf16.mxu0 0
    %525 = vmatpush2.bf16.msra.mxu0 0
    %526 = vmatprep.subr.bf16.mxu0 0
    %527 = vmatpush2.bf16.msra.mxu0 0
    %528 = vmatprep.subr.bf16.mxu0 0
    %529 = vmatpush2.bf16.msra.mxu0 0
    %530 = vmatprep.mubr.bf16.mxu0 0
    %531 = vmatmul.mubr.bf16.gmra.mxu0 %v305
    %v532 = vpop.f32.mrf.mxu0
    %v533 = vadd.f32 0.0, %v532
    %v534 = vpop.f32.mrf.mxu0
    %v535 = vadd.f32 0.0, %v534
    %v536 = vpop.f32.mrf.mxu0
    %v537 = vpop.f32.mrf.mxu0
    %538 = vdwg.mxu0
    %539 = vmatprep.subr.bf16.mxu0 %v465
    %540 = vmatpush1.bf16.msra.mxu0 %v464
    %541 = vmatprep.subr.bf16.mxu0 %v461
    %542 = vmatpush1.bf16.msra.mxu0 %v460
    %543 = vmatprep.subr.bf16.mxu0 %v457
    %544 = vmatpush1.bf16.msra.mxu0 %v456
    %545 = vmatprep.subr.bf16.mxu0 %v453
    %546 = vmatpush1.bf16.msra.mxu0 %v452
    %547 = vmatprep.subr.bf16.mxu0 %v449
    %548 = vmatpush1.bf16.msra.mxu0 %v448
    %549 = vmatprep.subr.bf16.mxu0 %v445
    %550 = vmatpush1.bf16.msra.mxu0 %v444
    %551 = vmatprep.subr.bf16.mxu0 %v441
    %552 = vmatpush1.bf16.msra.mxu0 %v440
    %553 = vmatprep.subr.bf16.mxu0 %v437
    %554 = vmatpush1.bf16.msra.mxu0 %v436
    %555 = vmatprep.subr.bf16.mxu0 0
    %556 = vmatpush2.bf16.msra.mxu0 0
    %557 = vmatprep.subr.bf16.mxu0 0
    %558 = vmatpush2.bf16.msra.mxu0 0
    %559 = vmatprep.subr.bf16.mxu0 0
    %560 = vmatpush2.bf16.msra.mxu0 0
    %561 = vmatprep.subr.bf16.mxu0 0
    %562 = vmatpush2.bf16.msra.mxu0 0
    %563 = vmatprep.subr.bf16.mxu0 0
    %564 = vmatpush2.bf16.msra.mxu0 0
    %565 = vmatprep.subr.bf16.mxu0 0
    %566 = vmatpush2.bf16.msra.mxu0 0
    %567 = vmatprep.subr.bf16.mxu0 0
    %568 = vmatpush2.bf16.msra.mxu0 0
    %569 = vmatprep.subr.bf16.mxu0 0
    %570 = vmatpush2.bf16.msra.mxu0 0
    %571 = vmatprep.mubr.bf16.mxu0 0
    %572 = vmatmul.mubr.bf16.gmra.mxu0 %v305
    %v573 = vpop.f32.mrf.mxu0
    %v574 = vadd.f32 0.0, %v573
    %v575 = vpop.f32.mrf.mxu0
    %v576 = vadd.f32 0.0, %v575
    %v577 = vpop.f32.mrf.mxu0
    %v578 = vpop.f32.mrf.mxu0
    %579 = vdwg.mxu0
    %v580 = vadd.f32 %v301, %v533
    %v581 = vadd.f32 %v302, %v535
    %v582 = vadd.f32 %v303, %v574
    %v583 = vadd.f32 %v304, %v576
    %v584 = vxor.u32 %v580, 2147483648
    %v585 = vxor.u32 %v581, 2147483648
    %v586 = vxor.u32 %v582, 2147483648
    %v587 = vmul.f32 %v584, 1.442695
    %v588 = vpow.pop %v587
    %v589 = vmul.f32 %v585, 1.442695
    %v590 = vpow.pop %v589
    %v591 = vmul.f32 %v586, 1.442695
    %v592 = vpow.pop %v591
    %v593 = vadd.f32 %v588, 1.0
    %v594 = vadd.f32 %v590, 1.0
    %v595 = vadd.f32 %v592, 1.0
    %v596 = vrcp.pop %v593
    %v597 = vmul.f32 1.0, %v596
    %v598 = vrcp.pop %v594
    %v599 = vmul.f32 1.0, %v598
    %v600 = vrcp.pop %v595
    %v601 = vmul.f32 1.0, %v600
    %v602 = vtanh.pop %v583
    %v603 = vmul.f32 %v599, %v297
    %v604 = vmul.f32 %v597, %v602
    %v605 = vadd.f32 %v603, %v604
    %v606 = vtanh.pop %v605
    %v607 = vmul.f32 %v601, %v606
    %v608 = vpack.c.bf16 %v607, %v607
    %609 = vst [vmem:[#allocation3] sm:$0xf] %v608
    %s610 = smul.u32 1, 4
    %s611 = smul.addr %s610, 8
    %s612 = scalar_lea.vmem [#allocation2], %s611
    %v613 = vld [vmem:[%s612] sm:$0xff]
    %v614 = vld [vmem:[%s612 + $0x8] sm:$0xff]
    %v615 = vld [vmem:[%s612 + $0x10] sm:$0xff]
    %v616 = vld [vmem:[%s612 + $0x18] sm:$0xff]
    %v617 = vld [vmem:[#allocation4] sm:$0xff]
    %v618 = vld [vmem:[#allocation4 + $0x8] sm:$0xff]
    %v619 = vld [vmem:[#allocation4 + $0x10] sm:$0xff]
    %v620 = vld [vmem:[#allocation4 + $0x18] sm:$0xff]
    %v621 = vld [vmem:[#allocation4 + $0x20] sm:$0xff]
    %v622 = vld [vmem:[#allocation4 + $0x28] sm:$0xff]
    %v623 = vld [vmem:[#allocation4 + $0x30] sm:$0xff]
    %v624 = vld [vmem:[#allocation4 + $0x38] sm:$0xff]
    %v625 = vld [vmem:[#allocation4 + $0x40] sm:$0xff]
    %v626 = vld [vmem:[#allocation4 + $0x48] sm:$0xff]
    %v627 = vld [vmem:[#allocation4 + $0x50] sm:$0xff]
    %v628 = vld [vmem:[#allocation4 + $0x58] sm:$0xff]
    %v629 = vld [vmem:[#allocation4 + $0x60] sm:$0xff]
    %v630 = vld [vmem:[#allocation4 + $0x68] sm:$0xff]
    %v631 = vld [vmem:[#allocation4 + $0x70] sm:$0xff]
    %v632 = vld [vmem:[#allocation4 + $0x78] sm:$0xff]
    %v633 = vld [vmem:[#allocation4 + $0x80] sm:$0xff]
    %v634 = vld [vmem:[#allocation4 + $0x88] sm:$0xff]
    %v635 = vld [vmem:[#allocation4 + $0x90] sm:$0xff]
    %v636 = vld [vmem:[#allocation4 + $0x98] sm:$0xff]
    %v637 = vld [vmem:[#allocation4 + $0xa0] sm:$0xff]
    %v638 = vld [vmem:[#allocation4 + $0xa8] sm:$0xff]
    %v639 = vld [vmem:[#allocation4 + $0xb0] sm:$0xff]
    %v640 = vld [vmem:[#allocation4 + $0xb8] sm:$0xff]
    %v641 = vld [vmem:[#allocation4 + $0xc0] sm:$0xff]
    %v642 = vld [vmem:[#allocation4 + $0xc8] sm:$0xff]
    %v643 = vld [vmem:[#allocation4 + $0xd0] sm:$0xff]
    %v644 = vld [vmem:[#allocation4 + $0xd8] sm:$0xff]
    %v645 = vld [vmem:[#allocation4 + $0xe0] sm:$0xff]
    %v646 = vld [vmem:[#allocation4 + $0xe8] sm:$0xff]
    %v647 = vld [vmem:[#allocation4 + $0xf0] sm:$0xff]
    %v648 = vld [vmem:[#allocation4 + $0xf8] sm:$0xff]
    %v681 = vunpack.c.l.b16 %v617
    %v682 = vunpack.c.h.b16 %v617
    %v683 = vunpack.c.l.b16 %v618
    %v684 = vunpack.c.h.b16 %v618
    %v685 = vunpack.c.l.b16 %v619
    %v686 = vunpack.c.h.b16 %v619
    %v687 = vunpack.c.l.b16 %v620
    %v688 = vunpack.c.h.b16 %v620
    %v689 = vunpack.c.l.b16 %v621
    %v690 = vunpack.c.h.b16 %v621
    %v691 = vunpack.c.l.b16 %v622
    %v692 = vunpack.c.h.b16 %v622
    %v693 = vunpack.c.l.b16 %v623
    %v694 = vunpack.c.h.b16 %v623
    %v695 = vunpack.c.l.b16 %v624
    %v696 = vunpack.c.h.b16 %v624
    %v697 = vunpack.c.l.b16 %v625
    %v698 = vunpack.c.h.b16 %v625
    %v699 = vunpack.c.l.b16 %v626
    %v700 = vunpack.c.h.b16 %v626
    %v701 = vunpack.c.l.b16 %v627
    %v702 = vunpack.c.h.b16 %v627
    %v703 = vunpack.c.l.b16 %v628
    %v704 = vunpack.c.h.b16 %v628
    %v705 = vunpack.c.l.b16 %v629
    %v706 = vunpack.c.h.b16 %v629
    %v707 = vunpack.c.l.b16 %v630
    %v708 = vunpack.c.h.b16 %v630
    %v709 = vunpack.c.l.b16 %v631
    %v710 = vunpack.c.h.b16 %v631
    %v711 = vunpack.c.l.b16 %v632
    %v712 = vunpack.c.h.b16 %v632
    %v713 = vunpack.c.l.b16 %v633
    %v714 = vunpack.c.h.b16 %v633
    %v715 = vunpack.c.l.b16 %v634
    %v716 = vunpack.c.h.b16 %v634
    %v717 = vunpack.c.l.b16 %v635
    %v718 = vunpack.c.h.b16 %v635
    %v719 = vunpack.c.l.b16 %v636
    %v720 = vunpack.c.h.b16 %v636
    %v721 = vunpack.c.l.b16 %v637
    %v722 = vunpack.c.h.b16 %v637
    %v723 = vunpack.c.l.b16 %v638
    %v724 = vunpack.c.h.b16 %v638
    %v725 = vunpack.c.l.b16 %v639
    %v726 = vunpack.c.h.b16 %v639
    %v727 = vunpack.c.l.b16 %v640
    %v728 = vunpack.c.h.b16 %v640
    %v729 = vunpack.c.l.b16 %v641
    %v730 = vunpack.c.h.b16 %v641
    %v731 = vunpack.c.l.b16 %v642
    %v732 = vunpack.c.h.b16 %v642
    %v733 = vunpack.c.l.b16 %v643
    %v734 = vunpack.c.h.b16 %v643
    %v735 = vunpack.c.l.b16 %v644
    %v736 = vunpack.c.h.b16 %v644
    %v737 = vunpack.c.l.b16 %v645
    %v738 = vunpack.c.h.b16 %v645
    %v739 = vunpack.c.l.b16 %v646
    %v740 = vunpack.c.h.b16 %v646
    %v741 = vunpack.c.l.b16 %v647
    %v742 = vunpack.c.h.b16 %v647
    %v743 = vunpack.c.l.b16 %v648
    %v744 = vunpack.c.h.b16 %v648
    %v745 = vpack.c.b16 %v685, %v681
    %v746 = vpack.c.b16 %v686, %v682
    %v747 = vpack.c.b16 %v687, %v683
    %v748 = vpack.c.b16 %v688, %v684
    %v749 = vpack.c.b16 %v693, %v689
    %v750 = vpack.c.b16 %v694, %v690
    %v751 = vpack.c.b16 %v695, %v691
    %v752 = vpack.c.b16 %v696, %v692
    %v753 = vpack.c.b16 %v701, %v697
    %v754 = vpack.c.b16 %v702, %v698
    %v755 = vpack.c.b16 %v703, %v699
    %v756 = vpack.c.b16 %v704, %v700
    %v757 = vpack.c.b16 %v709, %v705
    %v758 = vpack.c.b16 %v710, %v706
    %v759 = vpack.c.b16 %v711, %v707
    %v760 = vpack.c.b16 %v712, %v708
    %v761 = vpack.c.b16 %v717, %v713
    %v762 = vpack.c.b16 %v718, %v714
    %v763 = vpack.c.b16 %v719, %v715
    %v764 = vpack.c.b16 %v720, %v716
    %v765 = vpack.c.b16 %v725, %v721
    %v766 = vpack.c.b16 %v726, %v722
    %v767 = vpack.c.b16 %v727, %v723
    %v768 = vpack.c.b16 %v728, %v724
    %v769 = vpack.c.b16 %v733, %v729
    %v770 = vpack.c.b16 %v734, %v730
    %v771 = vpack.c.b16 %v735, %v731
    %v772 = vpack.c.b16 %v736, %v732
    %v773 = vpack.c.b16 %v741, %v737
    %v774 = vpack.c.b16 %v742, %v738
    %v775 = vpack.c.b16 %v743, %v739
    %v776 = vpack.c.b16 %v744, %v740
    %809 = vmatprep.subr.bf16.mxu0 %v774
    %810 = vmatpush1.bf16.msra.mxu0 %v773
    %811 = vmatprep.subr.bf16.mxu0 %v770
    %812 = vmatpush1.bf16.msra.mxu0 %v769
    %813 = vmatprep.subr.bf16.mxu0 %v766
    %814 = vmatpush1.bf16.msra.mxu0 %v765
    %815 = vmatprep.subr.bf16.mxu0 %v762
    %816 = vmatpush1.bf16.msra.mxu0 %v761
    %817 = vmatprep.subr.bf16.mxu0 %v758
    %818 = vmatpush1.bf16.msra.mxu0 %v757
    %819 = vmatprep.subr.bf16.mxu0 %v754
    %820 = vmatpush1.bf16.msra.mxu0 %v753
    %821 = vmatprep.subr.bf16.mxu0 %v750
    %822 = vmatpush1.bf16.msra.mxu0 %v749
    %823 = vmatprep.subr.bf16.mxu0 %v746
    %824 = vmatpush1.bf16.msra.mxu0 %v745
    %825 = vmatprep.subr.bf16.mxu0 0
    %826 = vmatpush2.bf16.msra.mxu0 0
    %827 = vmatprep.subr.bf16.mxu0 0
    %828 = vmatpush2.bf16.msra.mxu0 0
    %829 = vmatprep.subr.bf16.mxu0 0
    %830 = vmatpush2.bf16.msra.mxu0 0
    %831 = vmatprep.subr.bf16.mxu0 0
    %832 = vmatpush2.bf16.msra.mxu0 0
    %833 = vmatprep.subr.bf16.mxu0 0
    %834 = vmatpush2.bf16.msra.mxu0 0
    %835 = vmatprep.subr.bf16.mxu0 0
    %836 = vmatpush2.bf16.msra.mxu0 0
    %837 = vmatprep.subr.bf16.mxu0 0
    %838 = vmatpush2.bf16.msra.mxu0 0
    %839 = vmatprep.subr.bf16.mxu0 0
    %840 = vmatpush2.bf16.msra.mxu0 0
    %841 = vmatprep.mubr.bf16.mxu0 0
    %842 = vmatmul.mubr.bf16.gmra.mxu0 %v608
    %v843 = vpop.f32.mrf.mxu0
    %v844 = vadd.f32 0.0, %v843
    %v845 = vpop.f32.mrf.mxu0
    %v846 = vadd.f32 0.0, %v845
    %v847 = vpop.f32.mrf.mxu0
    %v848 = vpop.f32.mrf.mxu0
    %849 = vdwg.mxu0
    %850 = vmatprep.subr.bf16.mxu0 %v776
    %851 = vmatpush1.bf16.msra.mxu0 %v775
    %852 = vmatprep.subr.bf16.mxu0 %v772
    %853 = vmatpush1.bf16.msra.mxu0 %v771
    %854 = vmatprep.subr.bf16.mxu0 %v768
    %855 = vmatpush1.bf16.msra.mxu0 %v767
    %856 = vmatprep.subr.bf16.mxu0 %v764
    %857 = vmatpush1.bf16.msra.mxu0 %v763
    %858 = vmatprep.subr.bf16.mxu0 %v760
    %859 = vmatpush1.bf16.msra.mxu0 %v759
    %860 = vmatprep.subr.bf16.mxu0 %v756
    %861 = vmatpush1.bf16.msra.mxu0 %v755
    %862 = vmatprep.subr.bf16.mxu0 %v752
    %863 = vmatpush1.bf16.msra.mxu0 %v751
    %864 = vmatprep.subr.bf16.mxu0 %v748
    %865 = vmatpush1.bf16.msra.mxu0 %v747
    %866 = vmatprep.subr.bf16.mxu0 0
    %867 = vmatpush2.bf16.msra.mxu0 0
    %868 = vmatprep.subr.bf16.mxu0 0
    %869 = vmatpush2.bf16.msra.mxu0 0
    %870 = vmatprep.subr.bf16.mxu0 0
    %871 = vmatpush2.bf16.msra.mxu0 0
    %872 = vmatprep.subr.bf16.mxu0 0
    %873 = vmatpush2.bf16.msra.mxu0 0
    %874 = vmatprep.subr.bf16.mxu0 0
    %875 = vmatpush2.bf16.msra.mxu0 0
    %876 = vmatprep.subr.bf16.mxu0 0
    %877 = vmatpush2.bf16.msra.mxu0 0
    %878 = vmatprep.subr.bf16.mxu0 0
    %879 = vmatpush2.bf16.msra.mxu0 0
    %880 = vmatprep.subr.bf16.mxu0 0
    %881 = vmatpush2.bf16.msra.mxu0 0
    %882 = vmatprep.mubr.bf16.mxu0 0
    %883 = vmatmul.mubr.bf16.gmra.mxu0 %v608
    %v884 = vpop.f32.mrf.mxu0
    %v885 = vadd.f32 0.0, %v884
    %v886 = vpop.f32.mrf.mxu0
    %v887 = vadd.f32 0.0, %v886
    %v888 = vpop.f32.mrf.mxu0
    %v889 = vpop.f32.mrf.mxu0
    %890 = vdwg.mxu0
    %v891 = vadd.f32 %v613, %v844
    %v892 = vadd.f32 %v614, %v846
    %v893 = vadd.f32 %v615, %v885
    %v894 = vadd.f32 %v616, %v887
    %v895 = vxor.u32 %v891, 2147483648
    %v896 = vxor.u32 %v892, 2147483648
    %v897 = vxor.u32 %v893, 2147483648
    %v898 = vmul.f32 %v895, 1.442695
    %v899 = vpow.pop %v898
    %v900 = vmul.f32 %v896, 1.442695
    %v901 = vpow.pop %v900
    %v902 = vmul.f32 %v897, 1.442695
    %v903 = vpow.pop %v902
    %v904 = vadd.f32 %v899, 1.0
    %v905 = vadd.f32 %v901, 1.0
    %v906 = vadd.f32 %v903, 1.0
    %v907 = vrcp.pop %v904
    %v908 = vmul.f32 1.0, %v907
    %v909 = vrcp.pop %v905
    %v910 = vmul.f32 1.0, %v909
    %v911 = vrcp.pop %v906
    %v912 = vmul.f32 1.0, %v911
    %v913 = vtanh.pop %v894
    %v914 = vmul.f32 %v910, %v605
    %v915 = vmul.f32 %v908, %v913
    %v916 = vadd.f32 %v914, %v915
    %v917 = vtanh.pop %v916
    %v918 = vmul.f32 %v912, %v917
    %v919 = vpack.c.bf16 %v918, %v918
    %s920 = scalar_lea.vmem [#allocation3], 4
    %921 = vst [vmem:[%s920] sm:$0xf] %v919
    %s922 = smul.u32 2, 4
    %s923 = smul.addr %s922, 8
    %s924 = scalar_lea.vmem [#allocation2], %s923
    %v925 = vld [vmem:[%s924] sm:$0xff]
    %v926 = vld [vmem:[%s924 + $0x8] sm:$0xff]
    %v927 = vld [vmem:[%s924 + $0x10] sm:$0xff]
    %v928 = vld [vmem:[%s924 + $0x18] sm:$0xff]
    %v929 = vld [vmem:[#allocation4] sm:$0xff]
    %v930 = vld [vmem:[#allocation4 + $0x8] sm:$0xff]
    %v931 = vld [vmem:[#allocation4 + $0x10] sm:$0xff]
    %v932 = vld [vmem:[#allocation4 + $0x18] sm:$0xff]
    %v933 = vld [vmem:[#allocation4 + $0x20] sm:$0xff]
    %v934 = vld [vmem:[#allocation4 + $0x28] sm:$0xff]
    %v935 = vld [vmem:[#allocation4 + $0x30] sm:$0xff]
    %v936 = vld [vmem:[#allocation4 + $0x38] sm:$0xff]
    %v937 = vld [vmem:[#allocation4 + $0x40] sm:$0xff]
    %v938 = vld [vmem:[#allocation4 + $0x48] sm:$0xff]
    %v939 = vld [vmem:[#allocation4 + $0x50] sm:$0xff]
    %v940 = vld [vmem:[#allocation4 + $0x58] sm:$0xff]
    %v941 = vld [vmem:[#allocation4 + $0x60] sm:$0xff]
    %v942 = vld [vmem:[#allocation4 + $0x68] sm:$0xff]
    %v943 = vld [vmem:[#allocation4 + $0x70] sm:$0xff]
    %v944 = vld [vmem:[#allocation4 + $0x78] sm:$0xff]
    %v945 = vld [vmem:[#allocation4 + $0x80] sm:$0xff]
    %v946 = vld [vmem:[#allocation4 + $0x88] sm:$0xff]
    %v947 = vld [vmem:[#allocation4 + $0x90] sm:$0xff]
    %v948 = vld [vmem:[#allocation4 + $0x98] sm:$0xff]
    %v949 = vld [vmem:[#allocation4 + $0xa0] sm:$0xff]
    %v950 = vld [vmem:[#allocation4 + $0xa8] sm:$0xff]
    %v951 = vld [vmem:[#allocation4 + $0xb0] sm:$0xff]
    %v952 = vld [vmem:[#allocation4 + $0xb8] sm:$0xff]
    %v953 = vld [vmem:[#allocation4 + $0xc0] sm:$0xff]
    %v954 = vld [vmem:[#allocation4 + $0xc8] sm:$0xff]
    %v955 = vld [vmem:[#allocation4 + $0xd0] sm:$0xff]
    %v956 = vld [vmem:[#allocation4 + $0xd8] sm:$0xff]
    %v957 = vld [vmem:[#allocation4 + $0xe0] sm:$0xff]
    %v958 = vld [vmem:[#allocation4 + $0xe8] sm:$0xff]
    %v959 = vld [vmem:[#allocation4 + $0xf0] sm:$0xff]
    %v960 = vld [vmem:[#allocation4 + $0xf8] sm:$0xff]
    %v993 = vunpack.c.l.b16 %v929
    %v994 = vunpack.c.h.b16 %v929
    %v995 = vunpack.c.l.b16 %v930
    %v996 = vunpack.c.h.b16 %v930
    %v997 = vunpack.c.l.b16 %v931
    %v998 = vunpack.c.h.b16 %v931
    %v999 = vunpack.c.l.b16 %v932
    %v1000 = vunpack.c.h.b16 %v932
    %v1001 = vunpack.c.l.b16 %v933
    %v1002 = vunpack.c.h.b16 %v933
    %v1003 = vunpack.c.l.b16 %v934
    %v1004 = vunpack.c.h.b16 %v934
    %v1005 = vunpack.c.l.b16 %v935
    %v1006 = vunpack.c.h.b16 %v935
    %v1007 = vunpack.c.l.b16 %v936
    %v1008 = vunpack.c.h.b16 %v936
    %v1009 = vunpack.c.l.b16 %v937
    %v1010 = vunpack.c.h.b16 %v937
    %v1011 = vunpack.c.l.b16 %v938
    %v1012 = vunpack.c.h.b16 %v938
    %v1013 = vunpack.c.l.b16 %v939
    %v1014 = vunpack.c.h.b16 %v939
    %v1015 = vunpack.c.l.b16 %v940
    %v1016 = vunpack.c.h.b16 %v940
    %v1017 = vunpack.c.l.b16 %v941
    %v1018 = vunpack.c.h.b16 %v941
    %v1019 = vunpack.c.l.b16 %v942
    %v1020 = vunpack.c.h.b16 %v942
    %v1021 = vunpack.c.l.b16 %v943
    %v1022 = vunpack.c.h.b16 %v943
    %v1023 = vunpack.c.l.b16 %v944
    %v1024 = vunpack.c.h.b16 %v944
    %v1025 = vunpack.c.l.b16 %v945
    %v1026 = vunpack.c.h.b16 %v945
    %v1027 = vunpack.c.l.b16 %v946
    %v1028 = vunpack.c.h.b16 %v946
    %v1029 = vunpack.c.l.b16 %v947
    %v1030 = vunpack.c.h.b16 %v947
    %v1031 = vunpack.c.l.b16 %v948
    %v1032 = vunpack.c.h.b16 %v948
    %v1033 = vunpack.c.l.b16 %v949
    %v1034 = vunpack.c.h.b16 %v949
    %v1035 = vunpack.c.l.b16 %v950
    %v1036 = vunpack.c.h.b16 %v950
    %v1037 = vunpack.c.l.b16 %v951
    %v1038 = vunpack.c.h.b16 %v951
    %v1039 = vunpack.c.l.b16 %v952
    %v1040 = vunpack.c.h.b16 %v952
    %v1041 = vunpack.c.l.b16 %v953
    %v1042 = vunpack.c.h.b16 %v953
    %v1043 = vunpack.c.l.b16 %v954
    %v1044 = vunpack.c.h.b16 %v954
    %v1045 = vunpack.c.l.b16 %v955
    %v1046 = vunpack.c.h.b16 %v955
    %v1047 = vunpack.c.l.b16 %v956
    %v1048 = vunpack.c.h.b16 %v956
    %v1049 = vunpack.c.l.b16 %v957
    %v1050 = vunpack.c.h.b16 %v957
    %v1051 = vunpack.c.l.b16 %v958
    %v1052 = vunpack.c.h.b16 %v958
    %v1053 = vunpack.c.l.b16 %v959
    %v1054 = vunpack.c.h.b16 %v959
    %v1055 = vunpack.c.l.b16 %v960
    %v1056 = vunpack.c.h.b16 %v960
    %v1057 = vpack.c.b16 %v997, %v993
    %v1058 = vpack.c.b16 %v998, %v994
    %v1059 = vpack.c.b16 %v999, %v995
    %v1060 = vpack.c.b16 %v1000, %v996
    %v1061 = vpack.c.b16 %v1005, %v1001
    %v1062 = vpack.c.b16 %v1006, %v1002
    %v1063 = vpack.c.b16 %v1007, %v1003
    %v1064 = vpack.c.b16 %v1008, %v1004
    %v1065 = vpack.c.b16 %v1013, %v1009
    %v1066 = vpack.c.b16 %v1014, %v1010
    %v1067 = vpack.c.b16 %v1015, %v1011
    %v1068 = vpack.c.b16 %v1016, %v1012
    %v1069 = vpack.c.b16 %v1021, %v1017
    %v1070 = vpack.c.b16 %v1022, %v1018
    %v1071 = vpack.c.b16 %v1023, %v1019
    %v1072 = vpack.c.b16 %v1024, %v1020
    %v1073 = vpack.c.b16 %v1029, %v1025
    %v1074 = vpack.c.b16 %v1030, %v1026
    %v1075 = vpack.c.b16 %v1031, %v1027
    %v1076 = vpack.c.b16 %v1032, %v1028
    %v1077 = vpack.c.b16 %v1037, %v1033
    %v1078 = vpack.c.b16 %v1038, %v1034
    %v1079 = vpack.c.b16 %v1039, %v1035
    %v1080 = vpack.c.b16 %v1040, %v1036
    %v1081 = vpack.c.b16 %v1045, %v1041
    %v1082 = vpack.c.b16 %v1046, %v1042
    %v1083 = vpack.c.b16 %v1047, %v1043
    %v1084 = vpack.c.b16 %v1048, %v1044
    %v1085 = vpack.c.b16 %v1053, %v1049
    %v1086 = vpack.c.b16 %v1054, %v1050
    %v1087 = vpack.c.b16 %v1055, %v1051
    %v1088 = vpack.c.b16 %v1056, %v1052
    %1121 = vmatprep.subr.bf16.mxu0 %v1086
    %1122 = vmatpush1.bf16.msra.mxu0 %v1085
    %1123 = vmatprep.subr.bf16.mxu0 %v1082
    %1124 = vmatpush1.bf16.msra.mxu0 %v1081
    %1125 = vmatprep.subr.bf16.mxu0 %v1078
    %1126 = vmatpush1.bf16.msra.mxu0 %v1077
    %1127 = vmatprep.subr.bf16.mxu0 %v1074
    %1128 = vmatpush1.bf16.msra.mxu0 %v1073
    %1129 = vmatprep.subr.bf16.mxu0 %v1070
    %1130 = vmatpush1.bf16.msra.mxu0 %v1069
    %1131 = vmatprep.subr.bf16.mxu0 %v1066
    %1132 = vmatpush1.bf16.msra.mxu0 %v1065
    %1133 = vmatprep.subr.bf16.mxu0 %v1062
    %1134 = vmatpush1.bf16.msra.mxu0 %v1061
    %1135 = vmatprep.subr.bf16.mxu0 %v1058
    %1136 = vmatpush1.bf16.msra.mxu0 %v1057
    %1137 = vmatprep.subr.bf16.mxu0 0
    %1138 = vmatpush2.bf16.msra.mxu0 0
    %1139 = vmatprep.subr.bf16.mxu0 0
    %1140 = vmatpush2.bf16.msra.mxu0 0
    %1141 = vmatprep.subr.bf16.mxu0 0
    %1142 = vmatpush2.bf16.msra.mxu0 0
    %1143 = vmatprep.subr.bf16.mxu0 0
    %1144 = vmatpush2.bf16.msra.mxu0 0
    %1145 = vmatprep.subr.bf16.mxu0 0
    %1146 = vmatpush2.bf16.msra.mxu0 0
    %1147 = vmatprep.subr.bf16.mxu0 0
    %1148 = vmatpush2.bf16.msra.mxu0 0
    %1149 = vmatprep.subr.bf16.mxu0 0
    %1150 = vmatpush2.bf16.msra.mxu0 0
    %1151 = vmatprep.subr.bf16.mxu0 0
    %1152 = vmatpush2.bf16.msra.mxu0 0
    %1153 = vmatprep.mubr.bf16.mxu0 0
    %1154 = vmatmul.mubr.bf16.gmra.mxu0 %v919
    %v1155 = vpop.f32.mrf.mxu0
    %v1156 = vadd.f32 0.0, %v1155
    %v1157 = vpop.f32.mrf.mxu0
    %v1158 = vadd.f32 0.0, %v1157
    %v1159 = vpop.f32.mrf.mxu0
    %v1160 = vpop.f32.mrf.mxu0
    %1161 = vdwg.mxu0
    %1162 = vmatprep.subr.bf16.mxu0 %v1088
    %1163 = vmatpush1.bf16.msra.mxu0 %v1087
    %1164 = vmatprep.subr.bf16.mxu0 %v1084
    %1165 = vmatpush1.bf16.msra.mxu0 %v1083
    %1166 = vmatprep.subr.bf16.mxu0 %v1080
    %1167 = vmatpush1.bf16.msra.mxu0 %v1079
    %1168 = vmatprep.subr.bf16.mxu0 %v1076
    %1169 = vmatpush1.bf16.msra.mxu0 %v1075
    %1170 = vmatprep.subr.bf16.mxu0 %v1072
    %1171 = vmatpush1.bf16.msra.mxu0 %v1071
    %1172 = vmatprep.subr.bf16.mxu0 %v1068
    %1173 = vmatpush1.bf16.msra.mxu0 %v1067
    %1174 = vmatprep.subr.bf16.mxu0 %v1064
    %1175 = vmatpush1.bf16.msra.mxu0 %v1063
    %1176 = vmatprep.subr.bf16.mxu0 %v1060
    %1177 = vmatpush1.bf16.msra.mxu0 %v1059
    %1178 = vmatprep.subr.bf16.mxu0 0
    %1179 = vmatpush2.bf16.msra.mxu0 0
    %1180 = vmatprep.subr.bf16.mxu0 0
    %1181 = vmatpush2.bf16.msra.mxu0 0
    %1182 = vmatprep.subr.bf16.mxu0 0
    %1183 = vmatpush2.bf16.msra.mxu0 0
    %1184 = vmatprep.subr.bf16.mxu0 0
    %1185 = vmatpush2.bf16.msra.mxu0 0
    %1186 = vmatprep.subr.bf16.mxu0 0
    %1187 = vmatpush2.bf16.msra.mxu0 0
    %1188 = vmatprep.subr.bf16.mxu0 0
    %1189 = vmatpush2.bf16.msra.mxu0 0
    %1190 = vmatprep.subr.bf16.mxu0 0
    %1191 = vmatpush2.bf16.msra.mxu0 0
    %1192 = vmatprep.subr.bf16.mxu0 0
    %1193 = vmatpush2.bf16.msra.mxu0 0
    %1194 = vmatprep.mubr.bf16.mxu0 0
    %1195 = vmatmul.mubr.bf16.gmra.mxu0 %v919
    %v1196 = vpop.f32.mrf.mxu0
    %v1197 = vadd.f32 0.0, %v1196
    %v1198 = vpop.f32.mrf.mxu0
    %v1199 = vadd.f32 0.0, %v1198
    %v1200 = vpop.f32.mrf.mxu0
    %v1201 = vpop.f32.mrf.mxu0
    %1202 = vdwg.mxu0
    %v1203 = vadd.f32 %v925, %v1156
    %v1204 = vadd.f32 %v926, %v1158
    %v1205 = vadd.f32 %v927, %v1197
    %v1206 = vadd.f32 %v928, %v1199
    %v1207 = vxor.u32 %v1203, 2147483648
    %v1208 = vxor.u32 %v1204, 2147483648
    %v1209 = vxor.u32 %v1205, 2147483648
    %v1210 = vmul.f32 %v1207, 1.442695
    %v1211 = vpow.pop %v1210
    %v1212 = vmul.f32 %v1208, 1.442695
    %v1213 = vpow.pop %v1212
    %v1214 = vmul.f32 %v1209, 1.442695
    %v1215 = vpow.pop %v1214
    %v1216 = vadd.f32 %v1211, 1.0
    %v1217 = vadd.f32 %v1213, 1.0
    %v1218 = vadd.f32 %v1215, 1.0
    %v1219 = vrcp.pop %v1216
    %v1220 = vmul.f32 1.0, %v1219
    %v1221 = vrcp.pop %v1217
    %v1222 = vmul.f32 1.0, %v1221
    %v1223 = vrcp.pop %v1218
    %v1224 = vmul.f32 1.0, %v1223
    %v1225 = vtanh.pop %v1206
    %v1226 = vmul.f32 %v1222, %v916
    %v1227 = vmul.f32 %v1220, %v1225
    %v1228 = vadd.f32 %v1226, %v1227
    %v1229 = vtanh.pop %v1228
    %v1230 = vmul.f32 %v1224, %v1229
    %v1231 = vpack.c.bf16 %v1230, %v1230
    %s1232 = scalar_lea.vmem [#allocation3], 8
    %1233 = vst [vmem:[%s1232] sm:$0xf] %v1231
    %s1234 = smul.u32 3, 4
    %s1235 = smul.addr %s1234, 8
    %s1236 = scalar_lea.vmem [#allocation2], %s1235
    %v1237 = vld [vmem:[%s1236] sm:$0xff]
    %v1238 = vld [vmem:[%s1236 + $0x8] sm:$0xff]
    %v1239 = vld [vmem:[%s1236 + $0x10] sm:$0xff]
    %v1240 = vld [vmem:[%s1236 + $0x18] sm:$0xff]
    %v1241 = vld [vmem:[#allocation4] sm:$0xff]
    %v1242 = vld [vmem:[#allocation4 + $0x8] sm:$0xff]
    %v1243 = vld [vmem:[#allocation4 + $0x10] sm:$0xff]
    %v1244 = vld [vmem:[#allocation4 + $0x18] sm:$0xff]
    %v1245 = vld [vmem:[#allocation4 + $0x20] sm:$0xff]
    %v1246 = vld [vmem:[#allocation4 + $0x28] sm:$0xff]
    %v1247 = vld [vmem:[#allocation4 + $0x30] sm:$0xff]
    %v1248 = vld [vmem:[#allocation4 + $0x38] sm:$0xff]
    %v1249 = vld [vmem:[#allocation4 + $0x40] sm:$0xff]
    %v1250 = vld [vmem:[#allocation4 + $0x48] sm:$0xff]
    %v1251 = vld [vmem:[#allocation4 + $0x50] sm:$0xff]
    %v1252 = vld [vmem:[#allocation4 + $0x58] sm:$0xff]
    %v1253 = vld [vmem:[#allocation4 + $0x60] sm:$0xff]
    %v1254 = vld [vmem:[#allocation4 + $0x68] sm:$0xff]
    %v1255 = vld [vmem:[#allocation4 + $0x70] sm:$0xff]
    %v1256 = vld [vmem:[#allocation4 + $0x78] sm:$0xff]
    %v1257 = vld [vmem:[#allocation4 + $0x80] sm:$0xff]
    %v1258 = vld [vmem:[#allocation4 + $0x88] sm:$0xff]
    %v1259 = vld [vmem:[#allocation4 + $0x90] sm:$0xff]
    %v1260 = vld [vmem:[#allocation4 + $0x98] sm:$0xff]
    %v1261 = vld [vmem:[#allocation4 + $0xa0] sm:$0xff]
    %v1262 = vld [vmem:[#allocation4 + $0xa8] sm:$0xff]
    %v1263 = vld [vmem:[#allocation4 + $0xb0] sm:$0xff]
    %v1264 = vld [vmem:[#allocation4 + $0xb8] sm:$0xff]
    %v1265 = vld [vmem:[#allocation4 + $0xc0] sm:$0xff]
    %v1266 = vld [vmem:[#allocation4 + $0xc8] sm:$0xff]
    %v1267 = vld [vmem:[#allocation4 + $0xd0] sm:$0xff]
    %v1268 = vld [vmem:[#allocation4 + $0xd8] sm:$0xff]
    %v1269 = vld [vmem:[#allocation4 + $0xe0] sm:$0xff]
    %v1270 = vld [vmem:[#allocation4 + $0xe8] sm:$0xff]
    %v1271 = vld [vmem:[#allocation4 + $0xf0] sm:$0xff]
    %v1272 = vld [vmem:[#allocation4 + $0xf8] sm:$0xff]
    %v1305 = vunpack.c.l.b16 %v1241
    %v1306 = vunpack.c.h.b16 %v1241
    %v1307 = vunpack.c.l.b16 %v1242
    %v1308 = vunpack.c.h.b16 %v1242
    %v1309 = vunpack.c.l.b16 %v1243
    %v1310 = vunpack.c.h.b16 %v1243
    %v1311 = vunpack.c.l.b16 %v1244
    %v1312 = vunpack.c.h.b16 %v1244
    %v1313 = vunpack.c.l.b16 %v1245
    %v1314 = vunpack.c.h.b16 %v1245
    %v1315 = vunpack.c.l.b16 %v1246
    %v1316 = vunpack.c.h.b16 %v1246
    %v1317 = vunpack.c.l.b16 %v1247
    %v1318 = vunpack.c.h.b16 %v1247
    %v1319 = vunpack.c.l.b16 %v1248
    %v1320 = vunpack.c.h.b16 %v1248
    %v1321 = vunpack.c.l.b16 %v1249
    %v1322 = vunpack.c.h.b16 %v1249
    %v1323 = vunpack.c.l.b16 %v1250
    %v1324 = vunpack.c.h.b16 %v1250
    %v1325 = vunpack.c.l.b16 %v1251
    %v1326 = vunpack.c.h.b16 %v1251
    %v1327 = vunpack.c.l.b16 %v1252
    %v1328 = vunpack.c.h.b16 %v1252
    %v1329 = vunpack.c.l.b16 %v1253
    %v1330 = vunpack.c.h.b16 %v1253
    %v1331 = vunpack.c.l.b16 %v1254
    %v1332 = vunpack.c.h.b16 %v1254
    %v1333 = vunpack.c.l.b16 %v1255
    %v1334 = vunpack.c.h.b16 %v1255
    %v1335 = vunpack.c.l.b16 %v1256
    %v1336 = vunpack.c.h.b16 %v1256
    %v1337 = vunpack.c.l.b16 %v1257
    %v1338 = vunpack.c.h.b16 %v1257
    %v1339 = vunpack.c.l.b16 %v1258
    %v1340 = vunpack.c.h.b16 %v1258
    %v1341 = vunpack.c.l.b16 %v1259
    %v1342 = vunpack.c.h.b16 %v1259
    %v1343 = vunpack.c.l.b16 %v1260
    %v1344 = vunpack.c.h.b16 %v1260
    %v1345 = vunpack.c.l.b16 %v1261
    %v1346 = vunpack.c.h.b16 %v1261
    %v1347 = vunpack.c.l.b16 %v1262
    %v1348 = vunpack.c.h.b16 %v1262
    %v1349 = vunpack.c.l.b16 %v1263
    %v1350 = vunpack.c.h.b16 %v1263
    %v1351 = vunpack.c.l.b16 %v1264
    %v1352 = vunpack.c.h.b16 %v1264
    %v1353 = vunpack.c.l.b16 %v1265
    %v1354 = vunpack.c.h.b16 %v1265
    %v1355 = vunpack.c.l.b16 %v1266
    %v1356 = vunpack.c.h.b16 %v1266
    %v1357 = vunpack.c.l.b16 %v1267
    %v1358 = vunpack.c.h.b16 %v1267
    %v1359 = vunpack.c.l.b16 %v1268
    %v1360 = vunpack.c.h.b16 %v1268
    %v1361 = vunpack.c.l.b16 %v1269
    %v1362 = vunpack.c.h.b16 %v1269
    %v1363 = vunpack.c.l.b16 %v1270
    %v1364 = vunpack.c.h.b16 %v1270
    %v1365 = vunpack.c.l.b16 %v1271
    %v1366 = vunpack.c.h.b16 %v1271
    %v1367 = vunpack.c.l.b16 %v1272
    %v1368 = vunpack.c.h.b16 %v1272
    %v1369 = vpack.c.b16 %v1309, %v1305
    %v1370 = vpack.c.b16 %v1310, %v1306
    %v1371 = vpack.c.b16 %v1311, %v1307
    %v1372 = vpack.c.b16 %v1312, %v1308
    %v1373 = vpack.c.b16 %v1317, %v1313
    %v1374 = vpack.c.b16 %v1318, %v1314
    %v1375 = vpack.c.b16 %v1319, %v1315
    %v1376 = vpack.c.b16 %v1320, %v1316
    %v1377 = vpack.c.b16 %v1325, %v1321
    %v1378 = vpack.c.b16 %v1326, %v1322
    %v1379 = vpack.c.b16 %v1327, %v1323
    %v1380 = vpack.c.b16 %v1328, %v1324
    %v1381 = vpack.c.b16 %v1333, %v1329
    %v1382 = vpack.c.b16 %v1334, %v1330
    %v1383 = vpack.c.b16 %v1335, %v1331
    %v1384 = vpack.c.b16 %v1336, %v1332
    %v1385 = vpack.c.b16 %v1341, %v1337
    %v1386 = vpack.c.b16 %v1342, %v1338
    %v1387 = vpack.c.b16 %v1343, %v1339
    %v1388 = vpack.c.b16 %v1344, %v1340
    %v1389 = vpack.c.b16 %v1349, %v1345
    %v1390 = vpack.c.b16 %v1350, %v1346
    %v1391 = vpack.c.b16 %v1351, %v1347
    %v1392 = vpack.c.b16 %v1352, %v1348
    %v1393 = vpack.c.b16 %v1357, %v1353
    %v1394 = vpack.c.b16 %v1358, %v1354
    %v1395 = vpack.c.b16 %v1359, %v1355
    %v1396 = vpack.c.b16 %v1360, %v1356
    %v1397 = vpack.c.b16 %v1365, %v1361
    %v1398 = vpack.c.b16 %v1366, %v1362
    %v1399 = vpack.c.b16 %v1367, %v1363
    %v1400 = vpack.c.b16 %v1368, %v1364
    %1433 = vmatprep.subr.bf16.mxu0 %v1398
    %1434 = vmatpush1.bf16.msra.mxu0 %v1397
    %1435 = vmatprep.subr.bf16.mxu0 %v1394
    %1436 = vmatpush1.bf16.msra.mxu0 %v1393
    %1437 = vmatprep.subr.bf16.mxu0 %v1390
    %1438 = vmatpush1.bf16.msra.mxu0 %v1389
    %1439 = vmatprep.subr.bf16.mxu0 %v1386
    %1440 = vmatpush1.bf16.msra.mxu0 %v1385
    %1441 = vmatprep.subr.bf16.mxu0 %v1382
    %1442 = vmatpush1.bf16.msra.mxu0 %v1381
    %1443 = vmatprep.subr.bf16.mxu0 %v1378
    %1444 = vmatpush1.bf16.msra.mxu0 %v1377
    %1445 = vmatprep.subr.bf16.mxu0 %v1374
    %1446 = vmatpush1.bf16.msra.mxu0 %v1373
    %1447 = vmatprep.subr.bf16.mxu0 %v1370
    %1448 = vmatpush1.bf16.msra.mxu0 %v1369
    %1449 = vmatprep.subr.bf16.mxu0 0
    %1450 = vmatpush2.bf16.msra.mxu0 0
    %1451 = vmatprep.subr.bf16.mxu0 0
    %1452 = vmatpush2.bf16.msra.mxu0 0
    %1453 = vmatprep.subr.bf16.mxu0 0
    %1454 = vmatpush2.bf16.msra.mxu0 0
    %1455 = vmatprep.subr.bf16.mxu0 0
    %1456 = vmatpush2.bf16.msra.mxu0 0
    %1457 = vmatprep.subr.bf16.mxu0 0
    %1458 = vmatpush2.bf16.msra.mxu0 0
    %1459 = vmatprep.subr.bf16.mxu0 0
    %1460 = vmatpush2.bf16.msra.mxu0 0
    %1461 = vmatprep.subr.bf16.mxu0 0
    %1462 = vmatpush2.bf16.msra.mxu0 0
    %1463 = vmatprep.subr.bf16.mxu0 0
    %1464 = vmatpush2.bf16.msra.mxu0 0
    %1465 = vmatprep.mubr.bf16.mxu0 0
    %1466 = vmatmul.mubr.bf16.gmra.mxu0 %v1231
    %v1467 = vpop.f32.mrf.mxu0
    %v1468 = vadd.f32 0.0, %v1467
    %v1469 = vpop.f32.mrf.mxu0
    %v1470 = vadd.f32 0.0, %v1469
    %v1471 = vpop.f32.mrf.mxu0
    %v1472 = vpop.f32.mrf.mxu0
    %1473 = vdwg.mxu0
    %1474 = vmatprep.subr.bf16.mxu0 %v1400
    %1475 = vmatpush1.bf16.msra.mxu0 %v1399
    %1476 = vmatprep.subr.bf16.mxu0 %v1396
    %1477 = vmatpush1.bf16.msra.mxu0 %v1395
    %1478 = vmatprep.subr.bf16.mxu0 %v1392
    %1479 = vmatpush1.bf16.msra.mxu0 %v1391
    %1480 = vmatprep.subr.bf16.mxu0 %v1388
    %1481 = vmatpush1.bf16.msra.mxu0 %v1387
    %1482 = vmatprep.subr.bf16.mxu0 %v1384
    %1483 = vmatpush1.bf16.msra.mxu0 %v1383
    %1484 = vmatprep.subr.bf16.mxu0 %v1380
    %1485 = vmatpush1.bf16.msra.mxu0 %v1379
    %1486 = vmatprep.subr.bf16.mxu0 %v1376
    %1487 = vmatpush1.bf16.msra.mxu0 %v1375
    %1488 = vmatprep.subr.bf16.mxu0 %v1372
    %1489 = vmatpush1.bf16.msra.mxu0 %v1371
    %1490 = vmatprep.subr.bf16.mxu0 0
    %1491 = vmatpush2.bf16.msra.mxu0 0
    %1492 = vmatprep.subr.bf16.mxu0 0
    %1493 = vmatpush2.bf16.msra.mxu0 0
    %1494 = vmatprep.subr.bf16.mxu0 0
    %1495 = vmatpush2.bf16.msra.mxu0 0
    %1496 = vmatprep.subr.bf16.mxu0 0
    %1497 = vmatpush2.bf16.msra.mxu0 0
    %1498 = vmatprep.subr.bf16.mxu0 0
    %1499 = vmatpush2.bf16.msra.mxu0 0
    %1500 = vmatprep.subr.bf16.mxu0 0
    %1501 = vmatpush2.bf16.msra.mxu0 0
    %1502 = vmatprep.subr.bf16.mxu0 0
    %1503 = vmatpush2.bf16.msra.mxu0 0
    %1504 = vmatprep.subr.bf16.mxu0 0
    %1505 = vmatpush2.bf16.msra.mxu0 0
    %1506 = vmatprep.mubr.bf16.mxu0 0
    %1507 = vmatmul.mubr.bf16.gmra.mxu0 %v1231
    %v1508 = vpop.f32.mrf.mxu0
    %v1509 = vadd.f32 0.0, %v1508
    %v1510 = vpop.f32.mrf.mxu0
    %v1511 = vadd.f32 0.0, %v1510
    %v1512 = vpop.f32.mrf.mxu0
    %v1513 = vpop.f32.mrf.mxu0
    %1514 = vdwg.mxu0
    %v1515 = vadd.f32 %v1237, %v1468
    %v1516 = vadd.f32 %v1238, %v1470
    %v1517 = vadd.f32 %v1239, %v1509
    %v1518 = vadd.f32 %v1240, %v1511
    %v1519 = vxor.u32 %v1515, 2147483648
    %v1520 = vxor.u32 %v1516, 2147483648
    %v1521 = vxor.u32 %v1517, 2147483648
    %v1522 = vmul.f32 %v1519, 1.442695
    %v1523 = vpow.pop %v1522
    %v1524 = vmul.f32 %v1520, 1.442695
    %v1525 = vpow.pop %v1524
    %v1526 = vmul.f32 %v1521, 1.442695
    %v1527 = vpow.pop %v1526
    %v1528 = vadd.f32 %v1523, 1.0
    %v1529 = vadd.f32 %v1525, 1.0
    %v1530 = vadd.f32 %v1527, 1.0
    %v1531 = vrcp.pop %v1528
    %v1532 = vmul.f32 1.0, %v1531
    %v1533 = vrcp.pop %v1529
    %v1534 = vmul.f32 1.0, %v1533
    %v1535 = vrcp.pop %v1530
    %v1536 = vmul.f32 1.0, %v1535
    %v1537 = vtanh.pop %v1518
    %v1538 = vmul.f32 %v1534, %v1228
    %v1539 = vmul.f32 %v1532, %v1537
    %v1540 = vadd.f32 %v1538, %v1539
    %v1541 = vtanh.pop %v1540
    %v1542 = vmul.f32 %v1536, %v1541
    %v1543 = vpack.c.bf16 %v1542, %v1542
    %s1544 = scalar_lea.vmem [#allocation3], 12
    %1545 = vst [vmem:[%s1544] sm:$0xf] %v1543
    %s1546 = smul.u32 4, 4
    %s1547 = smul.addr %s1546, 8
    %s1548 = scalar_lea.vmem [#allocation2], %s1547
    %v1549 = vld [vmem:[%s1548] sm:$0xff]
    %v1550 = vld [vmem:[%s1548 + $0x8] sm:$0xff]
    %v1551 = vld [vmem:[%s1548 + $0x10] sm:$0xff]
    %v1552 = vld [vmem:[%s1548 + $0x18] sm:$0xff]
    %v1553 = vld [vmem:[#allocation4] sm:$0xff]
    %v1554 = vld [vmem:[#allocation4 + $0x8] sm:$0xff]
    %v1555 = vld [vmem:[#allocation4 + $0x10] sm:$0xff]
    %v1556 = vld [vmem:[#allocation4 + $0x18] sm:$0xff]
    %v1557 = vld [vmem:[#allocation4 + $0x20] sm:$0xff]
    %v1558 = vld [vmem:[#allocation4 + $0x28] sm:$0xff]
    %v1559 = vld [vmem:[#allocation4 + $0x30] sm:$0xff]
    %v1560 = vld [vmem:[#allocation4 + $0x38] sm:$0xff]
    %v1561 = vld [vmem:[#allocation4 + $0x40] sm:$0xff]
    %v1562 = vld [vmem:[#allocation4 + $0x48] sm:$0xff]
    %v1563 = vld [vmem:[#allocation4 + $0x50] sm:$0xff]
    %v1564 = vld [vmem:[#allocation4 + $0x58] sm:$0xff]
    %v1565 = vld [vmem:[#allocation4 + $0x60] sm:$0xff]
    %v1566 = vld [vmem:[#allocation4 + $0x68] sm:$0xff]
    %v1567 = vld [vmem:[#allocation4 + $0x70] sm:$0xff]
    %v1568 = vld [vmem:[#allocation4 + $0x78] sm:$0xff]
    %v1569 = vld [vmem:[#allocation4 + $0x80] sm:$0xff]
    %v1570 = vld [vmem:[#allocation4 + $0x88] sm:$0xff]
    %v1571 = vld [vmem:[#allocation4 + $0x90] sm:$0xff]
    %v1572 = vld [vmem:[#allocation4 + $0x98] sm:$0xff]
    %v1573 = vld [vmem:[#allocation4 + $0xa0] sm:$0xff]
    %v1574 = vld [vmem:[#allocation4 + $0xa8] sm:$0xff]
    %v1575 = vld [vmem:[#allocation4 + $0xb0] sm:$0xff]
    %v1576 = vld [vmem:[#allocation4 + $0xb8] sm:$0xff]
    %v1577 = vld [vmem:[#allocation4 + $0xc0] sm:$0xff]
    %v1578 = vld [vmem:[#allocation4 + $0xc8] sm:$0xff]
    %v1579 = vld [vmem:[#allocation4 + $0xd0] sm:$0xff]
    %v1580 = vld [vmem:[#allocation4 + $0xd8] sm:$0xff]
    %v1581 = vld [vmem:[#allocation4 + $0xe0] sm:$0xff]
    %v1582 = vld [vmem:[#allocation4 + $0xe8] sm:$0xff]
    %v1583 = vld [vmem:[#allocation4 + $0xf0] sm:$0xff]
    %v1584 = vld [vmem:[#allocation4 + $0xf8] sm:$0xff]
    %v1617 = vunpack.c.l.b16 %v1553
    %v1618 = vunpack.c.h.b16 %v1553
    %v1619 = vunpack.c.l.b16 %v1554
    %v1620 = vunpack.c.h.b16 %v1554
    %v1621 = vunpack.c.l.b16 %v1555
    %v1622 = vunpack.c.h.b16 %v1555
    %v1623 = vunpack.c.l.b16 %v1556
    %v1624 = vunpack.c.h.b16 %v1556
    %v1625 = vunpack.c.l.b16 %v1557
    %v1626 = vunpack.c.h.b16 %v1557
    %v1627 = vunpack.c.l.b16 %v1558
    %v1628 = vunpack.c.h.b16 %v1558
    %v1629 = vunpack.c.l.b16 %v1559
    %v1630 = vunpack.c.h.b16 %v1559
    %v1631 = vunpack.c.l.b16 %v1560
    %v1632 = vunpack.c.h.b16 %v1560
    %v1633 = vunpack.c.l.b16 %v1561
    %v1634 = vunpack.c.h.b16 %v1561
    %v1635 = vunpack.c.l.b16 %v1562
    %v1636 = vunpack.c.h.b16 %v1562
    %v1637 = vunpack.c.l.b16 %v1563
    %v1638 = vunpack.c.h.b16 %v1563
    %v1639 = vunpack.c.l.b16 %v1564
    %v1640 = vunpack.c.h.b16 %v1564
    %v1641 = vunpack.c.l.b16 %v1565
    %v1642 = vunpack.c.h.b16 %v1565
    %v1643 = vunpack.c.l.b16 %v1566
    %v1644 = vunpack.c.h.b16 %v1566
    %v1645 = vunpack.c.l.b16 %v1567
    %v1646 = vunpack.c.h.b16 %v1567
    %v1647 = vunpack.c.l.b16 %v1568
    %v1648 = vunpack.c.h.b16 %v1568
    %v1649 = vunpack.c.l.b16 %v1569
    %v1650 = vunpack.c.h.b16 %v1569
    %v1651 = vunpack.c.l.b16 %v1570
    %v1652 = vunpack.c.h.b16 %v1570
    %v1653 = vunpack.c.l.b16 %v1571
    %v1654 = vunpack.c.h.b16 %v1571
    %v1655 = vunpack.c.l.b16 %v1572
    %v1656 = vunpack.c.h.b16 %v1572
    %v1657 = vunpack.c.l.b16 %v1573
    %v1658 = vunpack.c.h.b16 %v1573
    %v1659 = vunpack.c.l.b16 %v1574
    %v1660 = vunpack.c.h.b16 %v1574
    %v1661 = vunpack.c.l.b16 %v1575
    %v1662 = vunpack.c.h.b16 %v1575
    %v1663 = vunpack.c.l.b16 %v1576
    %v1664 = vunpack.c.h.b16 %v1576
    %v1665 = vunpack.c.l.b16 %v1577
    %v1666 = vunpack.c.h.b16 %v1577
    %v1667 = vunpack.c.l.b16 %v1578
    %v1668 = vunpack.c.h.b16 %v1578
    %v1669 = vunpack.c.l.b16 %v1579
    %v1670 = vunpack.c.h.b16 %v1579
    %v1671 = vunpack.c.l.b16 %v1580
    %v1672 = vunpack.c.h.b16 %v1580
    %v1673 = vunpack.c.l.b16 %v1581
    %v1674 = vunpack.c.h.b16 %v1581
    %v1675 = vunpack.c.l.b16 %v1582
    %v1676 = vunpack.c.h.b16 %v1582
    %v1677 = vunpack.c.l.b16 %v1583
    %v1678 = vunpack.c.h.b16 %v1583
    %v1679 = vunpack.c.l.b16 %v1584
    %v1680 = vunpack.c.h.b16 %v1584
    %v1681 = vpack.c.b16 %v1621, %v1617
    %v1682 = vpack.c.b16 %v1622, %v1618
    %v1683 = vpack.c.b16 %v1623, %v1619
    %v1684 = vpack.c.b16 %v1624, %v1620
    %v1685 = vpack.c.b16 %v1629, %v1625
    %v1686 = vpack.c.b16 %v1630, %v1626
    %v1687 = vpack.c.b16 %v1631, %v1627
    %v1688 = vpack.c.b16 %v1632, %v1628
    %v1689 = vpack.c.b16 %v1637, %v1633
    %v1690 = vpack.c.b16 %v1638, %v1634
    %v1691 = vpack.c.b16 %v1639, %v1635
    %v1692 = vpack.c.b16 %v1640, %v1636
    %v1693 = vpack.c.b16 %v1645, %v1641
    %v1694 = vpack.c.b16 %v1646, %v1642
    %v1695 = vpack.c.b16 %v1647, %v1643
    %v1696 = vpack.c.b16 %v1648, %v1644
    %v1697 = vpack.c.b16 %v1653, %v1649
    %v1698 = vpack.c.b16 %v1654, %v1650
    %v1699 = vpack.c.b16 %v1655, %v1651
    %v1700 = vpack.c.b16 %v1656, %v1652
    %v1701 = vpack.c.b16 %v1661, %v1657
    %v1702 = vpack.c.b16 %v1662, %v1658
    %v1703 = vpack.c.b16 %v1663, %v1659
    %v1704 = vpack.c.b16 %v1664, %v1660
    %v1705 = vpack.c.b16 %v1669, %v1665
    %v1706 = vpack.c.b16 %v1670, %v1666
    %v1707 = vpack.c.b16 %v1671, %v1667
    %v1708 = vpack.c.b16 %v1672, %v1668
    %v1709 = vpack.c.b16 %v1677, %v1673
    %v1710 = vpack.c.b16 %v1678, %v1674
    %v1711 = vpack.c.b16 %v1679, %v1675
    %v1712 = vpack.c.b16 %v1680, %v1676
    %1745 = vmatprep.subr.bf16.mxu0 %v1710
    %1746 = vmatpush1.bf16.msra.mxu0 %v1709
    %1747 = vmatprep.subr.bf16.mxu0 %v1706
    %1748 = vmatpush1.bf16.msra.mxu0 %v1705
    %1749 = vmatprep.subr.bf16.mxu0 %v1702
    %1750 = vmatpush1.bf16.msra.mxu0 %v1701
    %1751 = vmatprep.subr.bf16.mxu0 %v1698
    %1752 = vmatpush1.bf16.msra.mxu0 %v1697
    %1753 = vmatprep.subr.bf16.mxu0 %v1694
    %1754 = vmatpush1.bf16.msra.mxu0 %v1693
    %1755 = vmatprep.subr.bf16.mxu0 %v1690
    %1756 = vmatpush1.bf16.msra.mxu0 %v1689
    %1757 = vmatprep.subr.bf16.mxu0 %v1686
    %1758 = vmatpush1.bf16.msra.mxu0 %v1685
    %1759 = vmatprep.subr.bf16.mxu0 %v1682
    %1760 = vmatpush1.bf16.msra.mxu0 %v1681
    %1761 = vmatprep.subr.bf16.mxu0 0
    %1762 = vmatpush2.bf16.msra.mxu0 0
    %1763 = vmatprep.subr.bf16.mxu0 0
    %1764 = vmatpush2.bf16.msra.mxu0 0
    %1765 = vmatprep.subr.bf16.mxu0 0
    %1766 = vmatpush2.bf16.msra.mxu0 0
    %1767 = vmatprep.subr.bf16.mxu0 0
    %1768 = vmatpush2.bf16.msra.mxu0 0
    %1769 = vmatprep.subr.bf16.mxu0 0
    %1770 = vmatpush2.bf16.msra.mxu0 0
    %1771 = vmatprep.subr.bf16.mxu0 0
    %1772 = vmatpush2.bf16.msra.mxu0 0
    %1773 = vmatprep.subr.bf16.mxu0 0
    %1774 = vmatpush2.bf16.msra.mxu0 0
    %1775 = vmatprep.subr.bf16.mxu0 0
    %1776 = vmatpush2.bf16.msra.mxu0 0
    %1777 = vmatprep.mubr.bf16.mxu0 0
    %1778 = vmatmul.mubr.bf16.gmra.mxu0 %v1543
    %v1779 = vpop.f32.mrf.mxu0
    %v1780 = vadd.f32 0.0, %v1779
    %v1781 = vpop.f32.mrf.mxu0
    %v1782 = vadd.f32 0.0, %v1781
    %v1783 = vpop.f32.mrf.mxu0
    %v1784 = vpop.f32.mrf.mxu0
    %1785 = vdwg.mxu0
    %1786 = vmatprep.subr.bf16.mxu0 %v1712
    %1787 = vmatpush1.bf16.msra.mxu0 %v1711
    %1788 = vmatprep.subr.bf16.mxu0 %v1708
    %1789 = vmatpush1.bf16.msra.mxu0 %v1707
    %1790 = vmatprep.subr.bf16.mxu0 %v1704
    %1791 = vmatpush1.bf16.msra.mxu0 %v1703
    %1792 = vmatprep.subr.bf16.mxu0 %v1700
    %1793 = vmatpush1.bf16.msra.mxu0 %v1699
    %1794 = vmatprep.subr.bf16.mxu0 %v1696
    %1795 = vmatpush1.bf16.msra.mxu0 %v1695
    %1796 = vmatprep.subr.bf16.mxu0 %v1692
    %1797 = vmatpush1.bf16.msra.mxu0 %v1691
    %1798 = vmatprep.subr.bf16.mxu0 %v1688
    %1799 = vmatpush1.bf16.msra.mxu0 %v1687
    %1800 = vmatprep.subr.bf16.mxu0 %v1684
    %1801 = vmatpush1.bf16.msra.mxu0 %v1683
    %1802 = vmatprep.subr.bf16.mxu0 0
    %1803 = vmatpush2.bf16.msra.mxu0 0
    %1804 = vmatprep.subr.bf16.mxu0 0
    %1805 = vmatpush2.bf16.msra.mxu0 0
    %1806 = vmatprep.subr.bf16.mxu0 0
    %1807 = vmatpush2.bf16.msra.mxu0 0
    %1808 = vmatprep.subr.bf16.mxu0 0
    %1809 = vmatpush2.bf16.msra.mxu0 0
    %1810 = vmatprep.subr.bf16.mxu0 0
    %1811 = vmatpush2.bf16.msra.mxu0 0
    %1812 = vmatprep.subr.bf16.mxu0 0
    %1813 = vmatpush2.bf16.msra.mxu0 0
    %1814 = vmatprep.subr.bf16.mxu0 0
    %1815 = vmatpush2.bf16.msra.mxu0 0
    %1816 = vmatprep.subr.bf16.mxu0 0
    %1817 = vmatpush2.bf16.msra.mxu0 0
    %1818 = vmatprep.mubr.bf16.mxu0 0
    %1819 = vmatmul.mubr.bf16.gmra.mxu0 %v1543
    %v1820 = vpop.f32.mrf.mxu0
    %v1821 = vadd.f32 0.0, %v1820
    %v1822 = vpop.f32.mrf.mxu0
    %v1823 = vadd.f32 0.0, %v1822
    %v1824 = vpop.f32.mrf.mxu0
    %v1825 = vpop.f32.mrf.mxu0
    %1826 = vdwg.mxu0
    %v1827 = vadd.f32 %v1549, %v1780
    %v1828 = vadd.f32 %v1550, %v1782
    %v1829 = vadd.f32 %v1551, %v1821
    %v1830 = vadd.f32 %v1552, %v1823
    %v1831 = vxor.u32 %v1827, 2147483648
    %v1832 = vxor.u32 %v1828, 2147483648
    %v1833 = vxor.u32 %v1829, 2147483648
    %v1834 = vmul.f32 %v1831, 1.442695
    %v1835 = vpow.pop %v1834
    %v1836 = vmul.f32 %v1832, 1.442695
    %v1837 = vpow.pop %v1836
    %v1838 = vmul.f32 %v1833, 1.442695
    %v1839 = vpow.pop %v1838
    %v1840 = vadd.f32 %v1835, 1.0
    %v1841 = vadd.f32 %v1837, 1.0
    %v1842 = vadd.f32 %v1839, 1.0
    %v1843 = vrcp.pop %v1840
    %v1844 = vmul.f32 1.0, %v1843
    %v1845 = vrcp.pop %v1841
    %v1846 = vmul.f32 1.0, %v1845
    %v1847 = vrcp.pop %v1842
    %v1848 = vmul.f32 1.0, %v1847
    %v1849 = vtanh.pop %v1830
    %v1850 = vmul.f32 %v1846, %v1540
    %v1851 = vmul.f32 %v1844, %v1849
    %v1852 = vadd.f32 %v1850, %v1851
    %v1853 = vtanh.pop %v1852
    %v1854 = vmul.f32 %v1848, %v1853
    %v1855 = vpack.c.bf16 %v1854, %v1854
    %s1856 = scalar_lea.vmem [#allocation3], 16
    %1857 = vst [vmem:[%s1856] sm:$0xf] %v1855
    %s1858 = smul.u32 5, 4
    %s1859 = smul.addr %s1858, 8
    %s1860 = scalar_lea.vmem [#allocation2], %s1859
    %v1861 = vld [vmem:[%s1860] sm:$0xff]
    %v1862 = vld [vmem:[%s1860 + $0x8] sm:$0xff]
    %v1863 = vld [vmem:[%s1860 + $0x10] sm:$0xff]
    %v1864 = vld [vmem:[%s1860 + $0x18] sm:$0xff]
    %v1865 = vld [vmem:[#allocation4] sm:$0xff]
    %v1866 = vld [vmem:[#allocation4 + $0x8] sm:$0xff]
    %v1867 = vld [vmem:[#allocation4 + $0x10] sm:$0xff]
    %v1868 = vld [vmem:[#allocation4 + $0x18] sm:$0xff]
    %v1869 = vld [vmem:[#allocation4 + $0x20] sm:$0xff]
    %v1870 = vld [vmem:[#allocation4 + $0x28] sm:$0xff]
    %v1871 = vld [vmem:[#allocation4 + $0x30] sm:$0xff]
    %v1872 = vld [vmem:[#allocation4 + $0x38] sm:$0xff]
    %v1873 = vld [vmem:[#allocation4 + $0x40] sm:$0xff]
    %v1874 = vld [vmem:[#allocation4 + $0x48] sm:$0xff]
    %v1875 = vld [vmem:[#allocation4 + $0x50] sm:$0xff]
    %v1876 = vld [vmem:[#allocation4 + $0x58] sm:$0xff]
    %v1877 = vld [vmem:[#allocation4 + $0x60] sm:$0xff]
    %v1878 = vld [vmem:[#allocation4 + $0x68] sm:$0xff]
    %v1879 = vld [vmem:[#allocation4 + $0x70] sm:$0xff]
    %v1880 = vld [vmem:[#allocation4 + $0x78] sm:$0xff]
    %v1881 = vld [vmem:[#allocation4 + $0x80] sm:$0xff]
    %v1882 = vld [vmem:[#allocation4 + $0x88] sm:$0xff]
    %v1883 = vld [vmem:[#allocation4 + $0x90] sm:$0xff]
    %v1884 = vld [vmem:[#allocation4 + $0x98] sm:$0xff]
    %v1885 = vld [vmem:[#allocation4 + $0xa0] sm:$0xff]
    %v1886 = vld [vmem:[#allocation4 + $0xa8] sm:$0xff]
    %v1887 = vld [vmem:[#allocation4 + $0xb0] sm:$0xff]
    %v1888 = vld [vmem:[#allocation4 + $0xb8] sm:$0xff]
    %v1889 = vld [vmem:[#allocation4 + $0xc0] sm:$0xff]
    %v1890 = vld [vmem:[#allocation4 + $0xc8] sm:$0xff]
    %v1891 = vld [vmem:[#allocation4 + $0xd0] sm:$0xff]
    %v1892 = vld [vmem:[#allocation4 + $0xd8] sm:$0xff]
    %v1893 = vld [vmem:[#allocation4 + $0xe0] sm:$0xff]
    %v1894 = vld [vmem:[#allocation4 + $0xe8] sm:$0xff]
    %v1895 = vld [vmem:[#allocation4 + $0xf0] sm:$0xff]
    %v1896 = vld [vmem:[#allocation4 + $0xf8] sm:$0xff]
    %v1929 = vunpack.c.l.b16 %v1865
    %v1930 = vunpack.c.h.b16 %v1865
    %v1931 = vunpack.c.l.b16 %v1866
    %v1932 = vunpack.c.h.b16 %v1866
    %v1933 = vunpack.c.l.b16 %v1867
    %v1934 = vunpack.c.h.b16 %v1867
    %v1935 = vunpack.c.l.b16 %v1868
    %v1936 = vunpack.c.h.b16 %v1868
    %v1937 = vunpack.c.l.b16 %v1869
    %v1938 = vunpack.c.h.b16 %v1869
    %v1939 = vunpack.c.l.b16 %v1870
    %v1940 = vunpack.c.h.b16 %v1870
    %v1941 = vunpack.c.l.b16 %v1871
    %v1942 = vunpack.c.h.b16 %v1871
    %v1943 = vunpack.c.l.b16 %v1872
    %v1944 = vunpack.c.h.b16 %v1872
    %v1945 = vunpack.c.l.b16 %v1873
    %v1946 = vunpack.c.h.b16 %v1873
    %v1947 = vunpack.c.l.b16 %v1874
    %v1948 = vunpack.c.h.b16 %v1874
    %v1949 = vunpack.c.l.b16 %v1875
    %v1950 = vunpack.c.h.b16 %v1875
    %v1951 = vunpack.c.l.b16 %v1876
    %v1952 = vunpack.c.h.b16 %v1876
    %v1953 = vunpack.c.l.b16 %v1877
    %v1954 = vunpack.c.h.b16 %v1877
    %v1955 = vunpack.c.l.b16 %v1878
    %v1956 = vunpack.c.h.b16 %v1878
    %v1957 = vunpack.c.l.b16 %v1879
    %v1958 = vunpack.c.h.b16 %v1879
    %v1959 = vunpack.c.l.b16 %v1880
    %v1960 = vunpack.c.h.b16 %v1880
    %v1961 = vunpack.c.l.b16 %v1881
    %v1962 = vunpack.c.h.b16 %v1881
    %v1963 = vunpack.c.l.b16 %v1882
    %v1964 = vunpack.c.h.b16 %v1882
    %v1965 = vunpack.c.l.b16 %v1883
    %v1966 = vunpack.c.h.b16 %v1883
    %v1967 = vunpack.c.l.b16 %v1884
    %v1968 = vunpack.c.h.b16 %v1884
    %v1969 = vunpack.c.l.b16 %v1885
    %v1970 = vunpack.c.h.b16 %v1885
    %v1971 = vunpack.c.l.b16 %v1886
    %v1972 = vunpack.c.h.b16 %v1886
    %v1973 = vunpack.c.l.b16 %v1887
    %v1974 = vunpack.c.h.b16 %v1887
    %v1975 = vunpack.c.l.b16 %v1888
    %v1976 = vunpack.c.h.b16 %v1888
    %v1977 = vunpack.c.l.b16 %v1889
    %v1978 = vunpack.c.h.b16 %v1889
    %v1979 = vunpack.c.l.b16 %v1890
    %v1980 = vunpack.c.h.b16 %v1890
    %v1981 = vunpack.c.l.b16 %v1891
    %v1982 = vunpack.c.h.b16 %v1891
    %v1983 = vunpack.c.l.b16 %v1892
    %v1984 = vunpack.c.h.b16 %v1892
    %v1985 = vunpack.c.l.b16 %v1893
    %v1986 = vunpack.c.h.b16 %v1893
    %v1987 = vunpack.c.l.b16 %v1894
    %v1988 = vunpack.c.h.b16 %v1894
    %v1989 = vunpack.c.l.b16 %v1895
    %v1990 = vunpack.c.h.b16 %v1895
    %v1991 = vunpack.c.l.b16 %v1896
    %v1992 = vunpack.c.h.b16 %v1896
    %v1993 = vpack.c.b16 %v1933, %v1929
    %v1994 = vpack.c.b16 %v1934, %v1930
    %v1995 = vpack.c.b16 %v1935, %v1931
    %v1996 = vpack.c.b16 %v1936, %v1932
    %v1997 = vpack.c.b16 %v1941, %v1937
    %v1998 = vpack.c.b16 %v1942, %v1938
    %v1999 = vpack.c.b16 %v1943, %v1939
    %v2000 = vpack.c.b16 %v1944, %v1940
    %v2001 = vpack.c.b16 %v1949, %v1945
    %v2002 = vpack.c.b16 %v1950, %v1946
    %v2003 = vpack.c.b16 %v1951, %v1947
    %v2004 = vpack.c.b16 %v1952, %v1948
    %v2005 = vpack.c.b16 %v1957, %v1953
    %v2006 = vpack.c.b16 %v1958, %v1954
    %v2007 = vpack.c.b16 %v1959, %v1955
    %v2008 = vpack.c.b16 %v1960, %v1956
    %v2009 = vpack.c.b16 %v1965, %v1961
    %v2010 = vpack.c.b16 %v1966, %v1962
    %v2011 = vpack.c.b16 %v1967, %v1963
    %v2012 = vpack.c.b16 %v1968, %v1964
    %v2013 = vpack.c.b16 %v1973, %v1969
    %v2014 = vpack.c.b16 %v1974, %v1970
    %v2015 = vpack.c.b16 %v1975, %v1971
    %v2016 = vpack.c.b16 %v1976, %v1972
    %v2017 = vpack.c.b16 %v1981, %v1977
    %v2018 = vpack.c.b16 %v1982, %v1978
    %v2019 = vpack.c.b16 %v1983, %v1979
    %v2020 = vpack.c.b16 %v1984, %v1980
    %v2021 = vpack.c.b16 %v1989, %v1985
    %v2022 = vpack.c.b16 %v1990, %v1986
    %v2023 = vpack.c.b16 %v1991, %v1987
    %v2024 = vpack.c.b16 %v1992, %v1988
    %2057 = vmatprep.subr.bf16.mxu0 %v2022
    %2058 = vmatpush1.bf16.msra.mxu0 %v2021
    %2059 = vmatprep.subr.bf16.mxu0 %v2018
    %2060 = vmatpush1.bf16.msra.mxu0 %v2017
    %2061 = vmatprep.subr.bf16.mxu0 %v2014
    %2062 = vmatpush1.bf16.msra.mxu0 %v2013
    %2063 = vmatprep.subr.bf16.mxu0 %v2010
    %2064 = vmatpush1.bf16.msra.mxu0 %v2009
    %2065 = vmatprep.subr.bf16.mxu0 %v2006
    %2066 = vmatpush1.bf16.msra.mxu0 %v2005
    %2067 = vmatprep.subr.bf16.mxu0 %v2002
    %2068 = vmatpush1.bf16.msra.mxu0 %v2001
    %2069 = vmatprep.subr.bf16.mxu0 %v1998
    %2070 = vmatpush1.bf16.msra.mxu0 %v1997
    %2071 = vmatprep.subr.bf16.mxu0 %v1994
    %2072 = vmatpush1.bf16.msra.mxu0 %v1993
    %2073 = vmatprep.subr.bf16.mxu0 0
    %2074 = vmatpush2.bf16.msra.mxu0 0
    %2075 = vmatprep.subr.bf16.mxu0 0
    %2076 = vmatpush2.bf16.msra.mxu0 0
    %2077 = vmatprep.subr.bf16.mxu0 0
    %2078 = vmatpush2.bf16.msra.mxu0 0
    %2079 = vmatprep.subr.bf16.mxu0 0
    %2080 = vmatpush2.bf16.msra.mxu0 0
    %2081 = vmatprep.subr.bf16.mxu0 0
    %2082 = vmatpush2.bf16.msra.mxu0 0
    %2083 = vmatprep.subr.bf16.mxu0 0
    %2084 = vmatpush2.bf16.msra.mxu0 0
    %2085 = vmatprep.subr.bf16.mxu0 0
    %2086 = vmatpush2.bf16.msra.mxu0 0
    %2087 = vmatprep.subr.bf16.mxu0 0
    %2088 = vmatpush2.bf16.msra.mxu0 0
    %2089 = vmatprep.mubr.bf16.mxu0 0
    %2090 = vmatmul.mubr.bf16.gmra.mxu0 %v1855
    %v2091 = vpop.f32.mrf.mxu0
    %v2092 = vadd.f32 0.0, %v2091
    %v2093 = vpop.f32.mrf.mxu0
    %v2094 = vadd.f32 0.0, %v2093
    %v2095 = vpop.f32.mrf.mxu0
    %v2096 = vpop.f32.mrf.mxu0
    %2097 = vdwg.mxu0
    %2098 = vmatprep.subr.bf16.mxu0 %v2024
    %2099 = vmatpush1.bf16.msra.mxu0 %v2023
    %2100 = vmatprep.subr.bf16.mxu0 %v2020
    %2101 = vmatpush1.bf16.msra.mxu0 %v2019
    %2102 = vmatprep.subr.bf16.mxu0 %v2016
    %2103 = vmatpush1.bf16.msra.mxu0 %v2015
    %2104 = vmatprep.subr.bf16.mxu0 %v2012
    %2105 = vmatpush1.bf16.msra.mxu0 %v2011
    %2106 = vmatprep.subr.bf16.mxu0 %v2008
    %2107 = vmatpush1.bf16.msra.mxu0 %v2007
    %2108 = vmatprep.subr.bf16.mxu0 %v2004
    %2109 = vmatpush1.bf16.msra.mxu0 %v2003
    %2110 = vmatprep.subr.bf16.mxu0 %v2000
    %2111 = vmatpush1.bf16.msra.mxu0 %v1999
    %2112 = vmatprep.subr.bf16.mxu0 %v1996
    %2113 = vmatpush1.bf16.msra.mxu0 %v1995
    %2114 = vmatprep.subr.bf16.mxu0 0
    %2115 = vmatpush2.bf16.msra.mxu0 0
    %2116 = vmatprep.subr.bf16.mxu0 0
    %2117 = vmatpush2.bf16.msra.mxu0 0
    %2118 = vmatprep.subr.bf16.mxu0 0
    %2119 = vmatpush2.bf16.msra.mxu0 0
    %2120 = vmatprep.subr.bf16.mxu0 0
    %2121 = vmatpush2.bf16.msra.mxu0 0
    %2122 = vmatprep.subr.bf16.mxu0 0
    %2123 = vmatpush2.bf16.msra.mxu0 0
    %2124 = vmatprep.subr.bf16.mxu0 0
    %2125 = vmatpush2.bf16.msra.mxu0 0
    %2126 = vmatprep.subr.bf16.mxu0 0
    %2127 = vmatpush2.bf16.msra.mxu0 0
    %2128 = vmatprep.subr.bf16.mxu0 0
    %2129 = vmatpush2.bf16.msra.mxu0 0
    %2130 = vmatprep.mubr.bf16.mxu0 0
    %2131 = vmatmul.mubr.bf16.gmra.mxu0 %v1855
    %v2132 = vpop.f32.mrf.mxu0
    %v2133 = vadd.f32 0.0, %v2132
    %v2134 = vpop.f32.mrf.mxu0
    %v2135 = vadd.f32 0.0, %v2134
    %v2136 = vpop.f32.mrf.mxu0
    %v2137 = vpop.f32.mrf.mxu0
    %2138 = vdwg.mxu0
    %v2139 = vadd.f32 %v1861, %v2092
    %v2140 = vadd.f32 %v1862, %v2094
    %v2141 = vadd.f32 %v1863, %v2133
    %v2142 = vadd.f32 %v1864, %v2135
    %v2143 = vxor.u32 %v2139, 2147483648
    %v2144 = vxor.u32 %v2140, 2147483648
    %v2145 = vxor.u32 %v2141, 2147483648
    %v2146 = vmul.f32 %v2143, 1.442695
    %v2147 = vpow.pop %v2146
    %v2148 = vmul.f32 %v2144, 1.442695
    %v2149 = vpow.pop %v2148
    %v2150 = vmul.f32 %v2145, 1.442695
    %v2151 = vpow.pop %v2150
    %v2152 = vadd.f32 %v2147, 1.0
    %v2153 = vadd.f32 %v2149, 1.0
    %v2154 = vadd.f32 %v2151, 1.0
    %v2155 = vrcp.pop %v2152
    %v2156 = vmul.f32 1.0, %v2155
    %v2157 = vrcp.pop %v2153
    %v2158 = vmul.f32 1.0, %v2157
    %v2159 = vrcp.pop %v2154
    %v2160 = vmul.f32 1.0, %v2159
    %v2161 = vtanh.pop %v2142
    %v2162 = vmul.f32 %v2158, %v1852
    %v2163 = vmul.f32 %v2156, %v2161
    %v2164 = vadd.f32 %v2162, %v2163
    %v2165 = vtanh.pop %v2164
    %v2166 = vmul.f32 %v2160, %v2165
    %v2167 = vpack.c.bf16 %v2166, %v2166
    %s2168 = scalar_lea.vmem [#allocation3], 20
    %2169 = vst [vmem:[%s2168] sm:$0xf] %v2167
    %s2170 = smul.u32 6, 4
    %s2171 = smul.addr %s2170, 8
    %s2172 = scalar_lea.vmem [#allocation2], %s2171
    %v2173 = vld [vmem:[%s2172] sm:$0xff]
    %v2174 = vld [vmem:[%s2172 + $0x8] sm:$0xff]
    %v2175 = vld [vmem:[%s2172 + $0x10] sm:$0xff]
    %v2176 = vld [vmem:[%s2172 + $0x18] sm:$0xff]
    %v2177 = vld [vmem:[#allocation4] sm:$0xff]
    %v2178 = vld [vmem:[#allocation4 + $0x8] sm:$0xff]
    %v2179 = vld [vmem:[#allocation4 + $0x10] sm:$0xff]
    %v2180 = vld [vmem:[#allocation4 + $0x18] sm:$0xff]
    %v2181 = vld [vmem:[#allocation4 + $0x20] sm:$0xff]
    %v2182 = vld [vmem:[#allocation4 + $0x28] sm:$0xff]
    %v2183 = vld [vmem:[#allocation4 + $0x30] sm:$0xff]
    %v2184 = vld [vmem:[#allocation4 + $0x38] sm:$0xff]
    %v2185 = vld [vmem:[#allocation4 + $0x40] sm:$0xff]
    %v2186 = vld [vmem:[#allocation4 + $0x48] sm:$0xff]
    %v2187 = vld [vmem:[#allocation4 + $0x50] sm:$0xff]
    %v2188 = vld [vmem:[#allocation4 + $0x58] sm:$0xff]
    %v2189 = vld [vmem:[#allocation4 + $0x60] sm:$0xff]
    %v2190 = vld [vmem:[#allocation4 + $0x68] sm:$0xff]
    %v2191 = vld [vmem:[#allocation4 + $0x70] sm:$0xff]
    %v2192 = vld [vmem:[#allocation4 + $0x78] sm:$0xff]
    %v2193 = vld [vmem:[#allocation4 + $0x80] sm:$0xff]
    %v2194 = vld [vmem:[#allocation4 + $0x88] sm:$0xff]
    %v2195 = vld [vmem:[#allocation4 + $0x90] sm:$0xff]
    %v2196 = vld [vmem:[#allocation4 + $0x98] sm:$0xff]
    %v2197 = vld [vmem:[#allocation4 + $0xa0] sm:$0xff]
    %v2198 = vld [vmem:[#allocation4 + $0xa8] sm:$0xff]
    %v2199 = vld [vmem:[#allocation4 + $0xb0] sm:$0xff]
    %v2200 = vld [vmem:[#allocation4 + $0xb8] sm:$0xff]
    %v2201 = vld [vmem:[#allocation4 + $0xc0] sm:$0xff]
    %v2202 = vld [vmem:[#allocation4 + $0xc8] sm:$0xff]
    %v2203 = vld [vmem:[#allocation4 + $0xd0] sm:$0xff]
    %v2204 = vld [vmem:[#allocation4 + $0xd8] sm:$0xff]
    %v2205 = vld [vmem:[#allocation4 + $0xe0] sm:$0xff]
    %v2206 = vld [vmem:[#allocation4 + $0xe8] sm:$0xff]
    %v2207 = vld [vmem:[#allocation4 + $0xf0] sm:$0xff]
    %v2208 = vld [vmem:[#allocation4 + $0xf8] sm:$0xff]
    %v2241 = vunpack.c.l.b16 %v2177
    %v2242 = vunpack.c.h.b16 %v2177
    %v2243 = vunpack.c.l.b16 %v2178
    %v2244 = vunpack.c.h.b16 %v2178
    %v2245 = vunpack.c.l.b16 %v2179
    %v2246 = vunpack.c.h.b16 %v2179
    %v2247 = vunpack.c.l.b16 %v2180
    %v2248 = vunpack.c.h.b16 %v2180
    %v2249 = vunpack.c.l.b16 %v2181
    %v2250 = vunpack.c.h.b16 %v2181
    %v2251 = vunpack.c.l.b16 %v2182
    %v2252 = vunpack.c.h.b16 %v2182
    %v2253 = vunpack.c.l.b16 %v2183
    %v2254 = vunpack.c.h.b16 %v2183
    %v2255 = vunpack.c.l.b16 %v2184
    %v2256 = vunpack.c.h.b16 %v2184
    %v2257 = vunpack.c.l.b16 %v2185
    %v2258 = vunpack.c.h.b16 %v2185
    %v2259 = vunpack.c.l.b16 %v2186
    %v2260 = vunpack.c.h.b16 %v2186
    %v2261 = vunpack.c.l.b16 %v2187
    %v2262 = vunpack.c.h.b16 %v2187
    %v2263 = vunpack.c.l.b16 %v2188
    %v2264 = vunpack.c.h.b16 %v2188
    %v2265 = vunpack.c.l.b16 %v2189
    %v2266 = vunpack.c.h.b16 %v2189
    %v2267 = vunpack.c.l.b16 %v2190
    %v2268 = vunpack.c.h.b16 %v2190
    %v2269 = vunpack.c.l.b16 %v2191
    %v2270 = vunpack.c.h.b16 %v2191
    %v2271 = vunpack.c.l.b16 %v2192
    %v2272 = vunpack.c.h.b16 %v2192
    %v2273 = vunpack.c.l.b16 %v2193
    %v2274 = vunpack.c.h.b16 %v2193
    %v2275 = vunpack.c.l.b16 %v2194
    %v2276 = vunpack.c.h.b16 %v2194
    %v2277 = vunpack.c.l.b16 %v2195
    %v2278 = vunpack.c.h.b16 %v2195
    %v2279 = vunpack.c.l.b16 %v2196
    %v2280 = vunpack.c.h.b16 %v2196
    %v2281 = vunpack.c.l.b16 %v2197
    %v2282 = vunpack.c.h.b16 %v2197
    %v2283 = vunpack.c.l.b16 %v2198
    %v2284 = vunpack.c.h.b16 %v2198
    %v2285 = vunpack.c.l.b16 %v2199
    %v2286 = vunpack.c.h.b16 %v2199
    %v2287 = vunpack.c.l.b16 %v2200
    %v2288 = vunpack.c.h.b16 %v2200
    %v2289 = vunpack.c.l.b16 %v2201
    %v2290 = vunpack.c.h.b16 %v2201
    %v2291 = vunpack.c.l.b16 %v2202
    %v2292 = vunpack.c.h.b16 %v2202
    %v2293 = vunpack.c.l.b16 %v2203
    %v2294 = vunpack.c.h.b16 %v2203
    %v2295 = vunpack.c.l.b16 %v2204
    %v2296 = vunpack.c.h.b16 %v2204
    %v2297 = vunpack.c.l.b16 %v2205
    %v2298 = vunpack.c.h.b16 %v2205
    %v2299 = vunpack.c.l.b16 %v2206
    %v2300 = vunpack.c.h.b16 %v2206
    %v2301 = vunpack.c.l.b16 %v2207
    %v2302 = vunpack.c.h.b16 %v2207
    %v2303 = vunpack.c.l.b16 %v2208
    %v2304 = vunpack.c.h.b16 %v2208
    %v2305 = vpack.c.b16 %v2245, %v2241
    %v2306 = vpack.c.b16 %v2246, %v2242
    %v2307 = vpack.c.b16 %v2247, %v2243
    %v2308 = vpack.c.b16 %v2248, %v2244
    %v2309 = vpack.c.b16 %v2253, %v2249
    %v2310 = vpack.c.b16 %v2254, %v2250
    %v2311 = vpack.c.b16 %v2255, %v2251
    %v2312 = vpack.c.b16 %v2256, %v2252
    %v2313 = vpack.c.b16 %v2261, %v2257
    %v2314 = vpack.c.b16 %v2262, %v2258
    %v2315 = vpack.c.b16 %v2263, %v2259
    %v2316 = vpack.c.b16 %v2264, %v2260
    %v2317 = vpack.c.b16 %v2269, %v2265
    %v2318 = vpack.c.b16 %v2270, %v2266
    %v2319 = vpack.c.b16 %v2271, %v2267
    %v2320 = vpack.c.b16 %v2272, %v2268
    %v2321 = vpack.c.b16 %v2277, %v2273
    %v2322 = vpack.c.b16 %v2278, %v2274
    %v2323 = vpack.c.b16 %v2279, %v2275
    %v2324 = vpack.c.b16 %v2280, %v2276
    %v2325 = vpack.c.b16 %v2285, %v2281
    %v2326 = vpack.c.b16 %v2286, %v2282
    %v2327 = vpack.c.b16 %v2287, %v2283
    %v2328 = vpack.c.b16 %v2288, %v2284
    %v2329 = vpack.c.b16 %v2293, %v2289
    %v2330 = vpack.c.b16 %v2294, %v2290
    %v2331 = vpack.c.b16 %v2295, %v2291
    %v2332 = vpack.c.b16 %v2296, %v2292
    %v2333 = vpack.c.b16 %v2301, %v2297
    %v2334 = vpack.c.b16 %v2302, %v2298
    %v2335 = vpack.c.b16 %v2303, %v2299
    %v2336 = vpack.c.b16 %v2304, %v2300
    %2369 = vmatprep.subr.bf16.mxu0 %v2334
    %2370 = vmatpush1.bf16.msra.mxu0 %v2333
    %2371 = vmatprep.subr.bf16.mxu0 %v2330
    %2372 = vmatpush1.bf16.msra.mxu0 %v2329
    %2373 = vmatprep.subr.bf16.mxu0 %v2326
    %2374 = vmatpush1.bf16.msra.mxu0 %v2325
    %2375 = vmatprep.subr.bf16.mxu0 %v2322
    %2376 = vmatpush1.bf16.msra.mxu0 %v2321
    %2377 = vmatprep.subr.bf16.mxu0 %v2318
    %2378 = vmatpush1.bf16.msra.mxu0 %v2317
    %2379 = vmatprep.subr.bf16.mxu0 %v2314
    %2380 = vmatpush1.bf16.msra.mxu0 %v2313
    %2381 = vmatprep.subr.bf16.mxu0 %v2310
    %2382 = vmatpush1.bf16.msra.mxu0 %v2309
    %2383 = vmatprep.subr.bf16.mxu0 %v2306
    %2384 = vmatpush1.bf16.msra.mxu0 %v2305
    %2385 = vmatprep.subr.bf16.mxu0 0
    %2386 = vmatpush2.bf16.msra.mxu0 0
    %2387 = vmatprep.subr.bf16.mxu0 0
    %2388 = vmatpush2.bf16.msra.mxu0 0
    %2389 = vmatprep.subr.bf16.mxu0 0
    %2390 = vmatpush2.bf16.msra.mxu0 0
    %2391 = vmatprep.subr.bf16.mxu0 0
    %2392 = vmatpush2.bf16.msra.mxu0 0
    %2393 = vmatprep.subr.bf16.mxu0 0
    %2394 = vmatpush2.bf16.msra.mxu0 0
    %2395 = vmatprep.subr.bf16.mxu0 0
    %2396 = vmatpush2.bf16.msra.mxu0 0
    %2397 = vmatprep.subr.bf16.mxu0 0
    %2398 = vmatpush2.bf16.msra.mxu0 0
    %2399 = vmatprep.subr.bf16.mxu0 0
    %2400 = vmatpush2.bf16.msra.mxu0 0
    %2401 = vmatprep.mubr.bf16.mxu0 0
    %2402 = vmatmul.mubr.bf16.gmra.mxu0 %v2167
    %v2403 = vpop.f32.mrf.mxu0
    %v2404 = vadd.f32 0.0, %v2403
    %v2405 = vpop.f32.mrf.mxu0
    %v2406 = vadd.f32 0.0, %v2405
    %v2407 = vpop.f32.mrf.mxu0
    %v2408 = vpop.f32.mrf.mxu0
    %2409 = vdwg.mxu0
    %2410 = vmatprep.subr.bf16.mxu0 %v2336
    %2411 = vmatpush1.bf16.msra.mxu0 %v2335
    %2412 = vmatprep.subr.bf16.mxu0 %v2332
    %2413 = vmatpush1.bf16.msra.mxu0 %v2331
    %2414 = vmatprep.subr.bf16.mxu0 %v2328
    %2415 = vmatpush1.bf16.msra.mxu0 %v2327
    %2416 = vmatprep.subr.bf16.mxu0 %v2324
    %2417 = vmatpush1.bf16.msra.mxu0 %v2323
    %2418 = vmatprep.subr.bf16.mxu0 %v2320
    %2419 = vmatpush1.bf16.msra.mxu0 %v2319
    %2420 = vmatprep.subr.bf16.mxu0 %v2316
    %2421 = vmatpush1.bf16.msra.mxu0 %v2315
    %2422 = vmatprep.subr.bf16.mxu0 %v2312
    %2423 = vmatpush1.bf16.msra.mxu0 %v2311
    %2424 = vmatprep.subr.bf16.mxu0 %v2308
    %2425 = vmatpush1.bf16.msra.mxu0 %v2307
    %2426 = vmatprep.subr.bf16.mxu0 0
    %2427 = vmatpush2.bf16.msra.mxu0 0
    %2428 = vmatprep.subr.bf16.mxu0 0
    %2429 = vmatpush2.bf16.msra.mxu0 0
    %2430 = vmatprep.subr.bf16.mxu0 0
    %2431 = vmatpush2.bf16.msra.mxu0 0
    %2432 = vmatprep.subr.bf16.mxu0 0
    %2433 = vmatpush2.bf16.msra.mxu0 0
    %2434 = vmatprep.subr.bf16.mxu0 0
    %2435 = vmatpush2.bf16.msra.mxu0 0
    %2436 = vmatprep.subr.bf16.mxu0 0
    %2437 = vmatpush2.bf16.msra.mxu0 0
    %2438 = vmatprep.subr.bf16.mxu0 0
    %2439 = vmatpush2.bf16.msra.mxu0 0
    %2440 = vmatprep.subr.bf16.mxu0 0
    %2441 = vmatpush2.bf16.msra.mxu0 0
    %2442 = vmatprep.mubr.bf16.mxu0 0
    %2443 = vmatmul.mubr.bf16.gmra.mxu0 %v2167
    %v2444 = vpop.f32.mrf.mxu0
    %v2445 = vadd.f32 0.0, %v2444
    %v2446 = vpop.f32.mrf.mxu0
    %v2447 = vadd.f32 0.0, %v2446
    %v2448 = vpop.f32.mrf.mxu0
    %v2449 = vpop.f32.mrf.mxu0
    %2450 = vdwg.mxu0
    %v2451 = vadd.f32 %v2173, %v2404
    %v2452 = vadd.f32 %v2174, %v2406
    %v2453 = vadd.f32 %v2175, %v2445
    %v2454 = vadd.f32 %v2176, %v2447
    %v2455 = vxor.u32 %v2451, 2147483648
    %v2456 = vxor.u32 %v2452, 2147483648
    %v2457 = vxor.u32 %v2453, 2147483648
    %v2458 = vmul.f32 %v2455, 1.442695
    %v2459 = vpow.pop %v2458
    %v2460 = vmul.f32 %v2456, 1.442695
    %v2461 = vpow.pop %v2460
    %v2462 = vmul.f32 %v2457, 1.442695
    %v2463 = vpow.pop %v2462
    %v2464 = vadd.f32 %v2459, 1.0
    %v2465 = vadd.f32 %v2461, 1.0
    %v2466 = vadd.f32 %v2463, 1.0
    %v2467 = vrcp.pop %v2464
    %v2468 = vmul.f32 1.0, %v2467
    %v2469 = vrcp.pop %v2465
    %v2470 = vmul.f32 1.0, %v2469
    %v2471 = vrcp.pop %v2466
    %v2472 = vmul.f32 1.0, %v2471
    %v2473 = vtanh.pop %v2454
    %v2474 = vmul.f32 %v2470, %v2164
    %v2475 = vmul.f32 %v2468, %v2473
    %v2476 = vadd.f32 %v2474, %v2475
    %v2477 = vtanh.pop %v2476
    %v2478 = vmul.f32 %v2472, %v2477
    %v2479 = vpack.c.bf16 %v2478, %v2478
    %s2480 = scalar_lea.vmem [#allocation3], 24
    %2481 = vst [vmem:[%s2480] sm:$0xf] %v2479
    %s2482 = smul.u32 7, 4
    %s2483 = smul.addr %s2482, 8
    %s2484 = scalar_lea.vmem [#allocation2], %s2483
    %v2485 = vld [vmem:[%s2484] sm:$0xff]
    %v2486 = vld [vmem:[%s2484 + $0x8] sm:$0xff]
    %v2487 = vld [vmem:[%s2484 + $0x10] sm:$0xff]
    %v2488 = vld [vmem:[%s2484 + $0x18] sm:$0xff]
    %v2489 = vld [vmem:[#allocation4] sm:$0xff]
    %v2490 = vld [vmem:[#allocation4 + $0x8] sm:$0xff]
    %v2491 = vld [vmem:[#allocation4 + $0x10] sm:$0xff]
    %v2492 = vld [vmem:[#allocation4 + $0x18] sm:$0xff]
    %v2493 = vld [vmem:[#allocation4 + $0x20] sm:$0xff]
    %v2494 = vld [vmem:[#allocation4 + $0x28] sm:$0xff]
    %v2495 = vld [vmem:[#allocation4 + $0x30] sm:$0xff]
    %v2496 = vld [vmem:[#allocation4 + $0x38] sm:$0xff]
    %v2497 = vld [vmem:[#allocation4 + $0x40] sm:$0xff]
    %v2498 = vld [vmem:[#allocation4 + $0x48] sm:$0xff]
    %v2499 = vld [vmem:[#allocation4 + $0x50] sm:$0xff]
    %v2500 = vld [vmem:[#allocation4 + $0x58] sm:$0xff]
    %v2501 = vld [vmem:[#allocation4 + $0x60] sm:$0xff]
    %v2502 = vld [vmem:[#allocation4 + $0x68] sm:$0xff]
    %v2503 = vld [vmem:[#allocation4 + $0x70] sm:$0xff]
    %v2504 = vld [vmem:[#allocation4 + $0x78] sm:$0xff]
    %v2505 = vld [vmem:[#allocation4 + $0x80] sm:$0xff]
    %v2506 = vld [vmem:[#allocation4 + $0x88] sm:$0xff]
    %v2507 = vld [vmem:[#allocation4 + $0x90] sm:$0xff]
    %v2508 = vld [vmem:[#allocation4 + $0x98] sm:$0xff]
    %v2509 = vld [vmem:[#allocation4 + $0xa0] sm:$0xff]
    %v2510 = vld [vmem:[#allocation4 + $0xa8] sm:$0xff]
    %v2511 = vld [vmem:[#allocation4 + $0xb0] sm:$0xff]
    %v2512 = vld [vmem:[#allocation4 + $0xb8] sm:$0xff]
    %v2513 = vld [vmem:[#allocation4 + $0xc0] sm:$0xff]
    %v2514 = vld [vmem:[#allocation4 + $0xc8] sm:$0xff]
    %v2515 = vld [vmem:[#allocation4 + $0xd0] sm:$0xff]
    %v2516 = vld [vmem:[#allocation4 + $0xd8] sm:$0xff]
    %v2517 = vld [vmem:[#allocation4 + $0xe0] sm:$0xff]
    %v2518 = vld [vmem:[#allocation4 + $0xe8] sm:$0xff]
    %v2519 = vld [vmem:[#allocation4 + $0xf0] sm:$0xff]
    %v2520 = vld [vmem:[#allocation4 + $0xf8] sm:$0xff]
    %v2553 = vunpack.c.l.b16 %v2489
    %v2554 = vunpack.c.h.b16 %v2489
    %v2555 = vunpack.c.l.b16 %v2490
    %v2556 = vunpack.c.h.b16 %v2490
    %v2557 = vunpack.c.l.b16 %v2491
    %v2558 = vunpack.c.h.b16 %v2491
    %v2559 = vunpack.c.l.b16 %v2492
    %v2560 = vunpack.c.h.b16 %v2492
    %v2561 = vunpack.c.l.b16 %v2493
    %v2562 = vunpack.c.h.b16 %v2493
    %v2563 = vunpack.c.l.b16 %v2494
    %v2564 = vunpack.c.h.b16 %v2494
    %v2565 = vunpack.c.l.b16 %v2495
    %v2566 = vunpack.c.h.b16 %v2495
    %v2567 = vunpack.c.l.b16 %v2496
    %v2568 = vunpack.c.h.b16 %v2496
    %v2569 = vunpack.c.l.b16 %v2497
    %v2570 = vunpack.c.h.b16 %v2497
    %v2571 = vunpack.c.l.b16 %v2498
    %v2572 = vunpack.c.h.b16 %v2498
    %v2573 = vunpack.c.l.b16 %v2499
    %v2574 = vunpack.c.h.b16 %v2499
    %v2575 = vunpack.c.l.b16 %v2500
    %v2576 = vunpack.c.h.b16 %v2500
    %v2577 = vunpack.c.l.b16 %v2501
    %v2578 = vunpack.c.h.b16 %v2501
    %v2579 = vunpack.c.l.b16 %v2502
    %v2580 = vunpack.c.h.b16 %v2502
    %v2581 = vunpack.c.l.b16 %v2503
    %v2582 = vunpack.c.h.b16 %v2503
    %v2583 = vunpack.c.l.b16 %v2504
    %v2584 = vunpack.c.h.b16 %v2504
    %v2585 = vunpack.c.l.b16 %v2505
    %v2586 = vunpack.c.h.b16 %v2505
    %v2587 = vunpack.c.l.b16 %v2506
    %v2588 = vunpack.c.h.b16 %v2506
    %v2589 = vunpack.c.l.b16 %v2507
    %v2590 = vunpack.c.h.b16 %v2507
    %v2591 = vunpack.c.l.b16 %v2508
    %v2592 = vunpack.c.h.b16 %v2508
    %v2593 = vunpack.c.l.b16 %v2509
    %v2594 = vunpack.c.h.b16 %v2509
    %v2595 = vunpack.c.l.b16 %v2510
    %v2596 = vunpack.c.h.b16 %v2510
    %v2597 = vunpack.c.l.b16 %v2511
    %v2598 = vunpack.c.h.b16 %v2511
    %v2599 = vunpack.c.l.b16 %v2512
    %v2600 = vunpack.c.h.b16 %v2512
    %v2601 = vunpack.c.l.b16 %v2513
    %v2602 = vunpack.c.h.b16 %v2513
    %v2603 = vunpack.c.l.b16 %v2514
    %v2604 = vunpack.c.h.b16 %v2514
    %v2605 = vunpack.c.l.b16 %v2515
    %v2606 = vunpack.c.h.b16 %v2515
    %v2607 = vunpack.c.l.b16 %v2516
    %v2608 = vunpack.c.h.b16 %v2516
    %v2609 = vunpack.c.l.b16 %v2517
    %v2610 = vunpack.c.h.b16 %v2517
    %v2611 = vunpack.c.l.b16 %v2518
    %v2612 = vunpack.c.h.b16 %v2518
    %v2613 = vunpack.c.l.b16 %v2519
    %v2614 = vunpack.c.h.b16 %v2519
    %v2615 = vunpack.c.l.b16 %v2520
    %v2616 = vunpack.c.h.b16 %v2520
    %v2617 = vpack.c.b16 %v2557, %v2553
    %v2618 = vpack.c.b16 %v2558, %v2554
    %v2619 = vpack.c.b16 %v2559, %v2555
    %v2620 = vpack.c.b16 %v2560, %v2556
    %v2621 = vpack.c.b16 %v2565, %v2561
    %v2622 = vpack.c.b16 %v2566, %v2562
    %v2623 = vpack.c.b16 %v2567, %v2563
    %v2624 = vpack.c.b16 %v2568, %v2564
    %v2625 = vpack.c.b16 %v2573, %v2569
    %v2626 = vpack.c.b16 %v2574, %v2570
    %v2627 = vpack.c.b16 %v2575, %v2571
    %v2628 = vpack.c.b16 %v2576, %v2572
    %v2629 = vpack.c.b16 %v2581, %v2577
    %v2630 = vpack.c.b16 %v2582, %v2578
    %v2631 = vpack.c.b16 %v2583, %v2579
    %v2632 = vpack.c.b16 %v2584, %v2580
    %v2633 = vpack.c.b16 %v2589, %v2585
    %v2634 = vpack.c.b16 %v2590, %v2586
    %v2635 = vpack.c.b16 %v2591, %v2587
    %v2636 = vpack.c.b16 %v2592, %v2588
    %v2637 = vpack.c.b16 %v2597, %v2593
    %v2638 = vpack.c.b16 %v2598, %v2594
    %v2639 = vpack.c.b16 %v2599, %v2595
    %v2640 = vpack.c.b16 %v2600, %v2596
    %v2641 = vpack.c.b16 %v2605, %v2601
    %v2642 = vpack.c.b16 %v2606, %v2602
    %v2643 = vpack.c.b16 %v2607, %v2603
    %v2644 = vpack.c.b16 %v2608, %v2604
    %v2645 = vpack.c.b16 %v2613, %v2609
    %v2646 = vpack.c.b16 %v2614, %v2610
    %v2647 = vpack.c.b16 %v2615, %v2611
    %v2648 = vpack.c.b16 %v2616, %v2612
    %2681 = vmatprep.subr.bf16.mxu0 %v2646
    %2682 = vmatpush1.bf16.msra.mxu0 %v2645
    %2683 = vmatprep.subr.bf16.mxu0 %v2642
    %2684 = vmatpush1.bf16.msra.mxu0 %v2641
    %2685 = vmatprep.subr.bf16.mxu0 %v2638
    %2686 = vmatpush1.bf16.msra.mxu0 %v2637
    %2687 = vmatprep.subr.bf16.mxu0 %v2634
    %2688 = vmatpush1.bf16.msra.mxu0 %v2633
    %2689 = vmatprep.subr.bf16.mxu0 %v2630
    %2690 = vmatpush1.bf16.msra.mxu0 %v2629
    %2691 = vmatprep.subr.bf16.mxu0 %v2626
    %2692 = vmatpush1.bf16.msra.mxu0 %v2625
    %2693 = vmatprep.subr.bf16.mxu0 %v2622
    %2694 = vmatpush1.bf16.msra.mxu0 %v2621
    %2695 = vmatprep.subr.bf16.mxu0 %v2618
    %2696 = vmatpush1.bf16.msra.mxu0 %v2617
    %2697 = vmatprep.subr.bf16.mxu0 0
    %2698 = vmatpush2.bf16.msra.mxu0 0
    %2699 = vmatprep.subr.bf16.mxu0 0
    %2700 = vmatpush2.bf16.msra.mxu0 0
    %2701 = vmatprep.subr.bf16.mxu0 0
    %2702 = vmatpush2.bf16.msra.mxu0 0
    %2703 = vmatprep.subr.bf16.mxu0 0
    %2704 = vmatpush2.bf16.msra.mxu0 0
    %2705 = vmatprep.subr.bf16.mxu0 0
    %2706 = vmatpush2.bf16.msra.mxu0 0
    %2707 = vmatprep.subr.bf16.mxu0 0
    %2708 = vmatpush2.bf16.msra.mxu0 0
    %2709 = vmatprep.subr.bf16.mxu0 0
    %2710 = vmatpush2.bf16.msra.mxu0 0
    %2711 = vmatprep.subr.bf16.mxu0 0
    %2712 = vmatpush2.bf16.msra.mxu0 0
    %2713 = vmatprep.mubr.bf16.mxu0 0
    %2714 = vmatmul.mubr.bf16.gmra.mxu0 %v2479
    %v2715 = vpop.f32.mrf.mxu0
    %v2716 = vadd.f32 0.0, %v2715
    %v2717 = vpop.f32.mrf.mxu0
    %v2718 = vadd.f32 0.0, %v2717
    %v2719 = vpop.f32.mrf.mxu0
    %v2720 = vpop.f32.mrf.mxu0
    %2721 = vdwg.mxu0
    %2722 = vmatprep.subr.bf16.mxu0 %v2648
    %2723 = vmatpush1.bf16.msra.mxu0 %v2647
    %2724 = vmatprep.subr.bf16.mxu0 %v2644
    %2725 = vmatpush1.bf16.msra.mxu0 %v2643
    %2726 = vmatprep.subr.bf16.mxu0 %v2640
    %2727 = vmatpush1.bf16.msra.mxu0 %v2639
    %2728 = vmatprep.subr.bf16.mxu0 %v2636
    %2729 = vmatpush1.bf16.msra.mxu0 %v2635
    %2730 = vmatprep.subr.bf16.mxu0 %v2632
    %2731 = vmatpush1.bf16.msra.mxu0 %v2631
    %2732 = vmatprep.subr.bf16.mxu0 %v2628
    %2733 = vmatpush1.bf16.msra.mxu0 %v2627
    %2734 = vmatprep.subr.bf16.mxu0 %v2624
    %2735 = vmatpush1.bf16.msra.mxu0 %v2623
    %2736 = vmatprep.subr.bf16.mxu0 %v2620
    %2737 = vmatpush1.bf16.msra.mxu0 %v2619
    %2738 = vmatprep.subr.bf16.mxu0 0
    %2739 = vmatpush2.bf16.msra.mxu0 0
    %2740 = vmatprep.subr.bf16.mxu0 0
    %2741 = vmatpush2.bf16.msra.mxu0 0
    %2742 = vmatprep.subr.bf16.mxu0 0
    %2743 = vmatpush2.bf16.msra.mxu0 0
    %2744 = vmatprep.subr.bf16.mxu0 0
    %2745 = vmatpush2.bf16.msra.mxu0 0
    %2746 = vmatprep.subr.bf16.mxu0 0
    %2747 = vmatpush2.bf16.msra.mxu0 0
    %2748 = vmatprep.subr.bf16.mxu0 0
    %2749 = vmatpush2.bf16.msra.mxu0 0
    %2750 = vmatprep.subr.bf16.mxu0 0
    %2751 = vmatpush2.bf16.msra.mxu0 0
    %2752 = vmatprep.subr.bf16.mxu0 0
    %2753 = vmatpush2.bf16.msra.mxu0 0
    %2754 = vmatprep.mubr.bf16.mxu0 0
    %2755 = vmatmul.mubr.bf16.gmra.mxu0 %v2479
    %v2756 = vpop.f32.mrf.mxu0
    %v2757 = vadd.f32 0.0, %v2756
    %v2758 = vpop.f32.mrf.mxu0
    %v2759 = vadd.f32 0.0, %v2758
    %v2760 = vpop.f32.mrf.mxu0
    %v2761 = vpop.f32.mrf.mxu0
    %2762 = vdwg.mxu0
    %v2763 = vadd.f32 %v2485, %v2716
    %v2764 = vadd.f32 %v2486, %v2718
    %v2765 = vadd.f32 %v2487, %v2757
    %v2766 = vadd.f32 %v2488, %v2759
    %v2767 = vxor.u32 %v2763, 2147483648
    %v2768 = vxor.u32 %v2764, 2147483648
    %v2769 = vxor.u32 %v2765, 2147483648
    %v2770 = vmul.f32 %v2767, 1.442695
    %v2771 = vpow.pop %v2770
    %v2772 = vmul.f32 %v2768, 1.442695
    %v2773 = vpow.pop %v2772
    %v2774 = vmul.f32 %v2769, 1.442695
    %v2775 = vpow.pop %v2774
    %v2776 = vadd.f32 %v2771, 1.0
    %v2777 = vadd.f32 %v2773, 1.0
    %v2778 = vadd.f32 %v2775, 1.0
    %v2779 = vrcp.pop %v2776
    %v2780 = vmul.f32 1.0, %v2779
    %v2781 = vrcp.pop %v2777
    %v2782 = vmul.f32 1.0, %v2781
    %v2783 = vrcp.pop %v2778
    %v2784 = vmul.f32 1.0, %v2783
    %v2785 = vtanh.pop %v2766
    %v2786 = vmul.f32 %v2782, %v2476
    %v2787 = vmul.f32 %v2780, %v2785
    %v2788 = vadd.f32 %v2786, %v2787
    %v2789 = vtanh.pop %v2788
    %v2790 = vmul.f32 %v2784, %v2789
    %v2791 = vpack.c.bf16 %v2790, %v2790
    %s2792 = scalar_lea.vmem [#allocation3], 28
    %2793 = vst [vmem:[%s2792] sm:$0xf] %v2791
    %2794 = vst [vmem:[%s9] sm:$0xff] %v2790
    %2795 = vst [vmem:[%s10] sm:$0xff] %v2788
    %v2796 = vld [vmem:[#allocation3] sm:$0xf]
    %v2797 = vld [vmem:[#allocation3 + $0x4] sm:$0xf]
    %v2798 = vld [vmem:[#allocation3 + $0x8] sm:$0xf]
    %v2799 = vld [vmem:[#allocation3 + $0xc] sm:$0xf]
    %v2800 = vld [vmem:[#allocation3 + $0x10] sm:$0xf]
    %v2801 = vld [vmem:[#allocation3 + $0x14] sm:$0xf]
    %v2802 = vld [vmem:[#allocation3 + $0x18] sm:$0xf]
    %v2803 = vld [vmem:[#allocation3 + $0x1c] sm:$0xf]
    %v2804 = vld [vmem:[%s6] sm:$0xf]
    %v2805 = vld [vmem:[%s6 + $0x4] sm:$0xf]
    %v2806 = vld [vmem:[%s6 + $0x8] sm:$0xf]
    %v2807 = vld [vmem:[%s6 + $0xc] sm:$0xf]
    %v2808 = vld [vmem:[%s6 + $0x10] sm:$0xf]
    %v2809 = vld [vmem:[%s6 + $0x14] sm:$0xf]
    %v2810 = vld [vmem:[%s6 + $0x18] sm:$0xf]
    %v2811 = vld [vmem:[%s6 + $0x1c] sm:$0xf]
    %v2812 = vld [vmem:[%s6 + $0x20] sm:$0xf]
    %v2813 = vld [vmem:[%s6 + $0x24] sm:$0xf]
    %v2814 = vld [vmem:[%s6 + $0x28] sm:$0xf]
    %v2815 = vld [vmem:[%s6 + $0x2c] sm:$0xf]
    %v2816 = vld [vmem:[%s6 + $0x30] sm:$0xf]
    %v2817 = vld [vmem:[%s6 + $0x34] sm:$0xf]
    %v2818 = vld [vmem:[%s6 + $0x38] sm:$0xf]
    %v2819 = vld [vmem:[%s6 + $0x3c] sm:$0xf]
    %v2820 = vld [vmem:[%s7] sm:$0x1]
    %v2822 = vlaneseq
    %v2823 = vshrl.u32 %v2822, 7
    %v2824 = vsub.s32 0, %v2823
    %v2825 = vrot.slane %v2820, %v2824
    %v2835 = vunpack.c.l.b16 %v2796
    %v2836 = vunpack.c.l.b16 %v2797
    %v2837 = vunpack.c.l.b16 %v2798
    %v2838 = vunpack.c.l.b16 %v2799
    %v2839 = vunpack.c.l.b16 %v2800
    %v2840 = vunpack.c.l.b16 %v2801
    %v2841 = vunpack.c.l.b16 %v2802
    %v2842 = vunpack.c.l.b16 %v2803
    %v2843 = vpack.c.b16 %v2836, %v2835
    %v2844 = vpack.c.b16 %v2838, %v2837
    %v2845 = vpack.c.b16 %v2840, %v2839
    %v2846 = vpack.c.b16 %v2842, %v2841
    %v2867 = vunpack.c.l.b16 %v2804
    %v2868 = vunpack.c.l.b16 %v2805
    %v2869 = vunpack.c.l.b16 %v2806
    %v2870 = vunpack.c.l.b16 %v2807
    %v2871 = vunpack.c.l.b16 %v2808
    %v2872 = vunpack.c.l.b16 %v2809
    %v2873 = vunpack.c.l.b16 %v2810
    %v2874 = vunpack.c.l.b16 %v2811
    %v2875 = vunpack.c.l.b16 %v2812
    %v2876 = vunpack.c.l.b16 %v2813
    %v2877 = vunpack.c.l.b16 %v2814
    %v2878 = vunpack.c.l.b16 %v2815
    %v2879 = vunpack.c.l.b16 %v2816
    %v2880 = vunpack.c.l.b16 %v2817
    %v2881 = vunpack.c.l.b16 %v2818
    %v2882 = vunpack.c.l.b16 %v2819
    %v2883 = vpack.c.b16 %v2868, %v2867
    %v2884 = vpack.c.b16 %v2870, %v2869
    %v2885 = vpack.c.b16 %v2872, %v2871
    %v2886 = vpack.c.b16 %v2874, %v2873
    %v2887 = vpack.c.b16 %v2876, %v2875
    %v2888 = vpack.c.b16 %v2878, %v2877
    %v2889 = vpack.c.b16 %v2880, %v2879
    %v2890 = vpack.c.b16 %v2882, %v2881
    %2899 = vmatprep.subr.bf16.mxu0 0
    %2900 = vmatpush1.bf16.msra.mxu0 %v2890
    %2901 = vmatprep.subr.bf16.mxu0 0
    %2902 = vmatpush1.bf16.msra.mxu0 %v2889
    %2903 = vmatprep.subr.bf16.mxu0 0
    %2904 = vmatpush1.bf16.msra.mxu0 %v2888
    %2905 = vmatprep.subr.bf16.mxu0 0
    %2906 = vmatpush1.bf16.msra.mxu0 %v2887
    %2907 = vmatprep.subr.bf16.mxu0 0
    %2908 = vmatpush1.bf16.msra.mxu0 %v2886
    %2909 = vmatprep.subr.bf16.mxu0 0
    %2910 = vmatpush1.bf16.msra.mxu0 %v2885
    %2911 = vmatprep.subr.bf16.mxu0 0
    %2912 = vmatpush1.bf16.msra.mxu0 %v2884
    %2913 = vmatprep.subr.bf16.mxu0 0
    %2914 = vmatpush1.bf16.msra.mxu0 %v2883
    %2915 = vmatprep.subr.bf16.mxu0 0
    %2916 = vmatpush2.bf16.msra.mxu0 0
    %2917 = vmatprep.subr.bf16.mxu0 0
    %2918 = vmatpush2.bf16.msra.mxu0 0
    %2919 = vmatprep.subr.bf16.mxu0 0
    %2920 = vmatpush2.bf16.msra.mxu0 0
    %2921 = vmatprep.subr.bf16.mxu0 0
    %2922 = vmatpush2.bf16.msra.mxu0 0
    %2923 = vmatprep.subr.bf16.mxu0 0
    %2924 = vmatpush2.bf16.msra.mxu0 0
    %2925 = vmatprep.subr.bf16.mxu0 0
    %2926 = vmatpush2.bf16.msra.mxu0 0
    %2927 = vmatprep.subr.bf16.mxu0 0
    %2928 = vmatpush2.bf16.msra.mxu0 0
    %2929 = vmatprep.subr.bf16.mxu0 0
    %2930 = vmatpush2.bf16.msra.mxu0 0
    %2931 = vmatprep.mubr.bf16.mxu0 0
    %2932 = vmatmul.mubr.bf16.gmra.mxu0 %v2843
    %v2933 = vpop.f32.mrf.mxu0
    %v2934 = vadd.f32 %v2825, %v2933
    %v2935 = vpop.f32.mrf.mxu0
    %v2936 = vpop.f32.mrf.mxu0
    %v2937 = vadd.f32 %v2825, %v2936
    %v2938 = vpop.f32.mrf.mxu0
    %2939 = vmatprep.mubr.bf16.mxu0 0
    %2940 = vmatmul.mubr.bf16.gmra.mxu0 %v2844
    %v2941 = vpop.f32.mrf.mxu0
    %v2942 = vadd.f32 %v2825, %v2941
    %v2943 = vpop.f32.mrf.mxu0
    %v2944 = vpop.f32.mrf.mxu0
    %v2945 = vadd.f32 %v2825, %v2944
    %v2946 = vpop.f32.mrf.mxu0
    %2947 = vmatprep.mubr.bf16.mxu0 0
    %2948 = vmatmul.mubr.bf16.gmra.mxu0 %v2845
    %v2949 = vpop.f32.mrf.mxu0
    %v2950 = vadd.f32 %v2825, %v2949
    %v2951 = vpop.f32.mrf.mxu0
    %v2952 = vpop.f32.mrf.mxu0
    %v2953 = vadd.f32 %v2825, %v2952
    %v2954 = vpop.f32.mrf.mxu0
    %2955 = vmatprep.mubr.bf16.mxu0 0
    %2956 = vmatmul.mubr.bf16.gmra.mxu0 %v2846
    %v2957 = vpop.f32.mrf.mxu0
    %v2958 = vadd.f32 %v2825, %v2957
    %v2959 = vpop.f32.mrf.mxu0
    %v2960 = vpop.f32.mrf.mxu0
    %v2961 = vadd.f32 %v2825, %v2960
    %v2962 = vpop.f32.mrf.mxu0
    %2963 = vdwg.mxu0
    %2964 = vst [vmem:[%s8] sm:$0xff] %v2934
    %2965 = vst [vmem:[%s8 + $0x8] sm:$0xff] %v2937
    %2966 = vst [vmem:[%s8 + $0x10] sm:$0xff] %v2942
    %2967 = vst [vmem:[%s8 + $0x18] sm:$0xff] %v2945
    %2968 = vst [vmem:[%s8 + $0x20] sm:$0xff] %v2950
    %2969 = vst [vmem:[%s8 + $0x28] sm:$0xff] %v2953
    %2970 = vst [vmem:[%s8 + $0x30] sm:$0xff] %v2958
    %2971 = vst [vmem:[%s8 + $0x38] sm:$0xff] %v2961
    // Predicated region
    $region38: #{char_lstm_forward.1} parent=1 // pred_check
      _
    $region39: #{char_lstm_forward.1} parent=1 // pred_check_branch
      %2973 = sbr.rel (0) target = $region41
    $region40: #{char_lstm_forward.1} parent=1 // pred_region
      _
    $region41: #{char_lstm_forward.1} parent=1 // pred_fallthru
      _
    // Predicated region
    $region42: #{char_lstm_forward.1} parent=1 // pred_check
      _
    $region43: #{char_lstm_forward.1} parent=1 // pred_check_branch
      %2975 = sbr.rel (0) target = $region45
    $region44: #{char_lstm_forward.1} parent=1 // pred_region
      _
    $region45: #{char_lstm_forward.1} parent=1 // pred_fallthru
      _
    // Predicated region
    $region46: #{char_lstm_forward.1} parent=1 // pred_check
      _
    $region47: #{char_lstm_forward.1} parent=1 // pred_check_branch
      %2977 = sbr.rel (0) target = $region49
    $region48: #{char_lstm_forward.1} parent=1 // pred_region
      _
    $region49: #{char_lstm_forward.1} parent=1 // pred_fallthru
      _
    // Predicated region
    $region50: #{char_lstm_forward.1} parent=1 // pred_check
      _
    $region51: #{char_lstm_forward.1} parent=1 // pred_check_branch
      %2979 = sbr.rel (0) target = $region53
    $region52: #{char_lstm_forward.1} parent=1 // pred_region
      _
    $region53: #{char_lstm_forward.1} parent=1 // pred_fallthru
      _
    // Predicated region
    $region54: #{char_lstm_forward.1} parent=1 // pred_check
      _
    $region55: #{char_lstm_forward.1} parent=1 // pred_check_branch
      %2981 = sbr.rel (0) target = $region57
    $region56: #{char_lstm_forward.1} parent=1 // pred_region
      _
    $region57: #{char_lstm_forward.1} parent=1 // pred_fallthru
      _
    // Predicated region
    $region58: #{char_lstm_forward.1} parent=1 // pred_check
      _
    $region59: #{char_lstm_forward.1} parent=1 // pred_check_branch
      %2983 = sbr.rel (0) target = $region61
    $region60: #{char_lstm_forward.1} parent=1 // pred_region
      _
    $region61: #{char_lstm_forward.1} parent=1 // pred_fallthru
      _
    %2984 = vsyncpa [#allocation5], 1

</llo_original>
